<compile_context>
chip_gen: v7x
topology: tpu7x:2x2x1
jax: 0.10.0
libtpu: 0.0.40
codegen_flags: <defaults>
</compile_context>

<pallas_src>
import functools

import jax
import jax.numpy as jnp
from jax.experimental import pallas as pl
from jax.experimental.pallas import tpu as pltpu

LANE = 128
SLOT1 = 32                              # per-branch K slot for layer1 (25 -> 32)
VMEM_LIMIT_BYTES = 24 * 1024 * 1024     # actual need ~10 MB; safe on v5e/v6e/v7x


def _round_up(x, m):
    return (x + m - 1) // m * m


def _cdiv(a, b):
    return (a + b - 1) // b


def _balanced_tile(m, tile_max, align=8):
    """Tile size <= tile_max that minimizes zero-row padding (<8 rows/tile)."""
    n_tiles = max(1, _cdiv(m, tile_max))
    return _round_up(_cdiv(m, n_tiles), align)


# ----------------------------------------------------------------------------
# Kernel 1: layer1 = conv(block-diag im2col matmul) + 2x2 pool-max + BN bias + ReLU
# ----------------------------------------------------------------------------
def _layer1_kernel(x_ref, w_ref, b_ref, o_ref):
    # One lane-dense matmul against the block-diagonal weight: column group g
    # (128 lanes) holds pool-branch g's conv output (channels 0..31, rest zero).
    acc = jnp.dot(x_ref[...], w_ref[...], preferred_element_type=jnp.float32)
    m = jnp.maximum(jnp.maximum(acc[:, 0:LANE], acc[:, LANE:2 * LANE]),
                    jnp.maximum(acc[:, 2 * LANE:3 * LANE], acc[:, 3 * LANE:4 * LANE]))
    # bias+ReLU hoisted after the pool max (shared bias, monotone ReLU -> identical).
    o_ref[...] = jnp.maximum(m + b_ref[...], 0.0).astype(o_ref.dtype)


def layer1_conv_bn_relu_pool(x_packed, w_big, bias, *, tile_m_max=1024):
    """x_packed: (M, 128) bf16 packed pool-branch patches; w_big: (128, 512) bf16
    block-diagonal folded weight; bias: (128,) f32.  Returns (M, 128) bf16."""
    M, K = x_packed.shape
    Ng = w_big.shape[1]
    tile_m = _balanced_tile(M, tile_m_max)
    Mp = _round_up(M, tile_m)
    xp = jnp.pad(x_packed, ((0, Mp - M), (0, 0)))
    bias2 = bias.reshape(1, LANE)
    grid = (Mp // tile_m,)
    cost = pl.CostEstimate(
        flops=2 * Mp * Ng * K,
        transcendentals=0,
        bytes_accessed=Mp * K * 2 + K * Ng * 2 + LANE * 4 + Mp * LANE * 2)
    out = pl.pallas_call(
        _layer1_kernel,
        out_shape=jax.ShapeDtypeStruct((Mp, LANE), jnp.bfloat16),
        grid=grid,
        in_specs=[pl.BlockSpec((tile_m, K), lambda i: (i, 0)),
                  pl.BlockSpec((K, Ng), lambda i: (0, 0)),
                  pl.BlockSpec((1, LANE), lambda i: (0, 0))],
        out_specs=pl.BlockSpec((tile_m, LANE), lambda i: (i, 0)),
        compiler_params=pltpu.CompilerParams(
            dimension_semantics=("parallel",),
            vmem_limit_bytes=VMEM_LIMIT_BYTES),
        cost_estimate=cost,
    )(xp, w_big, bias2)
    return out[:M]


# ----------------------------------------------------------------------------
# Kernel 2: layer2 (conv+pool+BN+ReLU) fused with the MLP head
#           (Dropout identity + Linear(64->2048) + ReLU + Linear(2048->nc))
# ----------------------------------------------------------------------------
def _layer2_head_kernel(a_ref, b_ref, c_ref, d_ref, w2_ref, bias2_ref,
                        fcw_ref, fcb_ref, fc1w_ref, fc1b_ref, o_ref):
    w2 = w2_ref[...]
    acc = jnp.dot(a_ref[...], w2, preferred_element_type=jnp.float32)
    acc = jnp.maximum(acc, jnp.dot(b_ref[...], w2, preferred_element_type=jnp.float32))
    acc = jnp.maximum(acc, jnp.dot(c_ref[...], w2, preferred_element_type=jnp.float32))
    acc = jnp.maximum(acc, jnp.dot(d_ref[...], w2, preferred_element_type=jnp.float32))
    # bias+ReLU hoisted after the pool max; lanes 64..127 stay exactly 0.
    x = jnp.maximum(acc + bias2_ref[...], 0.0)                       # (tile_b, 128)
    # TODO(synk): training-mode Dropout(0.5) not implemented (inference identity).
    h = jnp.dot(x.astype(jnp.bfloat16), fcw_ref[...],
                preferred_element_type=jnp.float32)
    h = jnp.maximum(h + fcb_ref[...], 0.0)                           # (tile_b, 2048)
    out = jnp.dot(h.astype(jnp.bfloat16), fc1w_ref[...],
                  preferred_element_type=jnp.float32)
    o_ref[...] = (out + fc1b_ref[...]).astype(o_ref.dtype)


def layer2_and_head(branches, w2, bias2, fc_w, fc_b, fc1_w, fc1_b, *, tile_b_max=256):
    """branches: 4 x (B, 800) bf16 pool-branch patch matrices (layer2 pooled map
    is 1x1, so rows == batch).  Returns (B, 128) f32 padded logits."""
    B, K2 = branches[0].shape
    H = fc_w.shape[1]
    N = fc1_w.shape[1]
    tile_b = _balanced_tile(B, tile_b_max)
    Bp = _round_up(B, tile_b)
    br = [jnp.pad(p, ((0, Bp - B), (0, 0))) for p in branches]
    grid = (Bp // tile_b,)
    cost = pl.CostEstimate(
        flops=4 * 2 * Bp * LANE * K2 + 2 * Bp * H * LANE + 2 * Bp * N * H,
        transcendentals=0,
        bytes_accessed=(4 * Bp * K2 * 2 + K2 * LANE * 2 + LANE * 4
                        + LANE * H * 2 + H * 4 + H * N * 2 + N * 4 + Bp * N * 4))
    out = pl.pallas_call(
        _layer2_head_kernel,
        out_shape=jax.ShapeDtypeStruct((Bp, N), jnp.float32),
        grid=grid,
        in_specs=[pl.BlockSpec((tile_b, K2), lambda i: (i, 0))] * 4
        + [pl.BlockSpec((K2, LANE), lambda i: (0, 0)),
           pl.BlockSpec((1, LANE), lambda i: (0, 0)),
           pl.BlockSpec((LANE, H), lambda i: (0, 0)),
           pl.BlockSpec((1, H), lambda i: (0, 0)),
           pl.BlockSpec((H, N), lambda i: (0, 0)),
           pl.BlockSpec((1, N), lambda i: (0, 0))],
        out_specs=pl.BlockSpec((tile_b, N), lambda i: (i, 0)),
        compiler_params=pltpu.CompilerParams(
            dimension_semantics=("parallel",),
            vmem_limit_bytes=VMEM_LIMIT_BYTES),
        cost_estimate=cost,
    )(*br, w2, bias2.reshape(1, LANE), fc_w, fc_b.reshape(1, H),
      fc1_w, fc1_b.reshape(1, N))
    return out[:B]


# ----------------------------------------------------------------------------
# Plain-JAX glue: pooled im2col patch extraction (slices/stacks only, all bf16)
# ----------------------------------------------------------------------------
def _extract_layer1_packed_patches(xp, k, stride, ph, pw):
    """cin==1 case: pack all 4 pool-branch patch vectors (length k*k=25, zero
    padded to a 32-wide slot each) into one lane-dense (B*ph*pw, 128) matrix."""
    B = xp.shape[0]
    step = 2 * stride
    branches = []
    for dp in (0, 1):
        for dq in (0, 1):
            r0, c0 = stride * dp, stride * dq
            cols = [xp[:, r0 + i: r0 + i + step * ph: step,
                          c0 + j: c0 + j + step * pw: step, 0]
                    for i in range(k) for j in range(k)]
            branches.append(jnp.stack(cols, axis=-1))       # (B, ph, pw, 25)
    stacked = jnp.stack(branches, axis=3)                    # (B, ph, pw, 4, 25)
    stacked = jnp.pad(stacked, ((0, 0),) * 4 + ((0, SLOT1 - k * k),))
    return stacked.reshape(B * ph * pw, 4 * SLOT1)           # (M, 128)


def _extract_pool_patch_branches(xp, k, stride, ph, pw, cin):
    """Returns 4 patch matrices (B*ph*pw, k*k*cin), one per 2x2 pool-window
    position.  Only the first `cin` channels of xp are ever read (fuses the
    inter-layer channel slice into the gather)."""
    B = xp.shape[0]
    step = 2 * stride
    out = []
    for dp in (0, 1):
        for dq in (0, 1):
            r0, c0 = stride * dp, stride * dq
            cols = [xp[:, r0 + i: r0 + i + step * ph: step,
                          c0 + j: c0 + j + step * pw: step, :cin]
                    for i in range(k) for j in range(k)]
            patches = jnp.stack(cols, axis=3)                # (B, ph, pw, k*k, cin)
            out.append(patches.reshape(B * ph * pw, k * k * cin))
    return out


# ----------------------------------------------------------------------------
# Parameters: raw (PyTorch layout) + one-time prep (BN fold, pad, bf16)
# ----------------------------------------------------------------------------
def init_params(num_classes):
    keys = jax.random.split(jax.random.PRNGKey(42), 20)
    p = {}
    # layer1: Conv2d(1, 32, k=5, s=2, p=1) + BatchNorm2d(32)
    p["w1"] = 0.1 * jax.random.normal(keys[0], (32, 1, 5, 5), jnp.float32)
    p["b1"] = 0.1 * jax.random.normal(keys[1], (32,), jnp.float32)
    p["bn1_gamma"] = 1.0 + 0.1 * jax.random.normal(keys[2], (32,), jnp.float32)
    p["bn1_beta"] = 0.1 * jax.random.normal(keys[3], (32,), jnp.float32)
    p["bn1_mean"] = 0.1 * jax.random.normal(keys[4], (32,), jnp.float32)
    p["bn1_var"] = 0.5 + jnp.abs(jax.random.normal(keys[5], (32,), jnp.float32))
    # layer2: Conv2d(32, 64, k=5, s=2, p=1) + BatchNorm2d(64)
    p["w2"] = 0.05 * jax.random.normal(keys[6], (64, 32, 5, 5), jnp.float32)
    p["b2"] = 0.1 * jax.random.normal(keys[7], (64,), jnp.float32)
    p["bn2_gamma"] = 1.0 + 0.1 * jax.random.normal(keys[8], (64,), jnp.float32)
    p["bn2_beta"] = 0.1 * jax.random.normal(keys[9], (64,), jnp.float32)
    p["bn2_mean"] = 0.1 * jax.random.normal(keys[10], (64,), jnp.float32)
    p["bn2_var"] = 0.5 + jnp.abs(jax.random.normal(keys[11], (64,), jnp.float32))
    # fc: Linear(64, 2048); fc1: Linear(2048, num_classes)  (PyTorch (out, in))
    p["fc_w"] = 0.05 * jax.random.normal(keys[12], (2048, 64), jnp.float32)
    p["fc_b"] = 0.05 * jax.random.normal(keys[13], (2048,), jnp.float32)
    p["fc1_w"] = 0.02 * jax.random.normal(keys[14], (num_classes, 2048), jnp.float32)
    p["fc1_b"] = 0.02 * jax.random.normal(keys[15], (num_classes,), jnp.float32)
    return p


def prepare_params(p, num_classes, eps=1e-5):
    """One-time prep: fold BN into conv weights/bias, build layer1's block-diag
    weight, pre-transpose fc weights, pad to 128 lanes, cast weights to bf16."""
    def fold(conv_w, conv_b, gamma, beta, mean, var):
        cout, cin, kh, kw = conv_w.shape
        scale = gamma / jnp.sqrt(var + eps)
        wmat = jnp.transpose(conv_w, (2, 3, 1, 0)).reshape(kh * kw * cin, cout)
        wmat = wmat * scale[None, :]
        bias = (conv_b - mean) * scale + beta
        return wmat, bias

    prep = {}
    # layer1: block-diagonal (128, 512) weight.  Rows [32b, 32b+25) x cols
    # [128b, 128b+32) hold the folded (25, 32) weight for pool-branch b.
    wmat1, bias1 = fold(p["w1"], p["b1"], p["bn1_gamma"], p["bn1_beta"],
                        p["bn1_mean"], p["bn1_var"])                     # (25, 32)
    kk1, c1 = wmat1.shape
    w1_big = jnp.zeros((4 * SLOT1, 4 * LANE), jnp.float32)
    for b in range(4):
        w1_big = w1_big.at[b * SLOT1: b * SLOT1 + kk1,
                           b * LANE: b * LANE + c1].set(wmat1)
    prep["w1_big"] = w1_big.astype(jnp.bfloat16)
    prep["bias1"] = jnp.pad(bias1, (0, LANE - c1)).astype(jnp.float32)

    # layer2: (800, 64) -> (800, 128) lane-padded
    wmat2, bias2 = fold(p["w2"], p["b2"], p["bn2_gamma"], p["bn2_beta"],
                        p["bn2_mean"], p["bn2_var"])
    c2 = wmat2.shape[1]
    prep["wmat2"] = jnp.pad(wmat2, ((0, 0), (0, LANE - c2))).astype(jnp.bfloat16)
    prep["bias2"] = jnp.pad(bias2, (0, LANE - c2)).astype(jnp.float32)

    # fc: torch (2048, 64) -> (64, 2048); pad input dim 64 -> 128 with zero rows
    # so the 128-lane conv2 output feeds it directly (padded channels are 0).
    fc_w = p["fc_w"].T
    prep["fc_w"] = jnp.pad(fc_w, ((0, LANE - fc_w.shape[0]), (0, 0))).astype(jnp.bfloat16)
    prep["fc_b"] = p["fc_b"].astype(jnp.float32)

    # fc1: torch (nc, 2048) -> (2048, nc); pad nc -> 128 lanes (slice logits later).
    ncp = _round_up(num_classes, LANE)
    fc1_w = p["fc1_w"].T
    prep["fc1_w"] = jnp.pad(fc1_w, ((0, 0), (0, ncp - num_classes))).astype(jnp.bfloat16)
    prep["fc1_b"] = jnp.pad(p["fc1_b"], (0, ncp - num_classes)).astype(jnp.float32)
    return prep


# ----------------------------------------------------------------------------
# Forward pass (2 pallas_calls)
# ----------------------------------------------------------------------------
@functools.partial(jax.jit, static_argnames=("num_classes",))
def cnn_forward(prep, x_nchw, num_classes):
    # NCHW -> NHWC; cast once to bf16 BEFORE the im2col expansion.
    x = jnp.transpose(x_nchw, (0, 2, 3, 1)).astype(jnp.bfloat16)
    B, H, W, _ = x.shape
    k, stride, pad = 5, 2, 1

    # layer1: Conv(1->32,k5,s2,p1)+BN+ReLU+MaxPool2x2 fused -> (B, 6, 6, 128) bf16
    xp = jnp.pad(x, ((0, 0), (pad, pad), (pad, pad), (0, 0)))
    OH = (H + 2 * pad - k) // stride + 1
    OW = (W + 2 * pad - k) // stride + 1
    PH1, PW1 = OH // 2, OW // 2
    x1 = _extract_layer1_packed_patches(xp, k, stride, PH1, PW1)      # (B*36, 128)
    y1 = layer1_conv_bn_relu_pool(x1, prep["w1_big"], prep["bias1"])
    y1 = y1.reshape(B, PH1, PW1, LANE)

    # layer2 + head fused: Conv(32->64,k5,s2,p1)+BN+ReLU+MaxPool2x2 (-> 1x1x64)
    # kept in VMEM and fed into Dropout(id) + Linear(64->2048) + ReLU + Linear.
    y1p = jnp.pad(y1, ((0, 0), (pad, pad), (pad, pad), (0, 0)))
    OH2 = (PH1 + 2 * pad - k) // stride + 1
    OW2 = (PW1 + 2 * pad - k) // stride + 1
    PH2, PW2 = OH2 // 2, OW2 // 2
    assert PH2 == 1 and PW2 == 1, "layer2+head fusion assumes 28x28 input (1x1 pooled map)"
    branches = _extract_pool_patch_branches(y1p, k, stride, PH2, PW2, cin=32)
    logits = layer2_and_head(branches, prep["wmat2"], prep["bias2"],
                             prep["fc_w"], prep["fc_b"],
                             prep["fc1_w"], prep["fc1_b"])
    return logits[:, :num_classes]


# ----------------------------------------------------------------------------
# Pure-JAX f32 reference (for tolerance check of the bf16 MXU path)
# ----------------------------------------------------------------------------
def reference_forward(p, x_nchw, eps=1e-5):
    x = jnp.transpose(x_nchw, (0, 2, 3, 1)).astype(jnp.float32)

    def layer(x, w, b, gamma, beta, mean, var):
        y = jax.lax.conv_general_dilated(
            x, jnp.transpose(w, (2, 3, 1, 0)),
            window_strides=(2, 2), padding=((1, 1), (1, 1)),
            dimension_numbers=("NHWC", "HWIO", "NHWC"))
        y = y + b.reshape(1, 1, 1, -1)
        scale = gamma / jnp.sqrt(var + eps)
        y = (y - mean) * scale + beta
        y = jnp.maximum(y, 0.0)
        return jax.lax.reduce_window(y, -jnp.inf, jax.lax.max,
                                     (1, 2, 2, 1), (1, 2, 2, 1), "VALID")

    y = layer(x, p["w1"], p["b1"], p["bn1_gamma"], p["bn1_beta"],
              p["bn1_mean"], p["bn1_var"])
    y = layer(y, p["w2"], p["b2"], p["bn2_gamma"], p["bn2_beta"],
              p["bn2_mean"], p["bn2_var"])
    flat = y.reshape(y.shape[0], -1)
    h = jnp.maximum(flat @ p["fc_w"].T + p["fc_b"], 0.0)
    return h @ p["fc1_w"].T + p["fc1_b"]


if __name__ == "__main__":
    num_classes = 10
    raw_params = init_params(num_classes)
    prep = prepare_params(raw_params, num_classes)

    # Input consistent with the module: 1-channel 28x28 images (flatten == 64).
    x = jax.random.normal(jax.random.PRNGKey(0), (2, 1, 28, 28), jnp.float32)

    out = cnn_forward(prep, x, num_classes=num_classes)
    out = jax.block_until_ready(out)

    assert out.shape == (2, num_classes), out.shape
    assert bool(jnp.all(jnp.isfinite(out)))

    ref = reference_forward(raw_params, x)
    assert bool(jnp.allclose(out, ref, rtol=5e-2, atol=5e-2)), (
        float(jnp.max(jnp.abs(out - ref))))

    print("KERNEL_OK")
</pallas_src>

<mosaic_0001>
module attributes {stable_mosaic.version = 11 : i64} {
  func.func @_layer1_kernel(%arg0: i32, %arg1: memref<72x128xbf16, #tpu.memory_space<vmem>>, %arg2: memref<128x512xbf16, #tpu.memory_space<vmem>>, %arg3: memref<1x128xf32, #tpu.memory_space<vmem>>, %arg4: memref<72x128xbf16, #tpu.memory_space<vmem>>) attributes {dimension_semantics = [#tpu.dimension_semantics<parallel>], iteration_bounds = array<i64: 1>, scalar_prefetch = 0 : i64, scratch_operands = 0 : i64, tpu.core_type = #tpu.core_type<tc>, window_params = [{transform_indices = @transform_0, window_bounds = array<i64: 72, 128>}, {pipeline_mode = #tpu.pipeline_mode<synchronous>, transform_indices = @transform_1, window_bounds = array<i64: 128, 512>}, {pipeline_mode = #tpu.pipeline_mode<synchronous>, transform_indices = @transform_2, window_bounds = array<i64: 1, 128>}, {transform_indices = @transform_3, window_bounds = array<i64: 72, 128>}]} {
    %c0 = arith.constant 0 : index
    %c0_0 = arith.constant 0 : index
    %0 = vector.load %arg1[%c0, %c0_0] : memref<72x128xbf16, #tpu.memory_space<vmem>>, vector<72x128xbf16>
    %c0_1 = arith.constant 0 : index
    %c0_2 = arith.constant 0 : index
    %1 = vector.load %arg2[%c0_1, %c0_2] : memref<128x512xbf16, #tpu.memory_space<vmem>>, vector<128x512xbf16>
    %cst = arith.constant dense<0.000000e+00> : vector<72x512xf32>
    %2 = tpu.matmul %0, %1, %cst {dimension_numbers = #tpu.dot_dimension_numbers<[1], [0], [0], [1], [0, 0, 1, 1], [], []>} : vector<72x128xbf16>, vector<128x512xbf16>, vector<72x512xf32> -> vector<72x512xf32>
    %3 = vector.extract_strided_slice %2 {offsets = [0, 0], sizes = [72, 128], strides = [1, 1]} : vector<72x512xf32> to vector<72x128xf32>
    %4 = vector.extract_strided_slice %2 {offsets = [0, 128], sizes = [72, 128], strides = [1, 1]} : vector<72x512xf32> to vector<72x128xf32>
    %5 = arith.maximumf %3, %4 : vector<72x128xf32>
    %6 = vector.extract_strided_slice %2 {offsets = [0, 256], sizes = [72, 128], strides = [1, 1]} : vector<72x512xf32> to vector<72x128xf32>
    %7 = vector.extract_strided_slice %2 {offsets = [0, 384], sizes = [72, 128], strides = [1, 1]} : vector<72x512xf32> to vector<72x128xf32>
    %8 = arith.maximumf %6, %7 : vector<72x128xf32>
    %9 = arith.maximumf %5, %8 : vector<72x128xf32>
    %c0_3 = arith.constant 0 : index
    %c0_4 = arith.constant 0 : index
    %10 = vector.load %arg3[%c0_3, %c0_4] : memref<1x128xf32, #tpu.memory_space<vmem>>, vector<1x128xf32>
    %11 = vector.broadcast %10 : vector<1x128xf32> to vector<72x128xf32>
    %12 = arith.addf %9, %11 : vector<72x128xf32>
    %cst_5 = arith.constant 0.000000e+00 : f32
    %13 = vector.broadcast %cst_5 : f32 to vector<72x128xf32>
    %14 = arith.maximumf %12, %13 : vector<72x128xf32>
    %15 = arith.truncf %14 : vector<72x128xf32> to vector<72x128xbf16>
    %c0_6 = arith.constant 0 : index
    %c0_7 = arith.constant 0 : index
    %16 = vector.load %arg4[%c0_6, %c0_7] : memref<72x128xbf16, #tpu.memory_space<vmem>>, vector<72x128xbf16>
    tpu.vector_store %arg4[%c0_6, %c0_7], %15 {strides = array<i32>} : memref<72x128xbf16, #tpu.memory_space<vmem>>, vector<72x128xbf16>,
    return
  }
  func.func @transform_0(%arg0: i32) -> (i32, i32) {
    %c0_i32 = arith.constant 0 : i32
    %c0_i32_0 = arith.constant 0 : i32
    return %arg0, %c0_i32 : i32, i32
  }
  func.func @transform_1(%arg0: i32) -> (i32, i32) {
    %c0_i32 = arith.constant 0 : i32
    %c0_i32_0 = arith.constant 0 : i32
    %c0_i32_1 = arith.constant 0 : i32
    return %c0_i32, %c0_i32_0 : i32, i32
  }
  func.func @transform_2(%arg0: i32) -> (i32, i32) {
    %c0_i32 = arith.constant 0 : i32
    %c0_i32_0 = arith.constant 0 : i32
    %c0_i32_1 = arith.constant 0 : i32
    return %c0_i32, %c0_i32_0 : i32, i32
  }
  func.func @transform_3(%arg0: i32) -> (i32, i32) {
    %c0_i32 = arith.constant 0 : i32
    %c0_i32_0 = arith.constant 0 : i32
    return %arg0, %c0_i32 : i32, i32
  }
}

module attributes {stable_mosaic.version = 11 : i64} {
  func.func @_layer2_head_kernel(%arg0: i32, %arg1: memref<8x800xbf16, #tpu.memory_space<vmem>>, %arg2: memref<8x800xbf16, #tpu.memory_space<vmem>>, %arg3: memref<8x800xbf16, #tpu.memory_space<vmem>>, %arg4: memref<8x800xbf16, #tpu.memory_space<vmem>>, %arg5: memref<800x128xbf16, #tpu.memory_space<vmem>>, %arg6: memref<1x128xf32, #tpu.memory_space<vmem>>, %arg7: memref<128x2048xbf16, #tpu.memory_space<vmem>>, %arg8: memref<1x2048xf32, #tpu.memory_space<vmem>>, %arg9: memref<2048x128xbf16, #tpu.memory_space<vmem>>, %arg10: memref<1x128xf32, #tpu.memory_space<vmem>>, %arg11: memref<8x128xf32, #tpu.memory_space<vmem>>) attributes {dimension_semantics = [#tpu.dimension_semantics<parallel>], iteration_bounds = array<i64: 1>, scalar_prefetch = 0 : i64, scratch_operands = 0 : i64, tpu.core_type = #tpu.core_type<tc>, window_params = [{transform_indices = @transform_0, window_bounds = array<i64: 8, 800>}, {transform_indices = @transform_1, window_bounds = array<i64: 8, 800>}, {transform_indices = @transform_2, window_bounds = array<i64: 8, 800>}, {transform_indices = @transform_3, window_bounds = array<i64: 8, 800>}, {pipeline_mode = #tpu.pipeline_mode<synchronous>, transform_indices = @transform_4, window_bounds = array<i64: 800, 128>}, {pipeline_mode = #tpu.pipeline_mode<synchronous>, transform_indices = @transform_5, window_bounds = array<i64: 1, 128>}, {pipeline_mode = #tpu.pipeline_mode<synchronous>, transform_indices = @transform_6, window_bounds = array<i64: 128, 2048>}, {pipeline_mode = #tpu.pipeline_mode<synchronous>, transform_indices = @transform_7, window_bounds = array<i64: 1, 2048>}, {pipeline_mode = #tpu.pipeline_mode<synchronous>, transform_indices = @transform_8, window_bounds = array<i64: 2048, 128>}, {pipeline_mode = #tpu.pipeline_mode<synchronous>, transform_indices = @transform_9, window_bounds = array<i64: 1, 128>}, {transform_indices = @transform_10, window_bounds = array<i64: 8, 128>}]} {
    %c0 = arith.constant 0 : index
    %c0_0 = arith.constant 0 : index
    %0 = vector.load %arg5[%c0, %c0_0] : memref<800x128xbf16, #tpu.memory_space<vmem>>, vector<800x128xbf16>
    %c0_1 = arith.constant 0 : index
    %c0_2 = arith.constant 0 : index
    %1 = vector.load %arg1[%c0_1, %c0_2] : memref<8x800xbf16, #tpu.memory_space<vmem>>, vector<8x800xbf16>
    %cst = arith.constant dense<0.000000e+00> : vector<8x128xf32>
    %2 = tpu.matmul %1, %0, %cst {dimension_numbers = #tpu.dot_dimension_numbers<[1], [0], [0], [1], [0, 0, 1, 1], [], []>} : vector<8x800xbf16>, vector<800x128xbf16>, vector<8x128xf32> -> vector<8x128xf32>
    %c0_3 = arith.constant 0 : index
    %c0_4 = arith.constant 0 : index
    %3 = vector.load %arg2[%c0_3, %c0_4] : memref<8x800xbf16, #tpu.memory_space<vmem>>, vector<8x800xbf16>
    %cst_5 = arith.constant dense<0.000000e+00> : vector<8x128xf32>
    %4 = tpu.matmul %3, %0, %cst_5 {dimension_numbers = #tpu.dot_dimension_numbers<[1], [0], [0], [1], [0, 0, 1, 1], [], []>} : vector<8x800xbf16>, vector<800x128xbf16>, vector<8x128xf32> -> vector<8x128xf32>
    %5 = arith.maximumf %2, %4 : vector<8x128xf32>
    %c0_6 = arith.constant 0 : index
    %c0_7 = arith.constant 0 : index
    %6 = vector.load %arg3[%c0_6, %c0_7] : memref<8x800xbf16, #tpu.memory_space<vmem>>, vector<8x800xbf16>
    %cst_8 = arith.constant dense<0.000000e+00> : vector<8x128xf32>
    %7 = tpu.matmul %6, %0, %cst_8 {dimension_numbers = #tpu.dot_dimension_numbers<[1], [0], [0], [1], [0, 0, 1, 1], [], []>} : vector<8x800xbf16>, vector<800x128xbf16>, vector<8x128xf32> -> vector<8x128xf32>
    %8 = arith.maximumf %5, %7 : vector<8x128xf32>
    %c0_9 = arith.constant 0 : index
    %c0_10 = arith.constant 0 : index
    %9 = vector.load %arg4[%c0_9, %c0_10] : memref<8x800xbf16, #tpu.memory_space<vmem>>, vector<8x800xbf16>
    %cst_11 = arith.constant dense<0.000000e+00> : vector<8x128xf32>
    %10 = tpu.matmul %9, %0, %cst_11 {dimension_numbers = #tpu.dot_dimension_numbers<[1], [0], [0], [1], [0, 0, 1, 1], [], []>} : vector<8x800xbf16>, vector<800x128xbf16>, vector<8x128xf32> -> vector<8x128xf32>
    %11 = arith.maximumf %8, %10 : vector<8x128xf32>
    %c0_12 = arith.constant 0 : index
    %c0_13 = arith.constant 0 : index
    %12 = vector.load %arg6[%c0_12, %c0_13] : memref<1x128xf32, #tpu.memory_space<vmem>>, vector<1x128xf32>
    %13 = vector.broadcast %12 : vector<1x128xf32> to vector<8x128xf32>
    %14 = arith.addf %11, %13 : vector<8x128xf32>
    %cst_14 = arith.constant 0.000000e+00 : f32
    %15 = vector.broadcast %cst_14 : f32 to vector<8x128xf32>
    %16 = arith.maximumf %14, %15 : vector<8x128xf32>
    %17 = arith.truncf %16 : vector<8x128xf32> to vector<8x128xbf16>
    %c0_15 = arith.constant 0 : index
    %c0_16 = arith.constant 0 : index
    %18 = vector.load %arg7[%c0_15, %c0_16] : memref<128x2048xbf16, #tpu.memory_space<vmem>>, vector<128x2048xbf16>
    %cst_17 = arith.constant dense<0.000000e+00> : vector<8x2048xf32>
    %19 = tpu.matmul %17, %18, %cst_17 {dimension_numbers = #tpu.dot_dimension_numbers<[1], [0], [0], [1], [0, 0, 1, 1], [], []>} : vector<8x128xbf16>, vector<128x2048xbf16>, vector<8x2048xf32> -> vector<8x2048xf32>
    %c0_18 = arith.constant 0 : index
    %c0_19 = arith.constant 0 : index
    %20 = vector.load %arg8[%c0_18, %c0_19] : memref<1x2048xf32, #tpu.memory_space<vmem>>, vector<1x2048xf32>
    %21 = vector.broadcast %20 : vector<1x2048xf32> to vector<8x2048xf32>
    %22 = arith.addf %19, %21 : vector<8x2048xf32>
    %cst_20 = arith.constant 0.000000e+00 : f32
    %23 = vector.broadcast %cst_20 : f32 to vector<8x2048xf32>
    %24 = arith.maximumf %22, %23 : vector<8x2048xf32>
    %25 = arith.truncf %24 : vector<8x2048xf32> to vector<8x2048xbf16>
    %c0_21 = arith.constant 0 : index
    %c0_22 = arith.constant 0 : index
    %26 = vector.load %arg9[%c0_21, %c0_22] : memref<2048x128xbf16, #tpu.memory_space<vmem>>, vector<2048x128xbf16>
    %cst_23 = arith.constant dense<0.000000e+00> : vector<8x128xf32>
    %27 = tpu.matmul %25, %26, %cst_23 {dimension_numbers = #tpu.dot_dimension_numbers<[1], [0], [0], [1], [0, 0, 1, 1], [], []>} : vector<8x2048xbf16>, vector<2048x128xbf16>, vector<8x128xf32> -> vector<8x128xf32>
    %c0_24 = arith.constant 0 : index
    %c0_25 = arith.constant 0 : index
    %28 = vector.load %arg10[%c0_24, %c0_25] : memref<1x128xf32, #tpu.memory_space<vmem>>, vector<1x128xf32>
    %29 = vector.broadcast %28 : vector<1x128xf32> to vector<8x128xf32>
    %30 = arith.addf %27, %29 : vector<8x128xf32>
    %c0_26 = arith.constant 0 : index
    %c0_27 = arith.constant 0 : index
    %31 = vector.load %arg11[%c0_26, %c0_27] : memref<8x128xf32, #tpu.memory_space<vmem>>, vector<8x128xf32>
    tpu.vector_store %arg11[%c0_26, %c0_27], %30 {strides = array<i32>} : memref<8x128xf32, #tpu.memory_space<vmem>>, vector<8x128xf32>,
    return
  }
  func.func @transform_0(%arg0: i32) -> (i32, i32) {
    %c0_i32 = arith.constant 0 : i32
    %c0_i32_0 = arith.constant 0 : i32
    return %arg0, %c0_i32 : i32, i32
  }
  func.func @transform_1(%arg0: i32) -> (i32, i32) {
    %c0_i32 = arith.constant 0 : i32
    %c0_i32_0 = arith.constant 0 : i32
    return %arg0, %c0_i32 : i32, i32
  }
  func.func @transform_2(%arg0: i32) -> (i32, i32) {
    %c0_i32 = arith.constant 0 : i32
    %c0_i32_0 = arith.constant 0 : i32
    return %arg0, %c0_i32 : i32, i32
  }
  func.func @transform_3(%arg0: i32) -> (i32, i32) {
    %c0_i32 = arith.constant 0 : i32
    %c0_i32_0 = arith.constant 0 : i32
    return %arg0, %c0_i32 : i32, i32
  }
  func.func @transform_4(%arg0: i32) -> (i32, i32) {
    %c0_i32 = arith.constant 0 : i32
    %c0_i32_0 = arith.constant 0 : i32
    %c0_i32_1 = arith.constant 0 : i32
    return %c0_i32, %c0_i32_0 : i32, i32
  }
  func.func @transform_5(%arg0: i32) -> (i32, i32) {
    %c0_i32 = arith.constant 0 : i32
    %c0_i32_0 = arith.constant 0 : i32
    %c0_i32_1 = arith.constant 0 : i32
    return %c0_i32, %c0_i32_0 : i32, i32
  }
  func.func @transform_6(%arg0: i32) -> (i32, i32) {
    %c0_i32 = arith.constant 0 : i32
    %c0_i32_0 = arith.constant 0 : i32
    %c0_i32_1 = arith.constant 0 : i32
    return %c0_i32, %c0_i32_0 : i32, i32
  }
  func.func @transform_7(%arg0: i32) -> (i32, i32) {
    %c0_i32 = arith.constant 0 : i32
    %c0_i32_0 = arith.constant 0 : i32
    %c0_i32_1 = arith.constant 0 : i32
    return %c0_i32, %c0_i32_0 : i32, i32
  }
  func.func @transform_8(%arg0: i32) -> (i32, i32) {
    %c0_i32 = arith.constant 0 : i32
    %c0_i32_0 = arith.constant 0 : i32
    %c0_i32_1 = arith.constant 0 : i32
    return %c0_i32, %c0_i32_0 : i32, i32
  }
  func.func @transform_9(%arg0: i32) -> (i32, i32) {
    %c0_i32 = arith.constant 0 : i32
    %c0_i32_0 = arith.constant 0 : i32
    %c0_i32_1 = arith.constant 0 : i32
    return %c0_i32, %c0_i32_0 : i32, i32
  }
  func.func @transform_10(%arg0: i32) -> (i32, i32) {
    %c0_i32 = arith.constant 0 : i32
    %c0_i32_0 = arith.constant 0 : i32
    return %arg0, %c0_i32 : i32, i32
  }
}

</mosaic_0001>

<llo_original>
// kernel: cnn_forward.2
$region0: #{cnn_forward.2}
  #allocation0 [shape = 'u32[]', space=smem, size = 0x4, offset = 0x4, fixed_abs, tag = 'smem constant byte address 0x4 - core index']
  #allocation1 [shape = 'u32[144,128]{1,0:T(1,128)}', space=vmem, size = 0x12000, scoped, tag = 'internal scratch']
  %s0 = inlined_call_operand.vmem [shape: bf16[72,128], index: 0, kind: input, shape index: {}]
  %s1 = inlined_call_operand.vmem [shape: bf16[128,512], index: 1, kind: input, shape index: {}]
  %s2 = inlined_call_operand.vmem [shape: f32[1,128], index: 2, kind: input, shape index: {}]
  %s3 = inlined_call_operand.vmem [shape: bf16[72,128], index: 3, kind: output, shape index: {}]
  %s4 = sld [smem:[#allocation0]]
  $region22: #{cnn_forward.2} parent=0
    _
  %s6 = ssub.s32 1, %s4
  %s7 = scalar_select 0, %s6, %s4
  // Predicated region
  $region2: #{cnn_forward.2} parent=0 // pred_check
    _
  $region3: #{cnn_forward.2} parent=0 // pred_check_branch
    %9 = sbr.rel (0) target = $region5
  $region4: #{cnn_forward.2} parent=0 // pred_region
    _
  $region5: #{cnn_forward.2} parent=0 // pred_fallthru
    _
  // Predicated region
  $region6: #{cnn_forward.2} parent=0 // pred_check
    _
  $region7: #{cnn_forward.2} parent=0 // pred_check_branch
    %11 = sbr.rel (0) target = $region9
  $region8: #{cnn_forward.2} parent=0 // pred_region
    _
  $region9: #{cnn_forward.2} parent=0 // pred_fallthru
    _
  // Predicated region
  $region10: #{cnn_forward.2} parent=0 // pred_check
    _
  $region11: #{cnn_forward.2} parent=0 // pred_check_branch
    %13 = sbr.rel (0) target = $region13
  $region12: #{cnn_forward.2} parent=0 // pred_region
    _
  $region13: #{cnn_forward.2} parent=0 // pred_fallthru
    _
  %v15 = vld [vmem:[%s0] sm:$0xf]
  %v16 = vld [vmem:[%s0 + $0x4] sm:$0xf]
  %v17 = vld [vmem:[%s0 + $0x8] sm:$0xf]
  %v18 = vld [vmem:[%s0 + $0xc] sm:$0xf]
  %v19 = vld [vmem:[%s0 + $0x10] sm:$0xf]
  %v20 = vld [vmem:[%s0 + $0x14] sm:$0xf]
  %v21 = vld [vmem:[%s0 + $0x18] sm:$0xf]
  %v22 = vld [vmem:[%s0 + $0x1c] sm:$0xf]
  %v23 = vld [vmem:[%s0 + $0x20] sm:$0xf]
  %v24 = vld [vmem:[%s1] sm:$0xff]
  %v25 = vld [vmem:[%s1 + $0x8] sm:$0xff]
  %v26 = vld [vmem:[%s1 + $0x10] sm:$0xff]
  %v27 = vld [vmem:[%s1 + $0x18] sm:$0xff]
  %v28 = vld [vmem:[%s1 + $0x20] sm:$0xff]
  %v29 = vld [vmem:[%s1 + $0x28] sm:$0xff]
  %v30 = vld [vmem:[%s1 + $0x30] sm:$0xff]
  %v31 = vld [vmem:[%s1 + $0x38] sm:$0xff]
  %v32 = vld [vmem:[%s1 + $0x40] sm:$0xff]
  %v33 = vld [vmem:[%s1 + $0x48] sm:$0xff]
  %v34 = vld [vmem:[%s1 + $0x50] sm:$0xff]
  %v35 = vld [vmem:[%s1 + $0x58] sm:$0xff]
  %v36 = vld [vmem:[%s1 + $0x60] sm:$0xff]
  %v37 = vld [vmem:[%s1 + $0x68] sm:$0xff]
  %v38 = vld [vmem:[%s1 + $0x70] sm:$0xff]
  %v39 = vld [vmem:[%s1 + $0x78] sm:$0xff]
  %v40 = vld [vmem:[%s1 + $0x80] sm:$0xff]
  %v41 = vld [vmem:[%s1 + $0x88] sm:$0xff]
  %v42 = vld [vmem:[%s1 + $0x90] sm:$0xff]
  %v43 = vld [vmem:[%s1 + $0x98] sm:$0xff]
  %v44 = vld [vmem:[%s1 + $0xa0] sm:$0xff]
  %v45 = vld [vmem:[%s1 + $0xa8] sm:$0xff]
  %v46 = vld [vmem:[%s1 + $0xb0] sm:$0xff]
  %v47 = vld [vmem:[%s1 + $0xb8] sm:$0xff]
  %v48 = vld [vmem:[%s1 + $0xc0] sm:$0xff]
  %v49 = vld [vmem:[%s1 + $0xc8] sm:$0xff]
  %v50 = vld [vmem:[%s1 + $0xd0] sm:$0xff]
  %v51 = vld [vmem:[%s1 + $0xd8] sm:$0xff]
  %v52 = vld [vmem:[%s1 + $0xe0] sm:$0xff]
  %v53 = vld [vmem:[%s1 + $0xe8] sm:$0xff]
  %v54 = vld [vmem:[%s1 + $0xf0] sm:$0xff]
  %v55 = vld [vmem:[%s1 + $0xf8] sm:$0xff]
  %v65 = vunpack.c.l.b16 %v15
  %v66 = vunpack.c.l.b16 %v16
  %v67 = vunpack.c.l.b16 %v17
  %v68 = vunpack.c.l.b16 %v18
  %v69 = vunpack.c.l.b16 %v19
  %v70 = vunpack.c.l.b16 %v20
  %v71 = vunpack.c.l.b16 %v21
  %v72 = vunpack.c.l.b16 %v22
  %v73 = vunpack.c.l.b16 %v23
  %v74 = vpack.c.b16 %v66, %v65
  %v75 = vpack.c.b16 %v68, %v67
  %v76 = vpack.c.b16 %v70, %v69
  %v77 = vpack.c.b16 %v72, %v71
  %v78 = vpack.c.b16 %v73, %v73
  %v116 = vunpack.c.l.b16 %v24
  %v117 = vunpack.c.h.b16 %v24
  %v118 = vunpack.c.l.b16 %v25
  %v119 = vunpack.c.h.b16 %v25
  %v120 = vunpack.c.l.b16 %v26
  %v121 = vunpack.c.h.b16 %v26
  %v122 = vunpack.c.l.b16 %v27
  %v123 = vunpack.c.h.b16 %v27
  %v124 = vunpack.c.l.b16 %v28
  %v125 = vunpack.c.h.b16 %v28
  %v126 = vunpack.c.l.b16 %v29
  %v127 = vunpack.c.h.b16 %v29
  %v128 = vunpack.c.l.b16 %v30
  %v129 = vunpack.c.h.b16 %v30
  %v130 = vunpack.c.l.b16 %v31
  %v131 = vunpack.c.h.b16 %v31
  %v132 = vunpack.c.l.b16 %v32
  %v133 = vunpack.c.h.b16 %v32
  %v134 = vunpack.c.l.b16 %v33
  %v135 = vunpack.c.h.b16 %v33
  %v136 = vunpack.c.l.b16 %v34
  %v137 = vunpack.c.h.b16 %v34
  %v138 = vunpack.c.l.b16 %v35
  %v139 = vunpack.c.h.b16 %v35
  %v140 = vunpack.c.l.b16 %v36
  %v141 = vunpack.c.h.b16 %v36
  %v142 = vunpack.c.l.b16 %v37
  %v143 = vunpack.c.h.b16 %v37
  %v144 = vunpack.c.l.b16 %v38
  %v145 = vunpack.c.h.b16 %v38
  %v146 = vunpack.c.l.b16 %v39
  %v147 = vunpack.c.h.b16 %v39
  %v148 = vunpack.c.l.b16 %v40
  %v149 = vunpack.c.h.b16 %v40
  %v150 = vunpack.c.l.b16 %v41
  %v151 = vunpack.c.h.b16 %v41
  %v152 = vunpack.c.l.b16 %v42
  %v153 = vunpack.c.h.b16 %v42
  %v154 = vunpack.c.l.b16 %v43
  %v155 = vunpack.c.h.b16 %v43
  %v156 = vunpack.c.l.b16 %v44
  %v157 = vunpack.c.h.b16 %v44
  %v158 = vunpack.c.l.b16 %v45
  %v159 = vunpack.c.h.b16 %v45
  %v160 = vunpack.c.l.b16 %v46
  %v161 = vunpack.c.h.b16 %v46
  %v162 = vunpack.c.l.b16 %v47
  %v163 = vunpack.c.h.b16 %v47
  %v164 = vunpack.c.l.b16 %v48
  %v165 = vunpack.c.h.b16 %v48
  %v166 = vunpack.c.l.b16 %v49
  %v167 = vunpack.c.h.b16 %v49
  %v168 = vunpack.c.l.b16 %v50
  %v169 = vunpack.c.h.b16 %v50
  %v170 = vunpack.c.l.b16 %v51
  %v171 = vunpack.c.h.b16 %v51
  %v172 = vunpack.c.l.b16 %v52
  %v173 = vunpack.c.h.b16 %v52
  %v174 = vunpack.c.l.b16 %v53
  %v175 = vunpack.c.h.b16 %v53
  %v176 = vunpack.c.l.b16 %v54
  %v177 = vunpack.c.h.b16 %v54
  %v178 = vunpack.c.l.b16 %v55
  %v179 = vunpack.c.h.b16 %v55
  %v180 = vpack.c.b16 %v120, %v116
  %v181 = vpack.c.b16 %v121, %v117
  %v182 = vpack.c.b16 %v122, %v118
  %v183 = vpack.c.b16 %v123, %v119
  %v184 = vpack.c.b16 %v128, %v124
  %v185 = vpack.c.b16 %v129, %v125
  %v186 = vpack.c.b16 %v130, %v126
  %v187 = vpack.c.b16 %v131, %v127
  %v188 = vpack.c.b16 %v136, %v132
  %v189 = vpack.c.b16 %v137, %v133
  %v190 = vpack.c.b16 %v138, %v134
  %v191 = vpack.c.b16 %v139, %v135
  %v192 = vpack.c.b16 %v144, %v140
  %v193 = vpack.c.b16 %v145, %v141
  %v194 = vpack.c.b16 %v146, %v142
  %v195 = vpack.c.b16 %v147, %v143
  %v196 = vpack.c.b16 %v152, %v148
  %v197 = vpack.c.b16 %v153, %v149
  %v198 = vpack.c.b16 %v154, %v150
  %v199 = vpack.c.b16 %v155, %v151
  %v200 = vpack.c.b16 %v160, %v156
  %v201 = vpack.c.b16 %v161, %v157
  %v202 = vpack.c.b16 %v162, %v158
  %v203 = vpack.c.b16 %v163, %v159
  %v204 = vpack.c.b16 %v168, %v164
  %v205 = vpack.c.b16 %v169, %v165
  %v206 = vpack.c.b16 %v170, %v166
  %v207 = vpack.c.b16 %v171, %v167
  %v208 = vpack.c.b16 %v176, %v172
  %v209 = vpack.c.b16 %v177, %v173
  %v210 = vpack.c.b16 %v178, %v174
  %v211 = vpack.c.b16 %v179, %v175
  %244 = vmatprep.subr.bf16.mxu0 %v181
  %245 = vmatpush1.bf16.msra.mxu0 %v180
  %246 = vmatprep.subr.bf16.mxu0 %v185
  %247 = vmatpush1.bf16.msra.mxu0 %v184
  %248 = vmatprep.subr.bf16.mxu0 %v189
  %249 = vmatpush1.bf16.msra.mxu0 %v188
  %250 = vmatprep.subr.bf16.mxu0 %v193
  %251 = vmatpush1.bf16.msra.mxu0 %v192
  %252 = vmatprep.subr.bf16.mxu0 %v197
  %253 = vmatpush1.bf16.msra.mxu0 %v196
  %254 = vmatprep.subr.bf16.mxu0 %v201
  %255 = vmatpush1.bf16.msra.mxu0 %v200
  %256 = vmatprep.subr.bf16.mxu0 %v205
  %257 = vmatpush1.bf16.msra.mxu0 %v204
  %258 = vmatprep.subr.bf16.mxu0 %v209
  %259 = vmatpush1.bf16.msra.mxu0 %v208
  %260 = vmatprep.subr.bf16.mxu0 0
  %261 = vmatpush1.bf16.msra.mxu0 0
  %262 = vmatprep.subr.bf16.mxu0 0
  %263 = vmatpush1.bf16.msra.mxu0 0
  %264 = vmatprep.subr.bf16.mxu0 0
  %265 = vmatpush1.bf16.msra.mxu0 0
  %266 = vmatprep.subr.bf16.mxu0 0
  %267 = vmatpush1.bf16.msra.mxu0 0
  %268 = vmatprep.subr.bf16.mxu0 0
  %269 = vmatpush1.bf16.msra.mxu0 0
  %270 = vmatprep.subr.bf16.mxu0 0
  %271 = vmatpush1.bf16.msra.mxu0 0
  %272 = vmatprep.subr.bf16.mxu0 0
  %273 = vmatpush1.bf16.msra.mxu0 0
  %274 = vmatprep.subr.bf16.mxu0 0
  %275 = vmatpush1.bf16.msra.mxu0 0
  %276 = vmatprep.mubr.bf16.mxu0 0
  %277 = vmatmul.mubr.bf16.gmra.mrb[0].mxu0 %v74
  %v278 = vpop.f32.mrb[0].mxu0
  %v279 = vadd.f32 0.0, %v278
  %v280 = vpop.f32.mrb[0].mxu0
  %v281 = vadd.f32 0.0, %v280
  %v282 = vpop.f32.mrb[0].mxu0
  %v283 = vadd.f32 0.0, %v282
  %v284 = vpop.f32.mrb[0].mxu0
  %v285 = vadd.f32 0.0, %v284
  %286 = vmatprep.mubr.bf16.mxu0 0
  %287 = vmatmul.mubr.bf16.gmra.mrb[0].mxu0 %v75
  %v288 = vpop.f32.mrb[0].mxu0
  %v289 = vadd.f32 0.0, %v288
  %v290 = vpop.f32.mrb[0].mxu0
  %v291 = vadd.f32 0.0, %v290
  %v292 = vpop.f32.mrb[0].mxu0
  %v293 = vadd.f32 0.0, %v292
  %v294 = vpop.f32.mrb[0].mxu0
  %v295 = vadd.f32 0.0, %v294
  %296 = vmatprep.mubr.bf16.mxu0 0
  %297 = vmatmul.mubr.bf16.gmra.mrb[0].mxu0 %v76
  %v298 = vpop.f32.mrb[0].mxu0
  %v299 = vadd.f32 0.0, %v298
  %v300 = vpop.f32.mrb[0].mxu0
  %v301 = vadd.f32 0.0, %v300
  %v302 = vpop.f32.mrb[0].mxu0
  %v303 = vadd.f32 0.0, %v302
  %v304 = vpop.f32.mrb[0].mxu0
  %v305 = vadd.f32 0.0, %v304
  %306 = vmatprep.mubr.bf16.mxu0 0
  %307 = vmatmul.mubr.bf16.gmra.mrb[0].mxu0 %v77
  %v308 = vpop.f32.mrb[0].mxu0
  %v309 = vadd.f32 0.0, %v308
  %v310 = vpop.f32.mrb[0].mxu0
  %v311 = vadd.f32 0.0, %v310
  %v312 = vpop.f32.mrb[0].mxu0
  %v313 = vadd.f32 0.0, %v312
  %v314 = vpop.f32.mrb[0].mxu0
  %v315 = vadd.f32 0.0, %v314
  %316 = vmatprep.mubr.bf16.mxu0 0
  %317 = vmatmul.mubr.bf16.gmra.mrb[0].mxu0 %v78
  %v318 = vpop.f32.mrb[0].mxu0
  %v319 = vadd.f32 0.0, %v318
  %v320 = vpop.f32.mrb[0].mxu0
  %v321 = vadd.f32 0.0, %v320
  %v322 = vpop.f32.mrb[0].mxu0
  %v323 = vpop.f32.mrb[0].mxu0
  %324 = vdwg.mxu0
  %325 = vmatprep.subr.bf16.mxu0 %v183
  %326 = vmatpush1.bf16.msra.mxu0 %v182
  %327 = vmatprep.subr.bf16.mxu0 %v187
  %328 = vmatpush1.bf16.msra.mxu0 %v186
  %329 = vmatprep.subr.bf16.mxu0 %v191
  %330 = vmatpush1.bf16.msra.mxu0 %v190
  %331 = vmatprep.subr.bf16.mxu0 %v195
  %332 = vmatpush1.bf16.msra.mxu0 %v194
  %333 = vmatprep.subr.bf16.mxu0 %v199
  %334 = vmatpush1.bf16.msra.mxu0 %v198
  %335 = vmatprep.subr.bf16.mxu0 %v203
  %336 = vmatpush1.bf16.msra.mxu0 %v202
  %337 = vmatprep.subr.bf16.mxu0 %v207
  %338 = vmatpush1.bf16.msra.mxu0 %v206
  %339 = vmatprep.subr.bf16.mxu0 %v211
  %340 = vmatpush1.bf16.msra.mxu0 %v210
  %341 = vmatprep.subr.bf16.mxu0 0
  %342 = vmatpush1.bf16.msra.mxu0 0
  %343 = vmatprep.subr.bf16.mxu0 0
  %344 = vmatpush1.bf16.msra.mxu0 0
  %345 = vmatprep.subr.bf16.mxu0 0
  %346 = vmatpush1.bf16.msra.mxu0 0
  %347 = vmatprep.subr.bf16.mxu0 0
  %348 = vmatpush1.bf16.msra.mxu0 0
  %349 = vmatprep.subr.bf16.mxu0 0
  %350 = vmatpush1.bf16.msra.mxu0 0
  %351 = vmatprep.subr.bf16.mxu0 0
  %352 = vmatpush1.bf16.msra.mxu0 0
  %353 = vmatprep.subr.bf16.mxu0 0
  %354 = vmatpush1.bf16.msra.mxu0 0
  %355 = vmatprep.subr.bf16.mxu0 0
  %356 = vmatpush1.bf16.msra.mxu0 0
  %357 = vmatprep.mubr.bf16.mxu0 0
  %358 = vmatmul.mubr.bf16.gmra.mrb[0].mxu0 %v74
  %v359 = vpop.f32.mrb[0].mxu0
  %v360 = vadd.f32 0.0, %v359
  %v361 = vpop.f32.mrb[0].mxu0
  %v362 = vadd.f32 0.0, %v361
  %v363 = vpop.f32.mrb[0].mxu0
  %v364 = vadd.f32 0.0, %v363
  %v365 = vpop.f32.mrb[0].mxu0
  %v366 = vadd.f32 0.0, %v365
  %367 = vmatprep.mubr.bf16.mxu0 0
  %368 = vmatmul.mubr.bf16.gmra.mrb[0].mxu0 %v75
  %v369 = vpop.f32.mrb[0].mxu0
  %v370 = vadd.f32 0.0, %v369
  %v371 = vpop.f32.mrb[0].mxu0
  %v372 = vadd.f32 0.0, %v371
  %v373 = vpop.f32.mrb[0].mxu0
  %v374 = vadd.f32 0.0, %v373
  %v375 = vpop.f32.mrb[0].mxu0
  %v376 = vadd.f32 0.0, %v375
  %377 = vmatprep.mubr.bf16.mxu0 0
  %378 = vmatmul.mubr.bf16.gmra.mrb[0].mxu0 %v76
  %v379 = vpop.f32.mrb[0].mxu0
  %v380 = vadd.f32 0.0, %v379
  %v381 = vpop.f32.mrb[0].mxu0
  %v382 = vadd.f32 0.0, %v381
  %v383 = vpop.f32.mrb[0].mxu0
  %v384 = vadd.f32 0.0, %v383
  %v385 = vpop.f32.mrb[0].mxu0
  %v386 = vadd.f32 0.0, %v385
  %387 = vmatprep.mubr.bf16.mxu0 0
  %388 = vmatmul.mubr.bf16.gmra.mrb[0].mxu0 %v77
  %v389 = vpop.f32.mrb[0].mxu0
  %v390 = vadd.f32 0.0, %v389
  %v391 = vpop.f32.mrb[0].mxu0
  %v392 = vadd.f32 0.0, %v391
  %v393 = vpop.f32.mrb[0].mxu0
  %v394 = vadd.f32 0.0, %v393
  %v395 = vpop.f32.mrb[0].mxu0
  %v396 = vadd.f32 0.0, %v395
  %397 = vmatprep.mubr.bf16.mxu0 0
  %398 = vmatmul.mubr.bf16.gmra.mrb[0].mxu0 %v78
  %v399 = vpop.f32.mrb[0].mxu0
  %v400 = vadd.f32 0.0, %v399
  %v401 = vpop.f32.mrb[0].mxu0
  %v402 = vadd.f32 0.0, %v401
  %v403 = vpop.f32.mrb[0].mxu0
  %v404 = vpop.f32.mrb[0].mxu0
  %405 = vdwg.mxu0
  %v406 = vmax.f32 %v279, %v281
  %v407 = vmax.f32 %v283, %v285
  %v408 = vmax.f32 %v289, %v291
  %v409 = vmax.f32 %v293, %v295
  %v410 = vmax.f32 %v299, %v301
  %v411 = vmax.f32 %v303, %v305
  %v412 = vmax.f32 %v309, %v311
  %v413 = vmax.f32 %v313, %v315
  %v414 = vmax.f32 %v319, %v321
  %v415 = vmax.f32 %v360, %v362
  %v416 = vmax.f32 %v364, %v366
  %v417 = vmax.f32 %v370, %v372
  %v418 = vmax.f32 %v374, %v376
  %v419 = vmax.f32 %v380, %v382
  %v420 = vmax.f32 %v384, %v386
  %v421 = vmax.f32 %v390, %v392
  %v422 = vmax.f32 %v394, %v396
  %v423 = vmax.f32 %v400, %v402
  %v424 = vmax.f32 %v406, %v415
  %v425 = vmax.f32 %v407, %v416
  %v426 = vmax.f32 %v408, %v417
  %v427 = vmax.f32 %v409, %v418
  %v428 = vmax.f32 %v410, %v419
  %v429 = vmax.f32 %v411, %v420
  %v430 = vmax.f32 %v412, %v421
  %v431 = vmax.f32 %v413, %v422
  %v432 = vmax.f32 %v414, %v423
  %v433 = vld [vmem:[%s2] sm:$0x1]
  %v435 = vlaneseq
  %v436 = vshrl.u32 %v435, 7
  %v437 = vsub.s32 0, %v436
  %v438 = vrot.slane %v433, %v437
  %v440 = vadd.f32 %v424, %v438
  %v441 = vadd.f32 %v425, %v438
  %v442 = vadd.f32 %v426, %v438
  %v443 = vadd.f32 %v427, %v438
  %v444 = vadd.f32 %v428, %v438
  %v445 = vadd.f32 %v429, %v438
  %v446 = vadd.f32 %v430, %v438
  %v447 = vadd.f32 %v431, %v438
  %v448 = vadd.f32 %v432, %v438
  %v449 = vmax.f32 %v440, 0.0
  %v450 = vmax.f32 %v441, 0.0
  %v451 = vmax.f32 %v442, 0.0
  %v452 = vmax.f32 %v443, 0.0
  %v453 = vmax.f32 %v444, 0.0
  %v454 = vmax.f32 %v445, 0.0
  %v455 = vmax.f32 %v446, 0.0
  %v456 = vmax.f32 %v447, 0.0
  %v457 = vmax.f32 %v448, 0.0
  %v458 = vpack.c.bf16 %v450, %v449
  %v459 = vpack.c.bf16 %v452, %v451
  %v460 = vpack.c.bf16 %v454, %v453
  %v461 = vpack.c.bf16 %v456, %v455
  %v462 = vpack.c.bf16 %v457, %v457
  %v468 = vunpack.c.l.b16 %v458
  %v469 = vunpack.c.h.b16 %v458
  %v470 = vunpack.c.l.b16 %v459
  %v471 = vunpack.c.h.b16 %v459
  %v472 = vunpack.c.l.b16 %v460
  %v473 = vunpack.c.h.b16 %v460
  %v474 = vunpack.c.l.b16 %v461
  %v475 = vunpack.c.h.b16 %v461
  %v476 = vunpack.c.l.b16 %v462
  %v477 = vpack.c.b16 %v468, %v468
  %v478 = vpack.c.b16 %v469, %v469
  %v479 = vpack.c.b16 %v470, %v470
  %v480 = vpack.c.b16 %v471, %v471
  %v481 = vpack.c.b16 %v472, %v472
  %v482 = vpack.c.b16 %v473, %v473
  %v483 = vpack.c.b16 %v474, %v474
  %v484 = vpack.c.b16 %v475, %v475
  %v485 = vpack.c.b16 %v476, %v476
  %495 = vst [vmem:[%s3] sm:$0xf] %v477
  %496 = vst [vmem:[%s3 + $0x4] sm:$0xf] %v478
  %497 = vst [vmem:[%s3 + $0x8] sm:$0xf] %v479
  %498 = vst [vmem:[%s3 + $0xc] sm:$0xf] %v480
  %499 = vst [vmem:[%s3 + $0x10] sm:$0xf] %v481
  %500 = vst [vmem:[%s3 + $0x14] sm:$0xf] %v482
  %501 = vst [vmem:[%s3 + $0x18] sm:$0xf] %v483
  %502 = vst [vmem:[%s3 + $0x1c] sm:$0xf] %v484
  %503 = vst [vmem:[%s3 + $0x20] sm:$0xf] %v485
  // Predicated region
  $region14: #{cnn_forward.2} parent=0 // pred_check
    _
  $region15: #{cnn_forward.2} parent=0 // pred_check_branch
    %505 = sbr.rel (0) target = $region17
  $region16: #{cnn_forward.2} parent=0 // pred_region
    _
  $region17: #{cnn_forward.2} parent=0 // pred_fallthru
    _
  // Predicated region
  $region18: #{cnn_forward.2} parent=0 // pred_check
    _
  $region19: #{cnn_forward.2} parent=0 // pred_check_branch
    %507 = sbr.rel (0) target = $region21
  $region20: #{cnn_forward.2} parent=0 // pred_region
    _
  $region21: #{cnn_forward.2} parent=0 // pred_fallthru
    _

// kernel: cnn_forward.3
$region0: #{cnn_forward.3}
  #allocation0 [shape = 'u32[]', space=smem, size = 0x4, offset = 0x4, fixed_abs, tag = 'smem constant byte address 0x4 - core index']
  #allocation1 [shape = 'u32[144,128]{1,0:T(1,128)}', space=vmem, size = 0x12000, scoped, tag = 'internal scratch']
  %s0 = inlined_call_operand.vmem [shape: bf16[8,800], index: 0, kind: input, shape index: {}]
  %s1 = inlined_call_operand.vmem [shape: bf16[8,800], index: 1, kind: input, shape index: {}]
  %s2 = inlined_call_operand.vmem [shape: bf16[8,800], index: 2, kind: input, shape index: {}]
  %s3 = inlined_call_operand.vmem [shape: bf16[8,800], index: 3, kind: input, shape index: {}]
  %s4 = inlined_call_operand.vmem [shape: bf16[800,128], index: 4, kind: input, shape index: {}]
  %s5 = inlined_call_operand.vmem [shape: f32[1,128], index: 5, kind: input, shape index: {}]
  %s6 = inlined_call_operand.vmem [shape: bf16[128,2048], index: 6, kind: input, shape index: {}]
  %s7 = inlined_call_operand.vmem [shape: f32[1,2048], index: 7, kind: input, shape index: {}]
  %s8 = inlined_call_operand.vmem [shape: bf16[2048,128], index: 8, kind: input, shape index: {}]
  %s9 = inlined_call_operand.vmem [shape: f32[1,128], index: 9, kind: input, shape index: {}]
  %s10 = inlined_call_operand.vmem [shape: f32[8,128], index: 10, kind: output, shape index: {}]
  %s11 = sld [smem:[#allocation0]]
  $region50: #{cnn_forward.3} parent=0
    _
  %s13 = ssub.s32 1, %s11
  %s14 = scalar_select 0, %s13, %s11
  // Predicated region
  $region2: #{cnn_forward.3} parent=0 // pred_check
    _
  $region3: #{cnn_forward.3} parent=0 // pred_check_branch
    %16 = sbr.rel (0) target = $region5
  $region4: #{cnn_forward.3} parent=0 // pred_region
    _
  $region5: #{cnn_forward.3} parent=0 // pred_fallthru
    _
  // Predicated region
  $region6: #{cnn_forward.3} parent=0 // pred_check
    _
  $region7: #{cnn_forward.3} parent=0 // pred_check_branch
    %18 = sbr.rel (0) target = $region9
  $region8: #{cnn_forward.3} parent=0 // pred_region
    _
  $region9: #{cnn_forward.3} parent=0 // pred_fallthru
    _
  // Predicated region
  $region10: #{cnn_forward.3} parent=0 // pred_check
    _
  $region11: #{cnn_forward.3} parent=0 // pred_check_branch
    %20 = sbr.rel (0) target = $region13
  $region12: #{cnn_forward.3} parent=0 // pred_region
    _
  $region13: #{cnn_forward.3} parent=0 // pred_fallthru
    _
  // Predicated region
  $region14: #{cnn_forward.3} parent=0 // pred_check
    _
  $region15: #{cnn_forward.3} parent=0 // pred_check_branch
    %22 = sbr.rel (0) target = $region17
  $region16: #{cnn_forward.3} parent=0 // pred_region
    _
  $region17: #{cnn_forward.3} parent=0 // pred_fallthru
    _
  // Predicated region
  $region18: #{cnn_forward.3} parent=0 // pred_check
    _
  $region19: #{cnn_forward.3} parent=0 // pred_check_branch
    %24 = sbr.rel (0) target = $region21
  $region20: #{cnn_forward.3} parent=0 // pred_region
    _
  $region21: #{cnn_forward.3} parent=0 // pred_fallthru
    _
  // Predicated region
  $region22: #{cnn_forward.3} parent=0 // pred_check
    _
  $region23: #{cnn_forward.3} parent=0 // pred_check_branch
    %26 = sbr.rel (0) target = $region25
  $region24: #{cnn_forward.3} parent=0 // pred_region
    _
  $region25: #{cnn_forward.3} parent=0 // pred_fallthru
    _
  // Predicated region
  $region26: #{cnn_forward.3} parent=0 // pred_check
    _
  $region27: #{cnn_forward.3} parent=0 // pred_check_branch
    %28 = sbr.rel (0) target = $region29
  $region28: #{cnn_forward.3} parent=0 // pred_region
    _
  $region29: #{cnn_forward.3} parent=0 // pred_fallthru
    _
  // Predicated region
  $region30: #{cnn_forward.3} parent=0 // pred_check
    _
  $region31: #{cnn_forward.3} parent=0 // pred_check_branch
    %30 = sbr.rel (0) target = $region33
  $region32: #{cnn_forward.3} parent=0 // pred_region
    _
  $region33: #{cnn_forward.3} parent=0 // pred_fallthru
    _
  // Predicated region
  $region34: #{cnn_forward.3} parent=0 // pred_check
    _
  $region35: #{cnn_forward.3} parent=0 // pred_check_branch
    %32 = sbr.rel (0) target = $region37
  $region36: #{cnn_forward.3} parent=0 // pred_region
    _
  $region37: #{cnn_forward.3} parent=0 // pred_fallthru
    _
  // Predicated region
  $region38: #{cnn_forward.3} parent=0 // pred_check
    _
  $region39: #{cnn_forward.3} parent=0 // pred_check_branch
    %34 = sbr.rel (0) target = $region41
  $region40: #{cnn_forward.3} parent=0 // pred_region
    _
  $region41: #{cnn_forward.3} parent=0 // pred_fallthru
    _
  %v36 = vld [vmem:[%s4] sm:$0xf]
  %v37 = vld [vmem:[%s4 + $0x4] sm:$0xf]
  %v38 = vld [vmem:[%s4 + $0x8] sm:$0xf]
  %v39 = vld [vmem:[%s4 + $0xc] sm:$0xf]
  %v40 = vld [vmem:[%s4 + $0x10] sm:$0xf]
  %v41 = vld [vmem:[%s4 + $0x14] sm:$0xf]
  %v42 = vld [vmem:[%s4 + $0x18] sm:$0xf]
  %v43 = vld [vmem:[%s4 + $0x1c] sm:$0xf]
  %v44 = vld [vmem:[%s4 + $0x20] sm:$0xf]
  %v45 = vld [vmem:[%s4 + $0x24] sm:$0xf]
  %v46 = vld [vmem:[%s4 + $0x28] sm:$0xf]
  %v47 = vld [vmem:[%s4 + $0x2c] sm:$0xf]
  %v48 = vld [vmem:[%s4 + $0x30] sm:$0xf]
  %v49 = vld [vmem:[%s4 + $0x34] sm:$0xf]
  %v50 = vld [vmem:[%s4 + $0x38] sm:$0xf]
  %v51 = vld [vmem:[%s4 + $0x3c] sm:$0xf]
  %v52 = vld [vmem:[%s4 + $0x40] sm:$0xf]
  %v53 = vld [vmem:[%s4 + $0x44] sm:$0xf]
  %v54 = vld [vmem:[%s4 + $0x48] sm:$0xf]
  %v55 = vld [vmem:[%s4 + $0x4c] sm:$0xf]
  %v56 = vld [vmem:[%s4 + $0x50] sm:$0xf]
  %v57 = vld [vmem:[%s4 + $0x54] sm:$0xf]
  %v58 = vld [vmem:[%s4 + $0x58] sm:$0xf]
  %v59 = vld [vmem:[%s4 + $0x5c] sm:$0xf]
  %v60 = vld [vmem:[%s4 + $0x60] sm:$0xf]
  %v61 = vld [vmem:[%s4 + $0x64] sm:$0xf]
  %v62 = vld [vmem:[%s4 + $0x68] sm:$0xf]
  %v63 = vld [vmem:[%s4 + $0x6c] sm:$0xf]
  %v64 = vld [vmem:[%s4 + $0x70] sm:$0xf]
  %v65 = vld [vmem:[%s4 + $0x74] sm:$0xf]
  %v66 = vld [vmem:[%s4 + $0x78] sm:$0xf]
  %v67 = vld [vmem:[%s4 + $0x7c] sm:$0xf]
  %v68 = vld [vmem:[%s4 + $0x80] sm:$0xf]
  %v69 = vld [vmem:[%s4 + $0x84] sm:$0xf]
  %v70 = vld [vmem:[%s4 + $0x88] sm:$0xf]
  %v71 = vld [vmem:[%s4 + $0x8c] sm:$0xf]
  %v72 = vld [vmem:[%s4 + $0x90] sm:$0xf]
  %v73 = vld [vmem:[%s4 + $0x94] sm:$0xf]
  %v74 = vld [vmem:[%s4 + $0x98] sm:$0xf]
  %v75 = vld [vmem:[%s4 + $0x9c] sm:$0xf]
  %v76 = vld [vmem:[%s4 + $0xa0] sm:$0xf]
  %v77 = vld [vmem:[%s4 + $0xa4] sm:$0xf]
  %v78 = vld [vmem:[%s4 + $0xa8] sm:$0xf]
  %v79 = vld [vmem:[%s4 + $0xac] sm:$0xf]
  %v80 = vld [vmem:[%s4 + $0xb0] sm:$0xf]
  %v81 = vld [vmem:[%s4 + $0xb4] sm:$0xf]
  %v82 = vld [vmem:[%s4 + $0xb8] sm:$0xf]
  %v83 = vld [vmem:[%s4 + $0xbc] sm:$0xf]
  %v84 = vld [vmem:[%s4 + $0xc0] sm:$0xf]
  %v85 = vld [vmem:[%s4 + $0xc4] sm:$0xf]
  %v86 = vld [vmem:[%s4 + $0xc8] sm:$0xf]
  %v87 = vld [vmem:[%s4 + $0xcc] sm:$0xf]
  %v88 = vld [vmem:[%s4 + $0xd0] sm:$0xf]
  %v89 = vld [vmem:[%s4 + $0xd4] sm:$0xf]
  %v90 = vld [vmem:[%s4 + $0xd8] sm:$0xf]
  %v91 = vld [vmem:[%s4 + $0xdc] sm:$0xf]
  %v92 = vld [vmem:[%s4 + $0xe0] sm:$0xf]
  %v93 = vld [vmem:[%s4 + $0xe4] sm:$0xf]
  %v94 = vld [vmem:[%s4 + $0xe8] sm:$0xf]
  %v95 = vld [vmem:[%s4 + $0xec] sm:$0xf]
  %v96 = vld [vmem:[%s4 + $0xf0] sm:$0xf]
  %v97 = vld [vmem:[%s4 + $0xf4] sm:$0xf]
  %v98 = vld [vmem:[%s4 + $0xf8] sm:$0xf]
  %v99 = vld [vmem:[%s4 + $0xfc] sm:$0xf]
  %v100 = vld [vmem:[%s4 + $0x100] sm:$0xf]
  %v101 = vld [vmem:[%s4 + $0x104] sm:$0xf]
  %v102 = vld [vmem:[%s4 + $0x108] sm:$0xf]
  %v103 = vld [vmem:[%s4 + $0x10c] sm:$0xf]
  %v104 = vld [vmem:[%s4 + $0x110] sm:$0xf]
  %v105 = vld [vmem:[%s4 + $0x114] sm:$0xf]
  %v106 = vld [vmem:[%s4 + $0x118] sm:$0xf]
  %v107 = vld [vmem:[%s4 + $0x11c] sm:$0xf]
  %v108 = vld [vmem:[%s4 + $0x120] sm:$0xf]
  %v109 = vld [vmem:[%s4 + $0x124] sm:$0xf]
  %v110 = vld [vmem:[%s4 + $0x128] sm:$0xf]
  %v111 = vld [vmem:[%s4 + $0x12c] sm:$0xf]
  %v112 = vld [vmem:[%s4 + $0x130] sm:$0xf]
  %v113 = vld [vmem:[%s4 + $0x134] sm:$0xf]
  %v114 = vld [vmem:[%s4 + $0x138] sm:$0xf]
  %v115 = vld [vmem:[%s4 + $0x13c] sm:$0xf]
  %v116 = vld [vmem:[%s4 + $0x140] sm:$0xf]
  %v117 = vld [vmem:[%s4 + $0x144] sm:$0xf]
  %v118 = vld [vmem:[%s4 + $0x148] sm:$0xf]
  %v119 = vld [vmem:[%s4 + $0x14c] sm:$0xf]
  %v120 = vld [vmem:[%s4 + $0x150] sm:$0xf]
  %v121 = vld [vmem:[%s4 + $0x154] sm:$0xf]
  %v122 = vld [vmem:[%s4 + $0x158] sm:$0xf]
  %v123 = vld [vmem:[%s4 + $0x15c] sm:$0xf]
  %v124 = vld [vmem:[%s4 + $0x160] sm:$0xf]
  %v125 = vld [vmem:[%s4 + $0x164] sm:$0xf]
  %v126 = vld [vmem:[%s4 + $0x168] sm:$0xf]
  %v127 = vld [vmem:[%s4 + $0x16c] sm:$0xf]
  %v128 = vld [vmem:[%s4 + $0x170] sm:$0xf]
  %v129 = vld [vmem:[%s4 + $0x174] sm:$0xf]
  %v130 = vld [vmem:[%s4 + $0x178] sm:$0xf]
  %v131 = vld [vmem:[%s4 + $0x17c] sm:$0xf]
  %v132 = vld [vmem:[%s4 + $0x180] sm:$0xf]
  %v133 = vld [vmem:[%s4 + $0x184] sm:$0xf]
  %v134 = vld [vmem:[%s4 + $0x188] sm:$0xf]
  %v135 = vld [vmem:[%s4 + $0x18c] sm:$0xf]
  %v136 = vld [vmem:[%s0] sm:$0xff]
  %v137 = vld [vmem:[%s0 + $0x8] sm:$0xff]
  %v138 = vld [vmem:[%s0 + $0x10] sm:$0xff]
  %v139 = vld [vmem:[%s0 + $0x18] sm:$0xf]
  %v144 = vunpack.c.l.b16 %v136
  %v145 = vunpack.c.h.b16 %v136
  %v146 = vunpack.c.l.b16 %v137
  %v147 = vunpack.c.h.b16 %v137
  %v148 = vunpack.c.l.b16 %v138
  %v149 = vunpack.c.h.b16 %v138
  %v150 = vunpack.c.l.b16 %v139
  %v151 = vpack.c.b16 %v144, %v144
  %v152 = vpack.c.b16 %v145, %v145
  %v153 = vpack.c.b16 %v146, %v146
  %v154 = vpack.c.b16 %v147, %v147
  %v155 = vpack.c.b16 %v148, %v148
  %v156 = vpack.c.b16 %v149, %v149
  %v157 = vpack.c.b16 %v150, %v150
  %v264 = vunpack.c.l.b16 %v36
  %v265 = vunpack.c.l.b16 %v37
  %v266 = vunpack.c.l.b16 %v38
  %v267 = vunpack.c.l.b16 %v39
  %v268 = vunpack.c.l.b16 %v40
  %v269 = vunpack.c.l.b16 %v41
  %v270 = vunpack.c.l.b16 %v42
  %v271 = vunpack.c.l.b16 %v43
  %v272 = vunpack.c.l.b16 %v44
  %v273 = vunpack.c.l.b16 %v45
  %v274 = vunpack.c.l.b16 %v46
  %v275 = vunpack.c.l.b16 %v47
  %v276 = vunpack.c.l.b16 %v48
  %v277 = vunpack.c.l.b16 %v49
  %v278 = vunpack.c.l.b16 %v50
  %v279 = vunpack.c.l.b16 %v51
  %v280 = vunpack.c.l.b16 %v52
  %v281 = vunpack.c.l.b16 %v53
  %v282 = vunpack.c.l.b16 %v54
  %v283 = vunpack.c.l.b16 %v55
  %v284 = vunpack.c.l.b16 %v56
  %v285 = vunpack.c.l.b16 %v57
  %v286 = vunpack.c.l.b16 %v58
  %v287 = vunpack.c.l.b16 %v59
  %v288 = vunpack.c.l.b16 %v60
  %v289 = vunpack.c.l.b16 %v61
  %v290 = vunpack.c.l.b16 %v62
  %v291 = vunpack.c.l.b16 %v63
  %v292 = vunpack.c.l.b16 %v64
  %v293 = vunpack.c.l.b16 %v65
  %v294 = vunpack.c.l.b16 %v66
  %v295 = vunpack.c.l.b16 %v67
  %v296 = vunpack.c.l.b16 %v68
  %v297 = vunpack.c.l.b16 %v69
  %v298 = vunpack.c.l.b16 %v70
  %v299 = vunpack.c.l.b16 %v71
  %v300 = vunpack.c.l.b16 %v72
  %v301 = vunpack.c.l.b16 %v73
  %v302 = vunpack.c.l.b16 %v74
  %v303 = vunpack.c.l.b16 %v75
  %v304 = vunpack.c.l.b16 %v76
  %v305 = vunpack.c.l.b16 %v77
  %v306 = vunpack.c.l.b16 %v78
  %v307 = vunpack.c.l.b16 %v79
  %v308 = vunpack.c.l.b16 %v80
  %v309 = vunpack.c.l.b16 %v81
  %v310 = vunpack.c.l.b16 %v82
  %v311 = vunpack.c.l.b16 %v83
  %v312 = vunpack.c.l.b16 %v84
  %v313 = vunpack.c.l.b16 %v85
  %v314 = vunpack.c.l.b16 %v86
  %v315 = vunpack.c.l.b16 %v87
  %v316 = vunpack.c.l.b16 %v88
  %v317 = vunpack.c.l.b16 %v89
  %v318 = vunpack.c.l.b16 %v90
  %v319 = vunpack.c.l.b16 %v91
  %v320 = vunpack.c.l.b16 %v92
  %v321 = vunpack.c.l.b16 %v93
  %v322 = vunpack.c.l.b16 %v94
  %v323 = vunpack.c.l.b16 %v95
  %v324 = vunpack.c.l.b16 %v96
  %v325 = vunpack.c.l.b16 %v97
  %v326 = vunpack.c.l.b16 %v98
  %v327 = vunpack.c.l.b16 %v99
  %v328 = vunpack.c.l.b16 %v100
  %v329 = vunpack.c.l.b16 %v101
  %v330 = vunpack.c.l.b16 %v102
  %v331 = vunpack.c.l.b16 %v103
  %v332 = vunpack.c.l.b16 %v104
  %v333 = vunpack.c.l.b16 %v105
  %v334 = vunpack.c.l.b16 %v106
  %v335 = vunpack.c.l.b16 %v107
  %v336 = vunpack.c.l.b16 %v108
  %v337 = vunpack.c.l.b16 %v109
  %v338 = vunpack.c.l.b16 %v110
  %v339 = vunpack.c.l.b16 %v111
  %v340 = vunpack.c.l.b16 %v112
  %v341 = vunpack.c.l.b16 %v113
  %v342 = vunpack.c.l.b16 %v114
  %v343 = vunpack.c.l.b16 %v115
  %v344 = vunpack.c.l.b16 %v116
  %v345 = vunpack.c.l.b16 %v117
  %v346 = vunpack.c.l.b16 %v118
  %v347 = vunpack.c.l.b16 %v119
  %v348 = vunpack.c.l.b16 %v120
  %v349 = vunpack.c.l.b16 %v121
  %v350 = vunpack.c.l.b16 %v122
  %v351 = vunpack.c.l.b16 %v123
  %v352 = vunpack.c.l.b16 %v124
  %v353 = vunpack.c.l.b16 %v125
  %v354 = vunpack.c.l.b16 %v126
  %v355 = vunpack.c.l.b16 %v127
  %v356 = vunpack.c.l.b16 %v128
  %v357 = vunpack.c.l.b16 %v129
  %v358 = vunpack.c.l.b16 %v130
  %v359 = vunpack.c.l.b16 %v131
  %v360 = vunpack.c.l.b16 %v132
  %v361 = vunpack.c.l.b16 %v133
  %v362 = vunpack.c.l.b16 %v134
  %v363 = vunpack.c.l.b16 %v135
  %v364 = vpack.c.b16 %v265, %v264
  %v365 = vpack.c.b16 %v267, %v266
  %v366 = vpack.c.b16 %v269, %v268
  %v367 = vpack.c.b16 %v271, %v270
  %v368 = vpack.c.b16 %v273, %v272
  %v369 = vpack.c.b16 %v275, %v274
  %v370 = vpack.c.b16 %v277, %v276
  %v371 = vpack.c.b16 %v279, %v278
  %v372 = vpack.c.b16 %v281, %v280
  %v373 = vpack.c.b16 %v283, %v282
  %v374 = vpack.c.b16 %v285, %v284
  %v375 = vpack.c.b16 %v287, %v286
  %v376 = vpack.c.b16 %v289, %v288
  %v377 = vpack.c.b16 %v291, %v290
  %v378 = vpack.c.b16 %v293, %v292
  %v379 = vpack.c.b16 %v295, %v294
  %v380 = vpack.c.b16 %v297, %v296
  %v381 = vpack.c.b16 %v299, %v298
  %v382 = vpack.c.b16 %v301, %v300
  %v383 = vpack.c.b16 %v303, %v302
  %v384 = vpack.c.b16 %v305, %v304
  %v385 = vpack.c.b16 %v307, %v306
  %v386 = vpack.c.b16 %v309, %v308
  %v387 = vpack.c.b16 %v311, %v310
  %v388 = vpack.c.b16 %v313, %v312
  %v389 = vpack.c.b16 %v315, %v314
  %v390 = vpack.c.b16 %v317, %v316
  %v391 = vpack.c.b16 %v319, %v318
  %v392 = vpack.c.b16 %v321, %v320
  %v393 = vpack.c.b16 %v323, %v322
  %v394 = vpack.c.b16 %v325, %v324
  %v395 = vpack.c.b16 %v327, %v326
  %v396 = vpack.c.b16 %v329, %v328
  %v397 = vpack.c.b16 %v331, %v330
  %v398 = vpack.c.b16 %v333, %v332
  %v399 = vpack.c.b16 %v335, %v334
  %v400 = vpack.c.b16 %v337, %v336
  %v401 = vpack.c.b16 %v339, %v338
  %v402 = vpack.c.b16 %v341, %v340
  %v403 = vpack.c.b16 %v343, %v342
  %v404 = vpack.c.b16 %v345, %v344
  %v405 = vpack.c.b16 %v347, %v346
  %v406 = vpack.c.b16 %v349, %v348
  %v407 = vpack.c.b16 %v351, %v350
  %v408 = vpack.c.b16 %v353, %v352
  %v409 = vpack.c.b16 %v355, %v354
  %v410 = vpack.c.b16 %v357, %v356
  %v411 = vpack.c.b16 %v359, %v358
  %v412 = vpack.c.b16 %v361, %v360
  %v413 = vpack.c.b16 %v363, %v362
  %vm464 = vcmask 261120
  %v466 = vsel %vm464, %v157, 0
  %468 = vmatprep.subr.bf16.mxu0 0
  %469 = vmatpush1.bf16.msra.mxu0 %v364
  %470 = vmatprep.subr.bf16.mxu0 0
  %471 = vmatpush1.bf16.msra.mxu0 %v365
  %472 = vmatprep.subr.bf16.mxu0 0
  %473 = vmatpush1.bf16.msra.mxu0 %v366
  %474 = vmatprep.subr.bf16.mxu0 0
  %475 = vmatpush1.bf16.msra.mxu0 %v367
  %476 = vmatprep.subr.bf16.mxu0 0
  %477 = vmatpush1.bf16.msra.mxu0 %v368
  %478 = vmatprep.subr.bf16.mxu0 0
  %479 = vmatpush1.bf16.msra.mxu0 %v369
  %480 = vmatprep.subr.bf16.mxu0 0
  %481 = vmatpush1.bf16.msra.mxu0 %v370
  %482 = vmatprep.subr.bf16.mxu0 0
  %483 = vmatpush1.bf16.msra.mxu0 %v371
  %484 = vmatprep.subr.bf16.mxu0 0
  %485 = vmatpush1.bf16.msra.mxu0 %v372
  %486 = vmatprep.subr.bf16.mxu0 0
  %487 = vmatpush1.bf16.msra.mxu0 %v373
  %488 = vmatprep.subr.bf16.mxu0 0
  %489 = vmatpush1.bf16.msra.mxu0 %v374
  %490 = vmatprep.subr.bf16.mxu0 0
  %491 = vmatpush1.bf16.msra.mxu0 %v375
  %492 = vmatprep.subr.bf16.mxu0 0
  %493 = vmatpush1.bf16.msra.mxu0 %v376
  %494 = vmatprep.subr.bf16.mxu0 0
  %495 = vmatpush1.bf16.msra.mxu0 %v377
  %496 = vmatprep.subr.bf16.mxu0 0
  %497 = vmatpush1.bf16.msra.mxu0 %v378
  %498 = vmatprep.subr.bf16.mxu0 0
  %499 = vmatpush1.bf16.msra.mxu0 %v379
  %500 = vmatprep.mubr.bf16.mxu0 %v152
  %501 = vmatmul.mubr.bf16.gmra.mrb[0].mxu0 %v151
  %v502 = vpop.f32.mrb[0].mxu0
  %v503 = vadd.f32 0.0, %v502
  %v504 = vpop.f32.mrb[0].mxu0
  %v505 = vpop.f32.mrb[0].mxu0
  %v506 = vpop.f32.mrb[0].mxu0
  %507 = vdwg.mxu0
  %508 = vmatprep.subr.bf16.mxu0 0
  %509 = vmatpush1.bf16.msra.mxu0 %v380
  %510 = vmatprep.subr.bf16.mxu0 0
  %511 = vmatpush1.bf16.msra.mxu0 %v381
  %512 = vmatprep.subr.bf16.mxu0 0
  %513 = vmatpush1.bf16.msra.mxu0 %v382
  %514 = vmatprep.subr.bf16.mxu0 0
  %515 = vmatpush1.bf16.msra.mxu0 %v383
  %516 = vmatprep.subr.bf16.mxu0 0
  %517 = vmatpush1.bf16.msra.mxu0 %v384
  %518 = vmatprep.subr.bf16.mxu0 0
  %519 = vmatpush1.bf16.msra.mxu0 %v385
  %520 = vmatprep.subr.bf16.mxu0 0
  %521 = vmatpush1.bf16.msra.mxu0 %v386
  %522 = vmatprep.subr.bf16.mxu0 0
  %523 = vmatpush1.bf16.msra.mxu0 %v387
  %524 = vmatprep.subr.bf16.mxu0 0
  %525 = vmatpush1.bf16.msra.mxu0 %v388
  %526 = vmatprep.subr.bf16.mxu0 0
  %527 = vmatpush1.bf16.msra.mxu0 %v389
  %528 = vmatprep.subr.bf16.mxu0 0
  %529 = vmatpush1.bf16.msra.mxu0 %v390
  %530 = vmatprep.subr.bf16.mxu0 0
  %531 = vmatpush1.bf16.msra.mxu0 %v391
  %532 = vmatprep.subr.bf16.mxu0 0
  %533 = vmatpush1.bf16.msra.mxu0 %v392
  %534 = vmatprep.subr.bf16.mxu0 0
  %535 = vmatpush1.bf16.msra.mxu0 %v393
  %536 = vmatprep.subr.bf16.mxu0 0
  %537 = vmatpush1.bf16.msra.mxu0 %v394
  %538 = vmatprep.subr.bf16.mxu0 0
  %539 = vmatpush1.bf16.msra.mxu0 %v395
  %540 = vmatprep.mubr.bf16.mxu0 %v154
  %541 = vmatmul.mubr.bf16.gmra.mrb[0].mxu0 %v153
  %v542 = vpop.f32.mrb[0].mxu0
  %v543 = vadd.f32 %v503, %v542
  %v544 = vpop.f32.mrb[0].mxu0
  %v545 = vpop.f32.mrb[0].mxu0
  %v546 = vpop.f32.mrb[0].mxu0
  %547 = vdwg.mxu0
  %548 = vmatprep.subr.bf16.mxu0 0
  %549 = vmatpush1.bf16.msra.mxu0 %v396
  %550 = vmatprep.subr.bf16.mxu0 0
  %551 = vmatpush1.bf16.msra.mxu0 %v397
  %552 = vmatprep.subr.bf16.mxu0 0
  %553 = vmatpush1.bf16.msra.mxu0 %v398
  %554 = vmatprep.subr.bf16.mxu0 0
  %555 = vmatpush1.bf16.msra.mxu0 %v399
  %556 = vmatprep.subr.bf16.mxu0 0
  %557 = vmatpush1.bf16.msra.mxu0 %v400
  %558 = vmatprep.subr.bf16.mxu0 0
  %559 = vmatpush1.bf16.msra.mxu0 %v401
  %560 = vmatprep.subr.bf16.mxu0 0
  %561 = vmatpush1.bf16.msra.mxu0 %v402
  %562 = vmatprep.subr.bf16.mxu0 0
  %563 = vmatpush1.bf16.msra.mxu0 %v403
  %564 = vmatprep.subr.bf16.mxu0 0
  %565 = vmatpush1.bf16.msra.mxu0 %v404
  %566 = vmatprep.subr.bf16.mxu0 0
  %567 = vmatpush1.bf16.msra.mxu0 %v405
  %568 = vmatprep.subr.bf16.mxu0 0
  %569 = vmatpush1.bf16.msra.mxu0 %v406
  %570 = vmatprep.subr.bf16.mxu0 0
  %571 = vmatpush1.bf16.msra.mxu0 %v407
  %572 = vmatprep.subr.bf16.mxu0 0
  %573 = vmatpush1.bf16.msra.mxu0 %v408
  %574 = vmatprep.subr.bf16.mxu0 0
  %575 = vmatpush1.bf16.msra.mxu0 %v409
  %576 = vmatprep.subr.bf16.mxu0 0
  %577 = vmatpush1.bf16.msra.mxu0 %v410
  %578 = vmatprep.subr.bf16.mxu0 0
  %579 = vmatpush1.bf16.msra.mxu0 %v411
  %580 = vmatprep.mubr.bf16.mxu0 %v156
  %581 = vmatmul.mubr.bf16.gmra.mrb[0].mxu0 %v155
  %v582 = vpop.f32.mrb[0].mxu0
  %v583 = vadd.f32 %v543, %v582
  %v584 = vpop.f32.mrb[0].mxu0
  %v585 = vpop.f32.mrb[0].mxu0
  %v586 = vpop.f32.mrb[0].mxu0
  %587 = vdwg.mxu0
  %588 = vmatprep.subr.bf16.mxu0 0
  %589 = vmatpush1.bf16.msra.mxu0 %v412
  %590 = vmatprep.subr.bf16.mxu0 0
  %591 = vmatpush1.bf16.msra.mxu0 %v413
  %592 = vmatprep.subr.bf16.mxu0 0
  %593 = vmatpush1.bf16.msra.mxu0 0
  %594 = vmatprep.subr.bf16.mxu0 0
  %595 = vmatpush1.bf16.msra.mxu0 0
  %596 = vmatprep.subr.bf16.mxu0 0
  %597 = vmatpush1.bf16.msra.mxu0 0
  %598 = vmatprep.subr.bf16.mxu0 0
  %599 = vmatpush1.bf16.msra.mxu0 0
  %600 = vmatprep.subr.bf16.mxu0 0
  %601 = vmatpush1.bf16.msra.mxu0 0
  %602 = vmatprep.subr.bf16.mxu0 0
  %603 = vmatpush1.bf16.msra.mxu0 0
  %604 = vmatprep.subr.bf16.mxu0 0
  %605 = vmatpush1.bf16.msra.mxu0 0
  %606 = vmatprep.subr.bf16.mxu0 0
  %607 = vmatpush1.bf16.msra.mxu0 0
  %608 = vmatprep.subr.bf16.mxu0 0
  %609 = vmatpush1.bf16.msra.mxu0 0
  %610 = vmatprep.subr.bf16.mxu0 0
  %611 = vmatpush1.bf16.msra.mxu0 0
  %612 = vmatprep.subr.bf16.mxu0 0
  %613 = vmatpush1.bf16.msra.mxu0 0
  %614 = vmatprep.subr.bf16.mxu0 0
  %615 = vmatpush1.bf16.msra.mxu0 0
  %616 = vmatprep.subr.bf16.mxu0 0
  %617 = vmatpush1.bf16.msra.mxu0 0
  %618 = vmatprep.subr.bf16.mxu0 0
  %619 = vmatpush1.bf16.msra.mxu0 0
  %620 = vmatprep.mubr.bf16.mxu0 0
  %621 = vmatmul.mubr.bf16.gmra.mrb[0].mxu0 %v466
  %v622 = vpop.f32.mrb[0].mxu0
  %v623 = vadd.f32 %v583, %v622
  %v624 = vpop.f32.mrb[0].mxu0
  %v625 = vpop.f32.mrb[0].mxu0
  %v626 = vpop.f32.mrb[0].mxu0
  %627 = vdwg.mxu0
  %v628 = vld [vmem:[%s1] sm:$0xff]
  %v629 = vld [vmem:[%s1 + $0x8] sm:$0xff]
  %v630 = vld [vmem:[%s1 + $0x10] sm:$0xff]
  %v631 = vld [vmem:[%s1 + $0x18] sm:$0xf]
  %v636 = vunpack.c.l.b16 %v628
  %v637 = vunpack.c.h.b16 %v628
  %v638 = vunpack.c.l.b16 %v629
  %v639 = vunpack.c.h.b16 %v629
  %v640 = vunpack.c.l.b16 %v630
  %v641 = vunpack.c.h.b16 %v630
  %v642 = vunpack.c.l.b16 %v631
  %v643 = vpack.c.b16 %v636, %v636
  %v644 = vpack.c.b16 %v637, %v637
  %v645 = vpack.c.b16 %v638, %v638
  %v646 = vpack.c.b16 %v639, %v639
  %v647 = vpack.c.b16 %v640, %v640
  %v648 = vpack.c.b16 %v641, %v641
  %v649 = vpack.c.b16 %v642, %v642
  %v657 = vsel %vm464, %v649, 0
  %659 = vmatprep.subr.bf16.mxu0 0
  %660 = vmatpush1.bf16.msra.mxu0 %v364
  %661 = vmatprep.subr.bf16.mxu0 0
  %662 = vmatpush1.bf16.msra.mxu0 %v365
  %663 = vmatprep.subr.bf16.mxu0 0
  %664 = vmatpush1.bf16.msra.mxu0 %v366
  %665 = vmatprep.subr.bf16.mxu0 0
  %666 = vmatpush1.bf16.msra.mxu0 %v367
  %667 = vmatprep.subr.bf16.mxu0 0
  %668 = vmatpush1.bf16.msra.mxu0 %v368
  %669 = vmatprep.subr.bf16.mxu0 0
  %670 = vmatpush1.bf16.msra.mxu0 %v369
  %671 = vmatprep.subr.bf16.mxu0 0
  %672 = vmatpush1.bf16.msra.mxu0 %v370
  %673 = vmatprep.subr.bf16.mxu0 0
  %674 = vmatpush1.bf16.msra.mxu0 %v371
  %675 = vmatprep.subr.bf16.mxu0 0
  %676 = vmatpush1.bf16.msra.mxu0 %v372
  %677 = vmatprep.subr.bf16.mxu0 0
  %678 = vmatpush1.bf16.msra.mxu0 %v373
  %679 = vmatprep.subr.bf16.mxu0 0
  %680 = vmatpush1.bf16.msra.mxu0 %v374
  %681 = vmatprep.subr.bf16.mxu0 0
  %682 = vmatpush1.bf16.msra.mxu0 %v375
  %683 = vmatprep.subr.bf16.mxu0 0
  %684 = vmatpush1.bf16.msra.mxu0 %v376
  %685 = vmatprep.subr.bf16.mxu0 0
  %686 = vmatpush1.bf16.msra.mxu0 %v377
  %687 = vmatprep.subr.bf16.mxu0 0
  %688 = vmatpush1.bf16.msra.mxu0 %v378
  %689 = vmatprep.subr.bf16.mxu0 0
  %690 = vmatpush1.bf16.msra.mxu0 %v379
  %691 = vmatprep.mubr.bf16.mxu0 %v644
  %692 = vmatmul.mubr.bf16.gmra.mrb[0].mxu0 %v643
  %v693 = vpop.f32.mrb[0].mxu0
  %v694 = vadd.f32 0.0, %v693
  %v695 = vpop.f32.mrb[0].mxu0
  %v696 = vpop.f32.mrb[0].mxu0
  %v697 = vpop.f32.mrb[0].mxu0
  %698 = vdwg.mxu0
  %699 = vmatprep.subr.bf16.mxu0 0
  %700 = vmatpush1.bf16.msra.mxu0 %v380
  %701 = vmatprep.subr.bf16.mxu0 0
  %702 = vmatpush1.bf16.msra.mxu0 %v381
  %703 = vmatprep.subr.bf16.mxu0 0
  %704 = vmatpush1.bf16.msra.mxu0 %v382
  %705 = vmatprep.subr.bf16.mxu0 0
  %706 = vmatpush1.bf16.msra.mxu0 %v383
  %707 = vmatprep.subr.bf16.mxu0 0
  %708 = vmatpush1.bf16.msra.mxu0 %v384
  %709 = vmatprep.subr.bf16.mxu0 0
  %710 = vmatpush1.bf16.msra.mxu0 %v385
  %711 = vmatprep.subr.bf16.mxu0 0
  %712 = vmatpush1.bf16.msra.mxu0 %v386
  %713 = vmatprep.subr.bf16.mxu0 0
  %714 = vmatpush1.bf16.msra.mxu0 %v387
  %715 = vmatprep.subr.bf16.mxu0 0
  %716 = vmatpush1.bf16.msra.mxu0 %v388
  %717 = vmatprep.subr.bf16.mxu0 0
  %718 = vmatpush1.bf16.msra.mxu0 %v389
  %719 = vmatprep.subr.bf16.mxu0 0
  %720 = vmatpush1.bf16.msra.mxu0 %v390
  %721 = vmatprep.subr.bf16.mxu0 0
  %722 = vmatpush1.bf16.msra.mxu0 %v391
  %723 = vmatprep.subr.bf16.mxu0 0
  %724 = vmatpush1.bf16.msra.mxu0 %v392
  %725 = vmatprep.subr.bf16.mxu0 0
  %726 = vmatpush1.bf16.msra.mxu0 %v393
  %727 = vmatprep.subr.bf16.mxu0 0
  %728 = vmatpush1.bf16.msra.mxu0 %v394
  %729 = vmatprep.subr.bf16.mxu0 0
  %730 = vmatpush1.bf16.msra.mxu0 %v395
  %731 = vmatprep.mubr.bf16.mxu0 %v646
  %732 = vmatmul.mubr.bf16.gmra.mrb[0].mxu0 %v645
  %v733 = vpop.f32.mrb[0].mxu0
  %v734 = vadd.f32 %v694, %v733
  %v735 = vpop.f32.mrb[0].mxu0
  %v736 = vpop.f32.mrb[0].mxu0
  %v737 = vpop.f32.mrb[0].mxu0
  %738 = vdwg.mxu0
  %739 = vmatprep.subr.bf16.mxu0 0
  %740 = vmatpush1.bf16.msra.mxu0 %v396
  %741 = vmatprep.subr.bf16.mxu0 0
  %742 = vmatpush1.bf16.msra.mxu0 %v397
  %743 = vmatprep.subr.bf16.mxu0 0
  %744 = vmatpush1.bf16.msra.mxu0 %v398
  %745 = vmatprep.subr.bf16.mxu0 0
  %746 = vmatpush1.bf16.msra.mxu0 %v399
  %747 = vmatprep.subr.bf16.mxu0 0
  %748 = vmatpush1.bf16.msra.mxu0 %v400
  %749 = vmatprep.subr.bf16.mxu0 0
  %750 = vmatpush1.bf16.msra.mxu0 %v401
  %751 = vmatprep.subr.bf16.mxu0 0
  %752 = vmatpush1.bf16.msra.mxu0 %v402
  %753 = vmatprep.subr.bf16.mxu0 0
  %754 = vmatpush1.bf16.msra.mxu0 %v403
  %755 = vmatprep.subr.bf16.mxu0 0
  %756 = vmatpush1.bf16.msra.mxu0 %v404
  %757 = vmatprep.subr.bf16.mxu0 0
  %758 = vmatpush1.bf16.msra.mxu0 %v405
  %759 = vmatprep.subr.bf16.mxu0 0
  %760 = vmatpush1.bf16.msra.mxu0 %v406
  %761 = vmatprep.subr.bf16.mxu0 0
  %762 = vmatpush1.bf16.msra.mxu0 %v407
  %763 = vmatprep.subr.bf16.mxu0 0
  %764 = vmatpush1.bf16.msra.mxu0 %v408
  %765 = vmatprep.subr.bf16.mxu0 0
  %766 = vmatpush1.bf16.msra.mxu0 %v409
  %767 = vmatprep.subr.bf16.mxu0 0
  %768 = vmatpush1.bf16.msra.mxu0 %v410
  %769 = vmatprep.subr.bf16.mxu0 0
  %770 = vmatpush1.bf16.msra.mxu0 %v411
  %771 = vmatprep.mubr.bf16.mxu0 %v648
  %772 = vmatmul.mubr.bf16.gmra.mrb[0].mxu0 %v647
  %v773 = vpop.f32.mrb[0].mxu0
  %v774 = vadd.f32 %v734, %v773
  %v775 = vpop.f32.mrb[0].mxu0
  %v776 = vpop.f32.mrb[0].mxu0
  %v777 = vpop.f32.mrb[0].mxu0
  %778 = vdwg.mxu0
  %779 = vmatprep.subr.bf16.mxu0 0
  %780 = vmatpush1.bf16.msra.mxu0 %v412
  %781 = vmatprep.subr.bf16.mxu0 0
  %782 = vmatpush1.bf16.msra.mxu0 %v413
  %783 = vmatprep.subr.bf16.mxu0 0
  %784 = vmatpush1.bf16.msra.mxu0 0
  %785 = vmatprep.subr.bf16.mxu0 0
  %786 = vmatpush1.bf16.msra.mxu0 0
  %787 = vmatprep.subr.bf16.mxu0 0
  %788 = vmatpush1.bf16.msra.mxu0 0
  %789 = vmatprep.subr.bf16.mxu0 0
  %790 = vmatpush1.bf16.msra.mxu0 0
  %791 = vmatprep.subr.bf16.mxu0 0
  %792 = vmatpush1.bf16.msra.mxu0 0
  %793 = vmatprep.subr.bf16.mxu0 0
  %794 = vmatpush1.bf16.msra.mxu0 0
  %795 = vmatprep.subr.bf16.mxu0 0
  %796 = vmatpush1.bf16.msra.mxu0 0
  %797 = vmatprep.subr.bf16.mxu0 0
  %798 = vmatpush1.bf16.msra.mxu0 0
  %799 = vmatprep.subr.bf16.mxu0 0
  %800 = vmatpush1.bf16.msra.mxu0 0
  %801 = vmatprep.subr.bf16.mxu0 0
  %802 = vmatpush1.bf16.msra.mxu0 0
  %803 = vmatprep.subr.bf16.mxu0 0
  %804 = vmatpush1.bf16.msra.mxu0 0
  %805 = vmatprep.subr.bf16.mxu0 0
  %806 = vmatpush1.bf16.msra.mxu0 0
  %807 = vmatprep.subr.bf16.mxu0 0
  %808 = vmatpush1.bf16.msra.mxu0 0
  %809 = vmatprep.subr.bf16.mxu0 0
  %810 = vmatpush1.bf16.msra.mxu0 0
  %811 = vmatprep.mubr.bf16.mxu0 0
  %812 = vmatmul.mubr.bf16.gmra.mrb[0].mxu0 %v657
  %v813 = vpop.f32.mrb[0].mxu0
  %v814 = vadd.f32 %v774, %v813
  %v815 = vpop.f32.mrb[0].mxu0
  %v816 = vpop.f32.mrb[0].mxu0
  %v817 = vpop.f32.mrb[0].mxu0
  %818 = vdwg.mxu0
  %v819 = vmax.f32 %v623, %v814
  %v820 = vld [vmem:[%s2] sm:$0xff]
  %v821 = vld [vmem:[%s2 + $0x8] sm:$0xff]
  %v822 = vld [vmem:[%s2 + $0x10] sm:$0xff]
  %v823 = vld [vmem:[%s2 + $0x18] sm:$0xf]
  %v828 = vunpack.c.l.b16 %v820
  %v829 = vunpack.c.h.b16 %v820
  %v830 = vunpack.c.l.b16 %v821
  %v831 = vunpack.c.h.b16 %v821
  %v832 = vunpack.c.l.b16 %v822
  %v833 = vunpack.c.h.b16 %v822
  %v834 = vunpack.c.l.b16 %v823
  %v835 = vpack.c.b16 %v828, %v828
  %v836 = vpack.c.b16 %v829, %v829
  %v837 = vpack.c.b16 %v830, %v830
  %v838 = vpack.c.b16 %v831, %v831
  %v839 = vpack.c.b16 %v832, %v832
  %v840 = vpack.c.b16 %v833, %v833
  %v841 = vpack.c.b16 %v834, %v834
  %v849 = vsel %vm464, %v841, 0
  %851 = vmatprep.subr.bf16.mxu0 0
  %852 = vmatpush1.bf16.msra.mxu0 %v364
  %853 = vmatprep.subr.bf16.mxu0 0
  %854 = vmatpush1.bf16.msra.mxu0 %v365
  %855 = vmatprep.subr.bf16.mxu0 0
  %856 = vmatpush1.bf16.msra.mxu0 %v366
  %857 = vmatprep.subr.bf16.mxu0 0
  %858 = vmatpush1.bf16.msra.mxu0 %v367
  %859 = vmatprep.subr.bf16.mxu0 0
  %860 = vmatpush1.bf16.msra.mxu0 %v368
  %861 = vmatprep.subr.bf16.mxu0 0
  %862 = vmatpush1.bf16.msra.mxu0 %v369
  %863 = vmatprep.subr.bf16.mxu0 0
  %864 = vmatpush1.bf16.msra.mxu0 %v370
  %865 = vmatprep.subr.bf16.mxu0 0
  %866 = vmatpush1.bf16.msra.mxu0 %v371
  %867 = vmatprep.subr.bf16.mxu0 0
  %868 = vmatpush1.bf16.msra.mxu0 %v372
  %869 = vmatprep.subr.bf16.mxu0 0
  %870 = vmatpush1.bf16.msra.mxu0 %v373
  %871 = vmatprep.subr.bf16.mxu0 0
  %872 = vmatpush1.bf16.msra.mxu0 %v374
  %873 = vmatprep.subr.bf16.mxu0 0
  %874 = vmatpush1.bf16.msra.mxu0 %v375
  %875 = vmatprep.subr.bf16.mxu0 0
  %876 = vmatpush1.bf16.msra.mxu0 %v376
  %877 = vmatprep.subr.bf16.mxu0 0
  %878 = vmatpush1.bf16.msra.mxu0 %v377
  %879 = vmatprep.subr.bf16.mxu0 0
  %880 = vmatpush1.bf16.msra.mxu0 %v378
  %881 = vmatprep.subr.bf16.mxu0 0
  %882 = vmatpush1.bf16.msra.mxu0 %v379
  %883 = vmatprep.mubr.bf16.mxu0 %v836
  %884 = vmatmul.mubr.bf16.gmra.mrb[0].mxu0 %v835
  %v885 = vpop.f32.mrb[0].mxu0
  %v886 = vadd.f32 0.0, %v885
  %v887 = vpop.f32.mrb[0].mxu0
  %v888 = vpop.f32.mrb[0].mxu0
  %v889 = vpop.f32.mrb[0].mxu0
  %890 = vdwg.mxu0
  %891 = vmatprep.subr.bf16.mxu0 0
  %892 = vmatpush1.bf16.msra.mxu0 %v380
  %893 = vmatprep.subr.bf16.mxu0 0
  %894 = vmatpush1.bf16.msra.mxu0 %v381
  %895 = vmatprep.subr.bf16.mxu0 0
  %896 = vmatpush1.bf16.msra.mxu0 %v382
  %897 = vmatprep.subr.bf16.mxu0 0
  %898 = vmatpush1.bf16.msra.mxu0 %v383
  %899 = vmatprep.subr.bf16.mxu0 0
  %900 = vmatpush1.bf16.msra.mxu0 %v384
  %901 = vmatprep.subr.bf16.mxu0 0
  %902 = vmatpush1.bf16.msra.mxu0 %v385
  %903 = vmatprep.subr.bf16.mxu0 0
  %904 = vmatpush1.bf16.msra.mxu0 %v386
  %905 = vmatprep.subr.bf16.mxu0 0
  %906 = vmatpush1.bf16.msra.mxu0 %v387
  %907 = vmatprep.subr.bf16.mxu0 0
  %908 = vmatpush1.bf16.msra.mxu0 %v388
  %909 = vmatprep.subr.bf16.mxu0 0
  %910 = vmatpush1.bf16.msra.mxu0 %v389
  %911 = vmatprep.subr.bf16.mxu0 0
  %912 = vmatpush1.bf16.msra.mxu0 %v390
  %913 = vmatprep.subr.bf16.mxu0 0
  %914 = vmatpush1.bf16.msra.mxu0 %v391
  %915 = vmatprep.subr.bf16.mxu0 0
  %916 = vmatpush1.bf16.msra.mxu0 %v392
  %917 = vmatprep.subr.bf16.mxu0 0
  %918 = vmatpush1.bf16.msra.mxu0 %v393
  %919 = vmatprep.subr.bf16.mxu0 0
  %920 = vmatpush1.bf16.msra.mxu0 %v394
  %921 = vmatprep.subr.bf16.mxu0 0
  %922 = vmatpush1.bf16.msra.mxu0 %v395
  %923 = vmatprep.mubr.bf16.mxu0 %v838
  %924 = vmatmul.mubr.bf16.gmra.mrb[0].mxu0 %v837
  %v925 = vpop.f32.mrb[0].mxu0
  %v926 = vadd.f32 %v886, %v925
  %v927 = vpop.f32.mrb[0].mxu0
  %v928 = vpop.f32.mrb[0].mxu0
  %v929 = vpop.f32.mrb[0].mxu0
  %930 = vdwg.mxu0
  %931 = vmatprep.subr.bf16.mxu0 0
  %932 = vmatpush1.bf16.msra.mxu0 %v396
  %933 = vmatprep.subr.bf16.mxu0 0
  %934 = vmatpush1.bf16.msra.mxu0 %v397
  %935 = vmatprep.subr.bf16.mxu0 0
  %936 = vmatpush1.bf16.msra.mxu0 %v398
  %937 = vmatprep.subr.bf16.mxu0 0
  %938 = vmatpush1.bf16.msra.mxu0 %v399
  %939 = vmatprep.subr.bf16.mxu0 0
  %940 = vmatpush1.bf16.msra.mxu0 %v400
  %941 = vmatprep.subr.bf16.mxu0 0
  %942 = vmatpush1.bf16.msra.mxu0 %v401
  %943 = vmatprep.subr.bf16.mxu0 0
  %944 = vmatpush1.bf16.msra.mxu0 %v402
  %945 = vmatprep.subr.bf16.mxu0 0
  %946 = vmatpush1.bf16.msra.mxu0 %v403
  %947 = vmatprep.subr.bf16.mxu0 0
  %948 = vmatpush1.bf16.msra.mxu0 %v404
  %949 = vmatprep.subr.bf16.mxu0 0
  %950 = vmatpush1.bf16.msra.mxu0 %v405
  %951 = vmatprep.subr.bf16.mxu0 0
  %952 = vmatpush1.bf16.msra.mxu0 %v406
  %953 = vmatprep.subr.bf16.mxu0 0
  %954 = vmatpush1.bf16.msra.mxu0 %v407
  %955 = vmatprep.subr.bf16.mxu0 0
  %956 = vmatpush1.bf16.msra.mxu0 %v408
  %957 = vmatprep.subr.bf16.mxu0 0
  %958 = vmatpush1.bf16.msra.mxu0 %v409
  %959 = vmatprep.subr.bf16.mxu0 0
  %960 = vmatpush1.bf16.msra.mxu0 %v410
  %961 = vmatprep.subr.bf16.mxu0 0
  %962 = vmatpush1.bf16.msra.mxu0 %v411
  %963 = vmatprep.mubr.bf16.mxu0 %v840
  %964 = vmatmul.mubr.bf16.gmra.mrb[0].mxu0 %v839
  %v965 = vpop.f32.mrb[0].mxu0
  %v966 = vadd.f32 %v926, %v965
  %v967 = vpop.f32.mrb[0].mxu0
  %v968 = vpop.f32.mrb[0].mxu0
  %v969 = vpop.f32.mrb[0].mxu0
  %970 = vdwg.mxu0
  %971 = vmatprep.subr.bf16.mxu0 0
  %972 = vmatpush1.bf16.msra.mxu0 %v412
  %973 = vmatprep.subr.bf16.mxu0 0
  %974 = vmatpush1.bf16.msra.mxu0 %v413
  %975 = vmatprep.subr.bf16.mxu0 0
  %976 = vmatpush1.bf16.msra.mxu0 0
  %977 = vmatprep.subr.bf16.mxu0 0
  %978 = vmatpush1.bf16.msra.mxu0 0
  %979 = vmatprep.subr.bf16.mxu0 0
  %980 = vmatpush1.bf16.msra.mxu0 0
  %981 = vmatprep.subr.bf16.mxu0 0
  %982 = vmatpush1.bf16.msra.mxu0 0
  %983 = vmatprep.subr.bf16.mxu0 0
  %984 = vmatpush1.bf16.msra.mxu0 0
  %985 = vmatprep.subr.bf16.mxu0 0
  %986 = vmatpush1.bf16.msra.mxu0 0
  %987 = vmatprep.subr.bf16.mxu0 0
  %988 = vmatpush1.bf16.msra.mxu0 0
  %989 = vmatprep.subr.bf16.mxu0 0
  %990 = vmatpush1.bf16.msra.mxu0 0
  %991 = vmatprep.subr.bf16.mxu0 0
  %992 = vmatpush1.bf16.msra.mxu0 0
  %993 = vmatprep.subr.bf16.mxu0 0
  %994 = vmatpush1.bf16.msra.mxu0 0
  %995 = vmatprep.subr.bf16.mxu0 0
  %996 = vmatpush1.bf16.msra.mxu0 0
  %997 = vmatprep.subr.bf16.mxu0 0
  %998 = vmatpush1.bf16.msra.mxu0 0
  %999 = vmatprep.subr.bf16.mxu0 0
  %1000 = vmatpush1.bf16.msra.mxu0 0
  %1001 = vmatprep.subr.bf16.mxu0 0
  %1002 = vmatpush1.bf16.msra.mxu0 0
  %1003 = vmatprep.mubr.bf16.mxu0 0
  %1004 = vmatmul.mubr.bf16.gmra.mrb[0].mxu0 %v849
  %v1005 = vpop.f32.mrb[0].mxu0
  %v1006 = vadd.f32 %v966, %v1005
  %v1007 = vpop.f32.mrb[0].mxu0
  %v1008 = vpop.f32.mrb[0].mxu0
  %v1009 = vpop.f32.mrb[0].mxu0
  %1010 = vdwg.mxu0
  %v1011 = vmax.f32 %v819, %v1006
  %v1012 = vld [vmem:[%s3] sm:$0xff]
  %v1013 = vld [vmem:[%s3 + $0x8] sm:$0xff]
  %v1014 = vld [vmem:[%s3 + $0x10] sm:$0xff]
  %v1015 = vld [vmem:[%s3 + $0x18] sm:$0xf]
  %v1020 = vunpack.c.l.b16 %v1012
  %v1021 = vunpack.c.h.b16 %v1012
  %v1022 = vunpack.c.l.b16 %v1013
  %v1023 = vunpack.c.h.b16 %v1013
  %v1024 = vunpack.c.l.b16 %v1014
  %v1025 = vunpack.c.h.b16 %v1014
  %v1026 = vunpack.c.l.b16 %v1015
  %v1027 = vpack.c.b16 %v1020, %v1020
  %v1028 = vpack.c.b16 %v1021, %v1021
  %v1029 = vpack.c.b16 %v1022, %v1022
  %v1030 = vpack.c.b16 %v1023, %v1023
  %v1031 = vpack.c.b16 %v1024, %v1024
  %v1032 = vpack.c.b16 %v1025, %v1025
  %v1033 = vpack.c.b16 %v1026, %v1026
  %v1041 = vsel %vm464, %v1033, 0
  %1043 = vmatprep.subr.bf16.mxu0 0
  %1044 = vmatpush1.bf16.msra.mxu0 %v364
  %1045 = vmatprep.subr.bf16.mxu0 0
  %1046 = vmatpush1.bf16.msra.mxu0 %v365
  %1047 = vmatprep.subr.bf16.mxu0 0
  %1048 = vmatpush1.bf16.msra.mxu0 %v366
  %1049 = vmatprep.subr.bf16.mxu0 0
  %1050 = vmatpush1.bf16.msra.mxu0 %v367
  %1051 = vmatprep.subr.bf16.mxu0 0
  %1052 = vmatpush1.bf16.msra.mxu0 %v368
  %1053 = vmatprep.subr.bf16.mxu0 0
  %1054 = vmatpush1.bf16.msra.mxu0 %v369
  %1055 = vmatprep.subr.bf16.mxu0 0
  %1056 = vmatpush1.bf16.msra.mxu0 %v370
  %1057 = vmatprep.subr.bf16.mxu0 0
  %1058 = vmatpush1.bf16.msra.mxu0 %v371
  %1059 = vmatprep.subr.bf16.mxu0 0
  %1060 = vmatpush1.bf16.msra.mxu0 %v372
  %1061 = vmatprep.subr.bf16.mxu0 0
  %1062 = vmatpush1.bf16.msra.mxu0 %v373
  %1063 = vmatprep.subr.bf16.mxu0 0
  %1064 = vmatpush1.bf16.msra.mxu0 %v374
  %1065 = vmatprep.subr.bf16.mxu0 0
  %1066 = vmatpush1.bf16.msra.mxu0 %v375
  %1067 = vmatprep.subr.bf16.mxu0 0
  %1068 = vmatpush1.bf16.msra.mxu0 %v376
  %1069 = vmatprep.subr.bf16.mxu0 0
  %1070 = vmatpush1.bf16.msra.mxu0 %v377
  %1071 = vmatprep.subr.bf16.mxu0 0
  %1072 = vmatpush1.bf16.msra.mxu0 %v378
  %1073 = vmatprep.subr.bf16.mxu0 0
  %1074 = vmatpush1.bf16.msra.mxu0 %v379
  %1075 = vmatprep.mubr.bf16.mxu0 %v1028
  %1076 = vmatmul.mubr.bf16.gmra.mrb[0].mxu0 %v1027
  %v1077 = vpop.f32.mrb[0].mxu0
  %v1078 = vadd.f32 0.0, %v1077
  %v1079 = vpop.f32.mrb[0].mxu0
  %v1080 = vpop.f32.mrb[0].mxu0
  %v1081 = vpop.f32.mrb[0].mxu0
  %1082 = vdwg.mxu0
  %1083 = vmatprep.subr.bf16.mxu0 0
  %1084 = vmatpush1.bf16.msra.mxu0 %v380
  %1085 = vmatprep.subr.bf16.mxu0 0
  %1086 = vmatpush1.bf16.msra.mxu0 %v381
  %1087 = vmatprep.subr.bf16.mxu0 0
  %1088 = vmatpush1.bf16.msra.mxu0 %v382
  %1089 = vmatprep.subr.bf16.mxu0 0
  %1090 = vmatpush1.bf16.msra.mxu0 %v383
  %1091 = vmatprep.subr.bf16.mxu0 0
  %1092 = vmatpush1.bf16.msra.mxu0 %v384
  %1093 = vmatprep.subr.bf16.mxu0 0
  %1094 = vmatpush1.bf16.msra.mxu0 %v385
  %1095 = vmatprep.subr.bf16.mxu0 0
  %1096 = vmatpush1.bf16.msra.mxu0 %v386
  %1097 = vmatprep.subr.bf16.mxu0 0
  %1098 = vmatpush1.bf16.msra.mxu0 %v387
  %1099 = vmatprep.subr.bf16.mxu0 0
  %1100 = vmatpush1.bf16.msra.mxu0 %v388
  %1101 = vmatprep.subr.bf16.mxu0 0
  %1102 = vmatpush1.bf16.msra.mxu0 %v389
  %1103 = vmatprep.subr.bf16.mxu0 0
  %1104 = vmatpush1.bf16.msra.mxu0 %v390
  %1105 = vmatprep.subr.bf16.mxu0 0
  %1106 = vmatpush1.bf16.msra.mxu0 %v391
  %1107 = vmatprep.subr.bf16.mxu0 0
  %1108 = vmatpush1.bf16.msra.mxu0 %v392
  %1109 = vmatprep.subr.bf16.mxu0 0
  %1110 = vmatpush1.bf16.msra.mxu0 %v393
  %1111 = vmatprep.subr.bf16.mxu0 0
  %1112 = vmatpush1.bf16.msra.mxu0 %v394
  %1113 = vmatprep.subr.bf16.mxu0 0
  %1114 = vmatpush1.bf16.msra.mxu0 %v395
  %1115 = vmatprep.mubr.bf16.mxu0 %v1030
  %1116 = vmatmul.mubr.bf16.gmra.mrb[0].mxu0 %v1029
  %v1117 = vpop.f32.mrb[0].mxu0
  %v1118 = vadd.f32 %v1078, %v1117
  %v1119 = vpop.f32.mrb[0].mxu0
  %v1120 = vpop.f32.mrb[0].mxu0
  %v1121 = vpop.f32.mrb[0].mxu0
  %1122 = vdwg.mxu0
  %1123 = vmatprep.subr.bf16.mxu0 0
  %1124 = vmatpush1.bf16.msra.mxu0 %v396
  %1125 = vmatprep.subr.bf16.mxu0 0
  %1126 = vmatpush1.bf16.msra.mxu0 %v397
  %1127 = vmatprep.subr.bf16.mxu0 0
  %1128 = vmatpush1.bf16.msra.mxu0 %v398
  %1129 = vmatprep.subr.bf16.mxu0 0
  %1130 = vmatpush1.bf16.msra.mxu0 %v399
  %1131 = vmatprep.subr.bf16.mxu0 0
  %1132 = vmatpush1.bf16.msra.mxu0 %v400
  %1133 = vmatprep.subr.bf16.mxu0 0
  %1134 = vmatpush1.bf16.msra.mxu0 %v401
  %1135 = vmatprep.subr.bf16.mxu0 0
  %1136 = vmatpush1.bf16.msra.mxu0 %v402
  %1137 = vmatprep.subr.bf16.mxu0 0
  %1138 = vmatpush1.bf16.msra.mxu0 %v403
  %1139 = vmatprep.subr.bf16.mxu0 0
  %1140 = vmatpush1.bf16.msra.mxu0 %v404
  %1141 = vmatprep.subr.bf16.mxu0 0
  %1142 = vmatpush1.bf16.msra.mxu0 %v405
  %1143 = vmatprep.subr.bf16.mxu0 0
  %1144 = vmatpush1.bf16.msra.mxu0 %v406
  %1145 = vmatprep.subr.bf16.mxu0 0
  %1146 = vmatpush1.bf16.msra.mxu0 %v407
  %1147 = vmatprep.subr.bf16.mxu0 0
  %1148 = vmatpush1.bf16.msra.mxu0 %v408
  %1149 = vmatprep.subr.bf16.mxu0 0
  %1150 = vmatpush1.bf16.msra.mxu0 %v409
  %1151 = vmatprep.subr.bf16.mxu0 0
  %1152 = vmatpush1.bf16.msra.mxu0 %v410
  %1153 = vmatprep.subr.bf16.mxu0 0
  %1154 = vmatpush1.bf16.msra.mxu0 %v411
  %1155 = vmatprep.mubr.bf16.mxu0 %v1032
  %1156 = vmatmul.mubr.bf16.gmra.mrb[0].mxu0 %v1031
  %v1157 = vpop.f32.mrb[0].mxu0
  %v1158 = vadd.f32 %v1118, %v1157
  %v1159 = vpop.f32.mrb[0].mxu0
  %v1160 = vpop.f32.mrb[0].mxu0
  %v1161 = vpop.f32.mrb[0].mxu0
  %1162 = vdwg.mxu0
  %1163 = vmatprep.subr.bf16.mxu0 0
  %1164 = vmatpush1.bf16.msra.mxu0 %v412
  %1165 = vmatprep.subr.bf16.mxu0 0
  %1166 = vmatpush1.bf16.msra.mxu0 %v413
  %1167 = vmatprep.subr.bf16.mxu0 0
  %1168 = vmatpush1.bf16.msra.mxu0 0
  %1169 = vmatprep.subr.bf16.mxu0 0
  %1170 = vmatpush1.bf16.msra.mxu0 0
  %1171 = vmatprep.subr.bf16.mxu0 0
  %1172 = vmatpush1.bf16.msra.mxu0 0
  %1173 = vmatprep.subr.bf16.mxu0 0
  %1174 = vmatpush1.bf16.msra.mxu0 0
  %1175 = vmatprep.subr.bf16.mxu0 0
  %1176 = vmatpush1.bf16.msra.mxu0 0
  %1177 = vmatprep.subr.bf16.mxu0 0
  %1178 = vmatpush1.bf16.msra.mxu0 0
  %1179 = vmatprep.subr.bf16.mxu0 0
  %1180 = vmatpush1.bf16.msra.mxu0 0
  %1181 = vmatprep.subr.bf16.mxu0 0
  %1182 = vmatpush1.bf16.msra.mxu0 0
  %1183 = vmatprep.subr.bf16.mxu0 0
  %1184 = vmatpush1.bf16.msra.mxu0 0
  %1185 = vmatprep.subr.bf16.mxu0 0
  %1186 = vmatpush1.bf16.msra.mxu0 0
  %1187 = vmatprep.subr.bf16.mxu0 0
  %1188 = vmatpush1.bf16.msra.mxu0 0
  %1189 = vmatprep.subr.bf16.mxu0 0
  %1190 = vmatpush1.bf16.msra.mxu0 0
  %1191 = vmatprep.subr.bf16.mxu0 0
  %1192 = vmatpush1.bf16.msra.mxu0 0
  %1193 = vmatprep.subr.bf16.mxu0 0
  %1194 = vmatpush1.bf16.msra.mxu0 0
  %1195 = vmatprep.mubr.bf16.mxu0 0
  %1196 = vmatmul.mubr.bf16.gmra.mrb[0].mxu0 %v1041
  %v1197 = vpop.f32.mrb[0].mxu0
  %v1198 = vadd.f32 %v1158, %v1197
  %v1199 = vpop.f32.mrb[0].mxu0
  %v1200 = vpop.f32.mrb[0].mxu0
  %v1201 = vpop.f32.mrb[0].mxu0
  %1202 = vdwg.mxu0
  %v1203 = vmax.f32 %v1011, %v1198
  %v1204 = vld [vmem:[%s5] sm:$0x1]
  %v1206 = vlaneseq
  %v1207 = vshrl.u32 %v1206, 7
  %v1208 = vsub.s32 0, %v1207
  %v1209 = vrot.slane %v1204, %v1208
  %v1211 = vadd.f32 %v1203, %v1209
  %v1212 = vmax.f32 %v1211, 0.0
  %v1213 = vpack.c.bf16 %v1212, %v1212
  %v1214 = vld [vmem:[%s6] sm:$0xff]
  %v1215 = vld [vmem:[%s6 + $0x8] sm:$0xff]
  %v1216 = vld [vmem:[%s6 + $0x10] sm:$0xff]
  %v1217 = vld [vmem:[%s6 + $0x18] sm:$0xff]
  %v1218 = vld [vmem:[%s6 + $0x20] sm:$0xff]
  %v1219 = vld [vmem:[%s6 + $0x28] sm:$0xff]
  %v1220 = vld [vmem:[%s6 + $0x30] sm:$0xff]
  %v1221 = vld [vmem:[%s6 + $0x38] sm:$0xff]
  %v1222 = vld [vmem:[%s6 + $0x40] sm:$0xff]
  %v1223 = vld [vmem:[%s6 + $0x48] sm:$0xff]
  %v1224 = vld [vmem:[%s6 + $0x50] sm:$0xff]
  %v1225 = vld [vmem:[%s6 + $0x58] sm:$0xff]
  %v1226 = vld [vmem:[%s6 + $0x60] sm:$0xff]
  %v1227 = vld [vmem:[%s6 + $0x68] sm:$0xff]
  %v1228 = vld [vmem:[%s6 + $0x70] sm:$0xff]
  %v1229 = vld [vmem:[%s6 + $0x78] sm:$0xff]
  %v1230 = vld [vmem:[%s6 + $0x80] sm:$0xff]
  %v1231 = vld [vmem:[%s6 + $0x88] sm:$0xff]
  %v1232 = vld [vmem:[%s6 + $0x90] sm:$0xff]
  %v1233 = vld [vmem:[%s6 + $0x98] sm:$0xff]
  %v1234 = vld [vmem:[%s6 + $0xa0] sm:$0xff]
  %v1235 = vld [vmem:[%s6 + $0xa8] sm:$0xff]
  %v1236 = vld [vmem:[%s6 + $0xb0] sm:$0xff]
  %v1237 = vld [vmem:[%s6 + $0xb8] sm:$0xff]
  %v1238 = vld [vmem:[%s6 + $0xc0] sm:$0xff]
  %v1239 = vld [vmem:[%s6 + $0xc8] sm:$0xff]
  %v1240 = vld [vmem:[%s6 + $0xd0] sm:$0xff]
  %v1241 = vld [vmem:[%s6 + $0xd8] sm:$0xff]
  %v1242 = vld [vmem:[%s6 + $0xe0] sm:$0xff]
  %v1243 = vld [vmem:[%s6 + $0xe8] sm:$0xff]
  %v1244 = vld [vmem:[%s6 + $0xf0] sm:$0xff]
  %v1245 = vld [vmem:[%s6 + $0xf8] sm:$0xff]
  %v1246 = vld [vmem:[%s6 + $0x100] sm:$0xff]
  %v1247 = vld [vmem:[%s6 + $0x108] sm:$0xff]
  %v1248 = vld [vmem:[%s6 + $0x110] sm:$0xff]
  %v1249 = vld [vmem:[%s6 + $0x118] sm:$0xff]
  %v1250 = vld [vmem:[%s6 + $0x120] sm:$0xff]
  %v1251 = vld [vmem:[%s6 + $0x128] sm:$0xff]
  %v1252 = vld [vmem:[%s6 + $0x130] sm:$0xff]
  %v1253 = vld [vmem:[%s6 + $0x138] sm:$0xff]
  %v1254 = vld [vmem:[%s6 + $0x140] sm:$0xff]
  %v1255 = vld [vmem:[%s6 + $0x148] sm:$0xff]
  %v1256 = vld [vmem:[%s6 + $0x150] sm:$0xff]
  %v1257 = vld [vmem:[%s6 + $0x158] sm:$0xff]
  %v1258 = vld [vmem:[%s6 + $0x160] sm:$0xff]
  %v1259 = vld [vmem:[%s6 + $0x168] sm:$0xff]
  %v1260 = vld [vmem:[%s6 + $0x170] sm:$0xff]
  %v1261 = vld [vmem:[%s6 + $0x178] sm:$0xff]
  %v1262 = vld [vmem:[%s6 + $0x180] sm:$0xff]
  %v1263 = vld [vmem:[%s6 + $0x188] sm:$0xff]
  %v1264 = vld [vmem:[%s6 + $0x190] sm:$0xff]
  %v1265 = vld [vmem:[%s6 + $0x198] sm:$0xff]
  %v1266 = vld [vmem:[%s6 + $0x1a0] sm:$0xff]
  %v1267 = vld [vmem:[%s6 + $0x1a8] sm:$0xff]
  %v1268 = vld [vmem:[%s6 + $0x1b0] sm:$0xff]
  %v1269 = vld [vmem:[%s6 + $0x1b8] sm:$0xff]
  %v1270 = vld [vmem:[%s6 + $0x1c0] sm:$0xff]
  %v1271 = vld [vmem:[%s6 + $0x1c8] sm:$0xff]
  %v1272 = vld [vmem:[%s6 + $0x1d0] sm:$0xff]
  %v1273 = vld [vmem:[%s6 + $0x1d8] sm:$0xff]
  %v1274 = vld [vmem:[%s6 + $0x1e0] sm:$0xff]
  %v1275 = vld [vmem:[%s6 + $0x1e8] sm:$0xff]
  %v1276 = vld [vmem:[%s6 + $0x1f0] sm:$0xff]
  %v1277 = vld [vmem:[%s6 + $0x1f8] sm:$0xff]
  %v1278 = vld [vmem:[%s6 + $0x200] sm:$0xff]
  %v1279 = vld [vmem:[%s6 + $0x208] sm:$0xff]
  %v1280 = vld [vmem:[%s6 + $0x210] sm:$0xff]
  %v1281 = vld [vmem:[%s6 + $0x218] sm:$0xff]
  %v1282 = vld [vmem:[%s6 + $0x220] sm:$0xff]
  %v1283 = vld [vmem:[%s6 + $0x228] sm:$0xff]
  %v1284 = vld [vmem:[%s6 + $0x230] sm:$0xff]
  %v1285 = vld [vmem:[%s6 + $0x238] sm:$0xff]
  %v1286 = vld [vmem:[%s6 + $0x240] sm:$0xff]
  %v1287 = vld [vmem:[%s6 + $0x248] sm:$0xff]
  %v1288 = vld [vmem:[%s6 + $0x250] sm:$0xff]
  %v1289 = vld [vmem:[%s6 + $0x258] sm:$0xff]
  %v1290 = vld [vmem:[%s6 + $0x260] sm:$0xff]
  %v1291 = vld [vmem:[%s6 + $0x268] sm:$0xff]
  %v1292 = vld [vmem:[%s6 + $0x270] sm:$0xff]
  %v1293 = vld [vmem:[%s6 + $0x278] sm:$0xff]
  %v1294 = vld [vmem:[%s6 + $0x280] sm:$0xff]
  %v1295 = vld [vmem:[%s6 + $0x288] sm:$0xff]
  %v1296 = vld [vmem:[%s6 + $0x290] sm:$0xff]
  %v1297 = vld [vmem:[%s6 + $0x298] sm:$0xff]
  %v1298 = vld [vmem:[%s6 + $0x2a0] sm:$0xff]
  %v1299 = vld [vmem:[%s6 + $0x2a8] sm:$0xff]
  %v1300 = vld [vmem:[%s6 + $0x2b0] sm:$0xff]
  %v1301 = vld [vmem:[%s6 + $0x2b8] sm:$0xff]
  %v1302 = vld [vmem:[%s6 + $0x2c0] sm:$0xff]
  %v1303 = vld [vmem:[%s6 + $0x2c8] sm:$0xff]
  %v1304 = vld [vmem:[%s6 + $0x2d0] sm:$0xff]
  %v1305 = vld [vmem:[%s6 + $0x2d8] sm:$0xff]
  %v1306 = vld [vmem:[%s6 + $0x2e0] sm:$0xff]
  %v1307 = vld [vmem:[%s6 + $0x2e8] sm:$0xff]
  %v1308 = vld [vmem:[%s6 + $0x2f0] sm:$0xff]
  %v1309 = vld [vmem:[%s6 + $0x2f8] sm:$0xff]
  %v1310 = vld [vmem:[%s6 + $0x300] sm:$0xff]
  %v1311 = vld [vmem:[%s6 + $0x308] sm:$0xff]
  %v1312 = vld [vmem:[%s6 + $0x310] sm:$0xff]
  %v1313 = vld [vmem:[%s6 + $0x318] sm:$0xff]
  %v1314 = vld [vmem:[%s6 + $0x320] sm:$0xff]
  %v1315 = vld [vmem:[%s6 + $0x328] sm:$0xff]
  %v1316 = vld [vmem:[%s6 + $0x330] sm:$0xff]
  %v1317 = vld [vmem:[%s6 + $0x338] sm:$0xff]
  %v1318 = vld [vmem:[%s6 + $0x340] sm:$0xff]
  %v1319 = vld [vmem:[%s6 + $0x348] sm:$0xff]
  %v1320 = vld [vmem:[%s6 + $0x350] sm:$0xff]
  %v1321 = vld [vmem:[%s6 + $0x358] sm:$0xff]
  %v1322 = vld [vmem:[%s6 + $0x360] sm:$0xff]
  %v1323 = vld [vmem:[%s6 + $0x368] sm:$0xff]
  %v1324 = vld [vmem:[%s6 + $0x370] sm:$0xff]
  %v1325 = vld [vmem:[%s6 + $0x378] sm:$0xff]
  %v1326 = vld [vmem:[%s6 + $0x380] sm:$0xff]
  %v1327 = vld [vmem:[%s6 + $0x388] sm:$0xff]
  %v1328 = vld [vmem:[%s6 + $0x390] sm:$0xff]
  %v1329 = vld [vmem:[%s6 + $0x398] sm:$0xff]
  %v1330 = vld [vmem:[%s6 + $0x3a0] sm:$0xff]
  %v1331 = vld [vmem:[%s6 + $0x3a8] sm:$0xff]
  %v1332 = vld [vmem:[%s6 + $0x3b0] sm:$0xff]
  %v1333 = vld [vmem:[%s6 + $0x3b8] sm:$0xff]
  %v1334 = vld [vmem:[%s6 + $0x3c0] sm:$0xff]
  %v1335 = vld [vmem:[%s6 + $0x3c8] sm:$0xff]
  %v1336 = vld [vmem:[%s6 + $0x3d0] sm:$0xff]
  %v1337 = vld [vmem:[%s6 + $0x3d8] sm:$0xff]
  %v1338 = vld [vmem:[%s6 + $0x3e0] sm:$0xff]
  %v1339 = vld [vmem:[%s6 + $0x3e8] sm:$0xff]
  %v1340 = vld [vmem:[%s6 + $0x3f0] sm:$0xff]
  %v1341 = vld [vmem:[%s6 + $0x3f8] sm:$0xff]
  %v1342 = vld [vmem:[%s7] sm:$0xff]
  %v1343 = vld [vmem:[%s7 + $0x8] sm:$0xff]
  %v1346 = vlaneseq
  %v1347 = vshrl.u32 %v1346, 7
  %v1348 = vsub.s32 0, %v1347
  %v1349 = vrot.slane %v1342, %v1348
  %v1350 = vlaneseq
  %v1351 = vshrl.u32 %v1350, 7
  %v1352 = vsub.s32 1, %v1351
  %v1353 = vrot.slane %v1342, %v1352
  %v1354 = vlaneseq
  %v1355 = vshrl.u32 %v1354, 7
  %v1356 = vsub.s32 2, %v1355
  %v1357 = vrot.slane %v1342, %v1356
  %v1358 = vlaneseq
  %v1359 = vshrl.u32 %v1358, 7
  %v1360 = vsub.s32 3, %v1359
  %v1361 = vrot.slane %v1342, %v1360
  %v1362 = vlaneseq
  %v1363 = vshrl.u32 %v1362, 7
  %v1364 = vsub.s32 4, %v1363
  %v1365 = vrot.slane %v1342, %v1364
  %v1366 = vlaneseq
  %v1367 = vshrl.u32 %v1366, 7
  %v1368 = vsub.s32 5, %v1367
  %v1369 = vrot.slane %v1342, %v1368
  %v1370 = vlaneseq
  %v1371 = vshrl.u32 %v1370, 7
  %v1372 = vsub.s32 6, %v1371
  %v1373 = vrot.slane %v1342, %v1372
  %v1374 = vlaneseq
  %v1375 = vshrl.u32 %v1374, 7
  %v1376 = vsub.s32 7, %v1375
  %v1377 = vrot.slane %v1342, %v1376
  %v1378 = vlaneseq
  %v1379 = vshrl.u32 %v1378, 7
  %v1380 = vsub.s32 0, %v1379
  %v1381 = vrot.slane %v1343, %v1380
  %v1382 = vlaneseq
  %v1383 = vshrl.u32 %v1382, 7
  %v1384 = vsub.s32 1, %v1383
  %v1385 = vrot.slane %v1343, %v1384
  %v1386 = vlaneseq
  %v1387 = vshrl.u32 %v1386, 7
  %v1388 = vsub.s32 2, %v1387
  %v1389 = vrot.slane %v1343, %v1388
  %v1390 = vlaneseq
  %v1391 = vshrl.u32 %v1390, 7
  %v1392 = vsub.s32 3, %v1391
  %v1393 = vrot.slane %v1343, %v1392
  %v1394 = vlaneseq
  %v1395 = vshrl.u32 %v1394, 7
  %v1396 = vsub.s32 4, %v1395
  %v1397 = vrot.slane %v1343, %v1396
  %v1398 = vlaneseq
  %v1399 = vshrl.u32 %v1398, 7
  %v1400 = vsub.s32 5, %v1399
  %v1401 = vrot.slane %v1343, %v1400
  %v1402 = vlaneseq
  %v1403 = vshrl.u32 %v1402, 7
  %v1404 = vsub.s32 6, %v1403
  %v1405 = vrot.slane %v1343, %v1404
  %v1406 = vlaneseq
  %v1407 = vshrl.u32 %v1406, 7
  %v1408 = vsub.s32 7, %v1407
  %v1409 = vrot.slane %v1343, %v1408
  %v1554 = vunpack.c.l.b16 %v1214
  %v1555 = vunpack.c.h.b16 %v1214
  %v1556 = vunpack.c.l.b16 %v1215
  %v1557 = vunpack.c.h.b16 %v1215
  %v1558 = vunpack.c.l.b16 %v1216
  %v1559 = vunpack.c.h.b16 %v1216
  %v1560 = vunpack.c.l.b16 %v1217
  %v1561 = vunpack.c.h.b16 %v1217
  %v1562 = vunpack.c.l.b16 %v1218
  %v1563 = vunpack.c.h.b16 %v1218
  %v1564 = vunpack.c.l.b16 %v1219
  %v1565 = vunpack.c.h.b16 %v1219
  %v1566 = vunpack.c.l.b16 %v1220
  %v1567 = vunpack.c.h.b16 %v1220
  %v1568 = vunpack.c.l.b16 %v1221
  %v1569 = vunpack.c.h.b16 %v1221
  %v1570 = vunpack.c.l.b16 %v1222
  %v1571 = vunpack.c.h.b16 %v1222
  %v1572 = vunpack.c.l.b16 %v1223
  %v1573 = vunpack.c.h.b16 %v1223
  %v1574 = vunpack.c.l.b16 %v1224
  %v1575 = vunpack.c.h.b16 %v1224
  %v1576 = vunpack.c.l.b16 %v1225
  %v1577 = vunpack.c.h.b16 %v1225
  %v1578 = vunpack.c.l.b16 %v1226
  %v1579 = vunpack.c.h.b16 %v1226
  %v1580 = vunpack.c.l.b16 %v1227
  %v1581 = vunpack.c.h.b16 %v1227
  %v1582 = vunpack.c.l.b16 %v1228
  %v1583 = vunpack.c.h.b16 %v1228
  %v1584 = vunpack.c.l.b16 %v1229
  %v1585 = vunpack.c.h.b16 %v1229
  %v1586 = vunpack.c.l.b16 %v1230
  %v1587 = vunpack.c.h.b16 %v1230
  %v1588 = vunpack.c.l.b16 %v1231
  %v1589 = vunpack.c.h.b16 %v1231
  %v1590 = vunpack.c.l.b16 %v1232
  %v1591 = vunpack.c.h.b16 %v1232
  %v1592 = vunpack.c.l.b16 %v1233
  %v1593 = vunpack.c.h.b16 %v1233
  %v1594 = vunpack.c.l.b16 %v1234
  %v1595 = vunpack.c.h.b16 %v1234
  %v1596 = vunpack.c.l.b16 %v1235
  %v1597 = vunpack.c.h.b16 %v1235
  %v1598 = vunpack.c.l.b16 %v1236
  %v1599 = vunpack.c.h.b16 %v1236
  %v1600 = vunpack.c.l.b16 %v1237
  %v1601 = vunpack.c.h.b16 %v1237
  %v1602 = vunpack.c.l.b16 %v1238
  %v1603 = vunpack.c.h.b16 %v1238
  %v1604 = vunpack.c.l.b16 %v1239
  %v1605 = vunpack.c.h.b16 %v1239
  %v1606 = vunpack.c.l.b16 %v1240
  %v1607 = vunpack.c.h.b16 %v1240
  %v1608 = vunpack.c.l.b16 %v1241
  %v1609 = vunpack.c.h.b16 %v1241
  %v1610 = vunpack.c.l.b16 %v1242
  %v1611 = vunpack.c.h.b16 %v1242
  %v1612 = vunpack.c.l.b16 %v1243
  %v1613 = vunpack.c.h.b16 %v1243
  %v1614 = vunpack.c.l.b16 %v1244
  %v1615 = vunpack.c.h.b16 %v1244
  %v1616 = vunpack.c.l.b16 %v1245
  %v1617 = vunpack.c.h.b16 %v1245
  %v1618 = vunpack.c.l.b16 %v1246
  %v1619 = vunpack.c.h.b16 %v1246
  %v1620 = vunpack.c.l.b16 %v1247
  %v1621 = vunpack.c.h.b16 %v1247
  %v1622 = vunpack.c.l.b16 %v1248
  %v1623 = vunpack.c.h.b16 %v1248
  %v1624 = vunpack.c.l.b16 %v1249
  %v1625 = vunpack.c.h.b16 %v1249
  %v1626 = vunpack.c.l.b16 %v1250
  %v1627 = vunpack.c.h.b16 %v1250
  %v1628 = vunpack.c.l.b16 %v1251
  %v1629 = vunpack.c.h.b16 %v1251
  %v1630 = vunpack.c.l.b16 %v1252
  %v1631 = vunpack.c.h.b16 %v1252
  %v1632 = vunpack.c.l.b16 %v1253
  %v1633 = vunpack.c.h.b16 %v1253
  %v1634 = vunpack.c.l.b16 %v1254
  %v1635 = vunpack.c.h.b16 %v1254
  %v1636 = vunpack.c.l.b16 %v1255
  %v1637 = vunpack.c.h.b16 %v1255
  %v1638 = vunpack.c.l.b16 %v1256
  %v1639 = vunpack.c.h.b16 %v1256
  %v1640 = vunpack.c.l.b16 %v1257
  %v1641 = vunpack.c.h.b16 %v1257
  %v1642 = vunpack.c.l.b16 %v1258
  %v1643 = vunpack.c.h.b16 %v1258
  %v1644 = vunpack.c.l.b16 %v1259
  %v1645 = vunpack.c.h.b16 %v1259
  %v1646 = vunpack.c.l.b16 %v1260
  %v1647 = vunpack.c.h.b16 %v1260
  %v1648 = vunpack.c.l.b16 %v1261
  %v1649 = vunpack.c.h.b16 %v1261
  %v1650 = vunpack.c.l.b16 %v1262
  %v1651 = vunpack.c.h.b16 %v1262
  %v1652 = vunpack.c.l.b16 %v1263
  %v1653 = vunpack.c.h.b16 %v1263
  %v1654 = vunpack.c.l.b16 %v1264
  %v1655 = vunpack.c.h.b16 %v1264
  %v1656 = vunpack.c.l.b16 %v1265
  %v1657 = vunpack.c.h.b16 %v1265
  %v1658 = vunpack.c.l.b16 %v1266
  %v1659 = vunpack.c.h.b16 %v1266
  %v1660 = vunpack.c.l.b16 %v1267
  %v1661 = vunpack.c.h.b16 %v1267
  %v1662 = vunpack.c.l.b16 %v1268
  %v1663 = vunpack.c.h.b16 %v1268
  %v1664 = vunpack.c.l.b16 %v1269
  %v1665 = vunpack.c.h.b16 %v1269
  %v1666 = vunpack.c.l.b16 %v1270
  %v1667 = vunpack.c.h.b16 %v1270
  %v1668 = vunpack.c.l.b16 %v1271
  %v1669 = vunpack.c.h.b16 %v1271
  %v1670 = vunpack.c.l.b16 %v1272
  %v1671 = vunpack.c.h.b16 %v1272
  %v1672 = vunpack.c.l.b16 %v1273
  %v1673 = vunpack.c.h.b16 %v1273
  %v1674 = vunpack.c.l.b16 %v1274
  %v1675 = vunpack.c.h.b16 %v1274
  %v1676 = vunpack.c.l.b16 %v1275
  %v1677 = vunpack.c.h.b16 %v1275
  %v1678 = vunpack.c.l.b16 %v1276
  %v1679 = vunpack.c.h.b16 %v1276
  %v1680 = vunpack.c.l.b16 %v1277
  %v1681 = vunpack.c.h.b16 %v1277
  %v1682 = vunpack.c.l.b16 %v1278
  %v1683 = vunpack.c.h.b16 %v1278
  %v1684 = vunpack.c.l.b16 %v1279
  %v1685 = vunpack.c.h.b16 %v1279
  %v1686 = vunpack.c.l.b16 %v1280
  %v1687 = vunpack.c.h.b16 %v1280
  %v1688 = vunpack.c.l.b16 %v1281
  %v1689 = vunpack.c.h.b16 %v1281
  %v1690 = vunpack.c.l.b16 %v1282
  %v1691 = vunpack.c.h.b16 %v1282
  %v1692 = vunpack.c.l.b16 %v1283
  %v1693 = vunpack.c.h.b16 %v1283
  %v1694 = vunpack.c.l.b16 %v1284
  %v1695 = vunpack.c.h.b16 %v1284
  %v1696 = vunpack.c.l.b16 %v1285
  %v1697 = vunpack.c.h.b16 %v1285
  %v1698 = vunpack.c.l.b16 %v1286
  %v1699 = vunpack.c.h.b16 %v1286
  %v1700 = vunpack.c.l.b16 %v1287
  %v1701 = vunpack.c.h.b16 %v1287
  %v1702 = vunpack.c.l.b16 %v1288
  %v1703 = vunpack.c.h.b16 %v1288
  %v1704 = vunpack.c.l.b16 %v1289
  %v1705 = vunpack.c.h.b16 %v1289
  %v1706 = vunpack.c.l.b16 %v1290
  %v1707 = vunpack.c.h.b16 %v1290
  %v1708 = vunpack.c.l.b16 %v1291
  %v1709 = vunpack.c.h.b16 %v1291
  %v1710 = vunpack.c.l.b16 %v1292
  %v1711 = vunpack.c.h.b16 %v1292
  %v1712 = vunpack.c.l.b16 %v1293
  %v1713 = vunpack.c.h.b16 %v1293
  %v1714 = vunpack.c.l.b16 %v1294
  %v1715 = vunpack.c.h.b16 %v1294
  %v1716 = vunpack.c.l.b16 %v1295
  %v1717 = vunpack.c.h.b16 %v1295
  %v1718 = vunpack.c.l.b16 %v1296
  %v1719 = vunpack.c.h.b16 %v1296
  %v1720 = vunpack.c.l.b16 %v1297
  %v1721 = vunpack.c.h.b16 %v1297
  %v1722 = vunpack.c.l.b16 %v1298
  %v1723 = vunpack.c.h.b16 %v1298
  %v1724 = vunpack.c.l.b16 %v1299
  %v1725 = vunpack.c.h.b16 %v1299
  %v1726 = vunpack.c.l.b16 %v1300
  %v1727 = vunpack.c.h.b16 %v1300
  %v1728 = vunpack.c.l.b16 %v1301
  %v1729 = vunpack.c.h.b16 %v1301
  %v1730 = vunpack.c.l.b16 %v1302
  %v1731 = vunpack.c.h.b16 %v1302
  %v1732 = vunpack.c.l.b16 %v1303
  %v1733 = vunpack.c.h.b16 %v1303
  %v1734 = vunpack.c.l.b16 %v1304
  %v1735 = vunpack.c.h.b16 %v1304
  %v1736 = vunpack.c.l.b16 %v1305
  %v1737 = vunpack.c.h.b16 %v1305
  %v1738 = vunpack.c.l.b16 %v1306
  %v1739 = vunpack.c.h.b16 %v1306
  %v1740 = vunpack.c.l.b16 %v1307
  %v1741 = vunpack.c.h.b16 %v1307
  %v1742 = vunpack.c.l.b16 %v1308
  %v1743 = vunpack.c.h.b16 %v1308
  %v1744 = vunpack.c.l.b16 %v1309
  %v1745 = vunpack.c.h.b16 %v1309
  %v1746 = vunpack.c.l.b16 %v1310
  %v1747 = vunpack.c.h.b16 %v1310
  %v1748 = vunpack.c.l.b16 %v1311
  %v1749 = vunpack.c.h.b16 %v1311
  %v1750 = vunpack.c.l.b16 %v1312
  %v1751 = vunpack.c.h.b16 %v1312
  %v1752 = vunpack.c.l.b16 %v1313
  %v1753 = vunpack.c.h.b16 %v1313
  %v1754 = vunpack.c.l.b16 %v1314
  %v1755 = vunpack.c.h.b16 %v1314
  %v1756 = vunpack.c.l.b16 %v1315
  %v1757 = vunpack.c.h.b16 %v1315
  %v1758 = vunpack.c.l.b16 %v1316
  %v1759 = vunpack.c.h.b16 %v1316
  %v1760 = vunpack.c.l.b16 %v1317
  %v1761 = vunpack.c.h.b16 %v1317
  %v1762 = vunpack.c.l.b16 %v1318
  %v1763 = vunpack.c.h.b16 %v1318
  %v1764 = vunpack.c.l.b16 %v1319
  %v1765 = vunpack.c.h.b16 %v1319
  %v1766 = vunpack.c.l.b16 %v1320
  %v1767 = vunpack.c.h.b16 %v1320
  %v1768 = vunpack.c.l.b16 %v1321
  %v1769 = vunpack.c.h.b16 %v1321
  %v1770 = vunpack.c.l.b16 %v1322
  %v1771 = vunpack.c.h.b16 %v1322
  %v1772 = vunpack.c.l.b16 %v1323
  %v1773 = vunpack.c.h.b16 %v1323
  %v1774 = vunpack.c.l.b16 %v1324
  %v1775 = vunpack.c.h.b16 %v1324
  %v1776 = vunpack.c.l.b16 %v1325
  %v1777 = vunpack.c.h.b16 %v1325
  %v1778 = vunpack.c.l.b16 %v1326
  %v1779 = vunpack.c.h.b16 %v1326
  %v1780 = vunpack.c.l.b16 %v1327
  %v1781 = vunpack.c.h.b16 %v1327
  %v1782 = vunpack.c.l.b16 %v1328
  %v1783 = vunpack.c.h.b16 %v1328
  %v1784 = vunpack.c.l.b16 %v1329
  %v1785 = vunpack.c.h.b16 %v1329
  %v1786 = vunpack.c.l.b16 %v1330
  %v1787 = vunpack.c.h.b16 %v1330
  %v1788 = vunpack.c.l.b16 %v1331
  %v1789 = vunpack.c.h.b16 %v1331
  %v1790 = vunpack.c.l.b16 %v1332
  %v1791 = vunpack.c.h.b16 %v1332
  %v1792 = vunpack.c.l.b16 %v1333
  %v1793 = vunpack.c.h.b16 %v1333
  %v1794 = vunpack.c.l.b16 %v1334
  %v1795 = vunpack.c.h.b16 %v1334
  %v1796 = vunpack.c.l.b16 %v1335
  %v1797 = vunpack.c.h.b16 %v1335
  %v1798 = vunpack.c.l.b16 %v1336
  %v1799 = vunpack.c.h.b16 %v1336
  %v1800 = vunpack.c.l.b16 %v1337
  %v1801 = vunpack.c.h.b16 %v1337
  %v1802 = vunpack.c.l.b16 %v1338
  %v1803 = vunpack.c.h.b16 %v1338
  %v1804 = vunpack.c.l.b16 %v1339
  %v1805 = vunpack.c.h.b16 %v1339
  %v1806 = vunpack.c.l.b16 %v1340
  %v1807 = vunpack.c.h.b16 %v1340
  %v1808 = vunpack.c.l.b16 %v1341
  %v1809 = vunpack.c.h.b16 %v1341
  %v1810 = vpack.c.b16 %v1570, %v1554
  %v1811 = vpack.c.b16 %v1571, %v1555
  %v1812 = vpack.c.b16 %v1572, %v1556
  %v1813 = vpack.c.b16 %v1573, %v1557
  %v1814 = vpack.c.b16 %v1574, %v1558
  %v1815 = vpack.c.b16 %v1575, %v1559
  %v1816 = vpack.c.b16 %v1576, %v1560
  %v1817 = vpack.c.b16 %v1577, %v1561
  %v1818 = vpack.c.b16 %v1578, %v1562
  %v1819 = vpack.c.b16 %v1579, %v1563
  %v1820 = vpack.c.b16 %v1580, %v1564
  %v1821 = vpack.c.b16 %v1581, %v1565
  %v1822 = vpack.c.b16 %v1582, %v1566
  %v1823 = vpack.c.b16 %v1583, %v1567
  %v1824 = vpack.c.b16 %v1584, %v1568
  %v1825 = vpack.c.b16 %v1585, %v1569
  %v1826 = vpack.c.b16 %v1602, %v1586
  %v1827 = vpack.c.b16 %v1603, %v1587
  %v1828 = vpack.c.b16 %v1604, %v1588
  %v1829 = vpack.c.b16 %v1605, %v1589
  %v1830 = vpack.c.b16 %v1606, %v1590
  %v1831 = vpack.c.b16 %v1607, %v1591
  %v1832 = vpack.c.b16 %v1608, %v1592
  %v1833 = vpack.c.b16 %v1609, %v1593
  %v1834 = vpack.c.b16 %v1610, %v1594
  %v1835 = vpack.c.b16 %v1611, %v1595
  %v1836 = vpack.c.b16 %v1612, %v1596
  %v1837 = vpack.c.b16 %v1613, %v1597
  %v1838 = vpack.c.b16 %v1614, %v1598
  %v1839 = vpack.c.b16 %v1615, %v1599
  %v1840 = vpack.c.b16 %v1616, %v1600
  %v1841 = vpack.c.b16 %v1617, %v1601
  %v1842 = vpack.c.b16 %v1634, %v1618
  %v1843 = vpack.c.b16 %v1635, %v1619
  %v1844 = vpack.c.b16 %v1636, %v1620
  %v1845 = vpack.c.b16 %v1637, %v1621
  %v1846 = vpack.c.b16 %v1638, %v1622
  %v1847 = vpack.c.b16 %v1639, %v1623
  %v1848 = vpack.c.b16 %v1640, %v1624
  %v1849 = vpack.c.b16 %v1641, %v1625
  %v1850 = vpack.c.b16 %v1642, %v1626
  %v1851 = vpack.c.b16 %v1643, %v1627
  %v1852 = vpack.c.b16 %v1644, %v1628
  %v1853 = vpack.c.b16 %v1645, %v1629
  %v1854 = vpack.c.b16 %v1646, %v1630
  %v1855 = vpack.c.b16 %v1647, %v1631
  %v1856 = vpack.c.b16 %v1648, %v1632
  %v1857 = vpack.c.b16 %v1649, %v1633
  %v1858 = vpack.c.b16 %v1666, %v1650
  %v1859 = vpack.c.b16 %v1667, %v1651
  %v1860 = vpack.c.b16 %v1668, %v1652
  %v1861 = vpack.c.b16 %v1669, %v1653
  %v1862 = vpack.c.b16 %v1670, %v1654
  %v1863 = vpack.c.b16 %v1671, %v1655
  %v1864 = vpack.c.b16 %v1672, %v1656
  %v1865 = vpack.c.b16 %v1673, %v1657
  %v1866 = vpack.c.b16 %v1674, %v1658
  %v1867 = vpack.c.b16 %v1675, %v1659
  %v1868 = vpack.c.b16 %v1676, %v1660
  %v1869 = vpack.c.b16 %v1677, %v1661
  %v1870 = vpack.c.b16 %v1678, %v1662
  %v1871 = vpack.c.b16 %v1679, %v1663
  %v1872 = vpack.c.b16 %v1680, %v1664
  %v1873 = vpack.c.b16 %v1681, %v1665
  %v1874 = vpack.c.b16 %v1698, %v1682
  %v1875 = vpack.c.b16 %v1699, %v1683
  %v1876 = vpack.c.b16 %v1700, %v1684
  %v1877 = vpack.c.b16 %v1701, %v1685
  %v1878 = vpack.c.b16 %v1702, %v1686
  %v1879 = vpack.c.b16 %v1703, %v1687
  %v1880 = vpack.c.b16 %v1704, %v1688
  %v1881 = vpack.c.b16 %v1705, %v1689
  %v1882 = vpack.c.b16 %v1706, %v1690
  %v1883 = vpack.c.b16 %v1707, %v1691
  %v1884 = vpack.c.b16 %v1708, %v1692
  %v1885 = vpack.c.b16 %v1709, %v1693
  %v1886 = vpack.c.b16 %v1710, %v1694
  %v1887 = vpack.c.b16 %v1711, %v1695
  %v1888 = vpack.c.b16 %v1712, %v1696
  %v1889 = vpack.c.b16 %v1713, %v1697
  %v1890 = vpack.c.b16 %v1730, %v1714
  %v1891 = vpack.c.b16 %v1731, %v1715
  %v1892 = vpack.c.b16 %v1732, %v1716
  %v1893 = vpack.c.b16 %v1733, %v1717
  %v1894 = vpack.c.b16 %v1734, %v1718
  %v1895 = vpack.c.b16 %v1735, %v1719
  %v1896 = vpack.c.b16 %v1736, %v1720
  %v1897 = vpack.c.b16 %v1737, %v1721
  %v1898 = vpack.c.b16 %v1738, %v1722
  %v1899 = vpack.c.b16 %v1739, %v1723
  %v1900 = vpack.c.b16 %v1740, %v1724
  %v1901 = vpack.c.b16 %v1741, %v1725
  %v1902 = vpack.c.b16 %v1742, %v1726
  %v1903 = vpack.c.b16 %v1743, %v1727
  %v1904 = vpack.c.b16 %v1744, %v1728
  %v1905 = vpack.c.b16 %v1745, %v1729
  %v1906 = vpack.c.b16 %v1762, %v1746
  %v1907 = vpack.c.b16 %v1763, %v1747
  %v1908 = vpack.c.b16 %v1764, %v1748
  %v1909 = vpack.c.b16 %v1765, %v1749
  %v1910 = vpack.c.b16 %v1766, %v1750
  %v1911 = vpack.c.b16 %v1767, %v1751
  %v1912 = vpack.c.b16 %v1768, %v1752
  %v1913 = vpack.c.b16 %v1769, %v1753
  %v1914 = vpack.c.b16 %v1770, %v1754
  %v1915 = vpack.c.b16 %v1771, %v1755
  %v1916 = vpack.c.b16 %v1772, %v1756
  %v1917 = vpack.c.b16 %v1773, %v1757
  %v1918 = vpack.c.b16 %v1774, %v1758
  %v1919 = vpack.c.b16 %v1775, %v1759
  %v1920 = vpack.c.b16 %v1776, %v1760
  %v1921 = vpack.c.b16 %v1777, %v1761
  %v1922 = vpack.c.b16 %v1794, %v1778
  %v1923 = vpack.c.b16 %v1795, %v1779
  %v1924 = vpack.c.b16 %v1796, %v1780
  %v1925 = vpack.c.b16 %v1797, %v1781
  %v1926 = vpack.c.b16 %v1798, %v1782
  %v1927 = vpack.c.b16 %v1799, %v1783
  %v1928 = vpack.c.b16 %v1800, %v1784
  %v1929 = vpack.c.b16 %v1801, %v1785
  %v1930 = vpack.c.b16 %v1802, %v1786
  %v1931 = vpack.c.b16 %v1803, %v1787
  %v1932 = vpack.c.b16 %v1804, %v1788
  %v1933 = vpack.c.b16 %v1805, %v1789
  %v1934 = vpack.c.b16 %v1806, %v1790
  %v1935 = vpack.c.b16 %v1807, %v1791
  %v1936 = vpack.c.b16 %v1808, %v1792
  %v1937 = vpack.c.b16 %v1809, %v1793
  %2066 = vmatprep.subr.bf16.mxu0 %v1811
  %2067 = vmatpush1.bf16.msra.mxu0 %v1810
  %2068 = vmatprep.subr.bf16.mxu0 %v1827
  %2069 = vmatpush1.bf16.msra.mxu0 %v1826
  %2070 = vmatprep.subr.bf16.mxu0 %v1843
  %2071 = vmatpush1.bf16.msra.mxu0 %v1842
  %2072 = vmatprep.subr.bf16.mxu0 %v1859
  %2073 = vmatpush1.bf16.msra.mxu0 %v1858
  %2074 = vmatprep.subr.bf16.mxu0 %v1875
  %2075 = vmatpush1.bf16.msra.mxu0 %v1874
  %2076 = vmatprep.subr.bf16.mxu0 %v1891
  %2077 = vmatpush1.bf16.msra.mxu0 %v1890
  %2078 = vmatprep.subr.bf16.mxu0 %v1907
  %2079 = vmatpush1.bf16.msra.mxu0 %v1906
  %2080 = vmatprep.subr.bf16.mxu0 %v1923
  %2081 = vmatpush1.bf16.msra.mxu0 %v1922
  %2082 = vmatprep.subr.bf16.mxu0 0
  %2083 = vmatpush1.bf16.msra.mxu0 0
  %2084 = vmatprep.subr.bf16.mxu0 0
  %2085 = vmatpush1.bf16.msra.mxu0 0
  %2086 = vmatprep.subr.bf16.mxu0 0
  %2087 = vmatpush1.bf16.msra.mxu0 0
  %2088 = vmatprep.subr.bf16.mxu0 0
  %2089 = vmatpush1.bf16.msra.mxu0 0
  %2090 = vmatprep.subr.bf16.mxu0 0
  %2091 = vmatpush1.bf16.msra.mxu0 0
  %2092 = vmatprep.subr.bf16.mxu0 0
  %2093 = vmatpush1.bf16.msra.mxu0 0
  %2094 = vmatprep.subr.bf16.mxu0 0
  %2095 = vmatpush1.bf16.msra.mxu0 0
  %2096 = vmatprep.subr.bf16.mxu0 0
  %2097 = vmatpush1.bf16.msra.mxu0 0
  %2098 = vmatprep.mubr.bf16.mxu0 0
  %2099 = vmatmul.mubr.bf16.gmra.mrb[0].mxu0 %v1213
  %v2100 = vpop.f32.mrb[0].mxu0
  %v2101 = vadd.f32 %v1349, %v2100
  %v2102 = vpop.f32.mrb[0].mxu0
  %v2103 = vadd.f32 %v1353, %v2102
  %v2104 = vpop.f32.mrb[0].mxu0
  %v2105 = vpop.f32.mrb[0].mxu0
  %2106 = vdwg.mxu0
  %2107 = vmatprep.subr.bf16.mxu0 %v1813
  %2108 = vmatpush1.bf16.msra.mxu0 %v1812
  %2109 = vmatprep.subr.bf16.mxu0 %v1829
  %2110 = vmatpush1.bf16.msra.mxu0 %v1828
  %2111 = vmatprep.subr.bf16.mxu0 %v1845
  %2112 = vmatpush1.bf16.msra.mxu0 %v1844
  %2113 = vmatprep.subr.bf16.mxu0 %v1861
  %2114 = vmatpush1.bf16.msra.mxu0 %v1860
  %2115 = vmatprep.subr.bf16.mxu0 %v1877
  %2116 = vmatpush1.bf16.msra.mxu0 %v1876
  %2117 = vmatprep.subr.bf16.mxu0 %v1893
  %2118 = vmatpush1.bf16.msra.mxu0 %v1892
  %2119 = vmatprep.subr.bf16.mxu0 %v1909
  %2120 = vmatpush1.bf16.msra.mxu0 %v1908
  %2121 = vmatprep.subr.bf16.mxu0 %v1925
  %2122 = vmatpush1.bf16.msra.mxu0 %v1924
  %2123 = vmatprep.subr.bf16.mxu0 0
  %2124 = vmatpush1.bf16.msra.mxu0 0
  %2125 = vmatprep.subr.bf16.mxu0 0
  %2126 = vmatpush1.bf16.msra.mxu0 0
  %2127 = vmatprep.subr.bf16.mxu0 0
  %2128 = vmatpush1.bf16.msra.mxu0 0
  %2129 = vmatprep.subr.bf16.mxu0 0
  %2130 = vmatpush1.bf16.msra.mxu0 0
  %2131 = vmatprep.subr.bf16.mxu0 0
  %2132 = vmatpush1.bf16.msra.mxu0 0
  %2133 = vmatprep.subr.bf16.mxu0 0
  %2134 = vmatpush1.bf16.msra.mxu0 0
  %2135 = vmatprep.subr.bf16.mxu0 0
  %2136 = vmatpush1.bf16.msra.mxu0 0
  %2137 = vmatprep.subr.bf16.mxu0 0
  %2138 = vmatpush1.bf16.msra.mxu0 0
  %2139 = vmatprep.mubr.bf16.mxu0 0
  %2140 = vmatmul.mubr.bf16.gmra.mrb[0].mxu0 %v1213
  %v2141 = vpop.f32.mrb[0].mxu0
  %v2142 = vadd.f32 %v1357, %v2141
  %v2143 = vpop.f32.mrb[0].mxu0
  %v2144 = vadd.f32 %v1361, %v2143
  %v2145 = vpop.f32.mrb[0].mxu0
  %v2146 = vpop.f32.mrb[0].mxu0
  %2147 = vdwg.mxu0
  %2148 = vmatprep.subr.bf16.mxu0 %v1815
  %2149 = vmatpush1.bf16.msra.mxu0 %v1814
  %2150 = vmatprep.subr.bf16.mxu0 %v1831
  %2151 = vmatpush1.bf16.msra.mxu0 %v1830
  %2152 = vmatprep.subr.bf16.mxu0 %v1847
  %2153 = vmatpush1.bf16.msra.mxu0 %v1846
  %2154 = vmatprep.subr.bf16.mxu0 %v1863
  %2155 = vmatpush1.bf16.msra.mxu0 %v1862
  %2156 = vmatprep.subr.bf16.mxu0 %v1879
  %2157 = vmatpush1.bf16.msra.mxu0 %v1878
  %2158 = vmatprep.subr.bf16.mxu0 %v1895
  %2159 = vmatpush1.bf16.msra.mxu0 %v1894
  %2160 = vmatprep.subr.bf16.mxu0 %v1911
  %2161 = vmatpush1.bf16.msra.mxu0 %v1910
  %2162 = vmatprep.subr.bf16.mxu0 %v1927
  %2163 = vmatpush1.bf16.msra.mxu0 %v1926
  %2164 = vmatprep.subr.bf16.mxu0 0
  %2165 = vmatpush1.bf16.msra.mxu0 0
  %2166 = vmatprep.subr.bf16.mxu0 0
  %2167 = vmatpush1.bf16.msra.mxu0 0
  %2168 = vmatprep.subr.bf16.mxu0 0
  %2169 = vmatpush1.bf16.msra.mxu0 0
  %2170 = vmatprep.subr.bf16.mxu0 0
  %2171 = vmatpush1.bf16.msra.mxu0 0
  %2172 = vmatprep.subr.bf16.mxu0 0
  %2173 = vmatpush1.bf16.msra.mxu0 0
  %2174 = vmatprep.subr.bf16.mxu0 0
  %2175 = vmatpush1.bf16.msra.mxu0 0
  %2176 = vmatprep.subr.bf16.mxu0 0
  %2177 = vmatpush1.bf16.msra.mxu0 0
  %2178 = vmatprep.subr.bf16.mxu0 0
  %2179 = vmatpush1.bf16.msra.mxu0 0
  %2180 = vmatprep.mubr.bf16.mxu0 0
  %2181 = vmatmul.mubr.bf16.gmra.mrb[0].mxu0 %v1213
  %v2182 = vpop.f32.mrb[0].mxu0
  %v2183 = vadd.f32 %v1365, %v2182
  %v2184 = vpop.f32.mrb[0].mxu0
  %v2185 = vadd.f32 %v1369, %v2184
  %v2186 = vpop.f32.mrb[0].mxu0
  %v2187 = vpop.f32.mrb[0].mxu0
  %2188 = vdwg.mxu0
  %2189 = vmatprep.subr.bf16.mxu0 %v1817
  %2190 = vmatpush1.bf16.msra.mxu0 %v1816
  %2191 = vmatprep.subr.bf16.mxu0 %v1833
  %2192 = vmatpush1.bf16.msra.mxu0 %v1832
  %2193 = vmatprep.subr.bf16.mxu0 %v1849
  %2194 = vmatpush1.bf16.msra.mxu0 %v1848
  %2195 = vmatprep.subr.bf16.mxu0 %v1865
  %2196 = vmatpush1.bf16.msra.mxu0 %v1864
  %2197 = vmatprep.subr.bf16.mxu0 %v1881
  %2198 = vmatpush1.bf16.msra.mxu0 %v1880
  %2199 = vmatprep.subr.bf16.mxu0 %v1897
  %2200 = vmatpush1.bf16.msra.mxu0 %v1896
  %2201 = vmatprep.subr.bf16.mxu0 %v1913
  %2202 = vmatpush1.bf16.msra.mxu0 %v1912
  %2203 = vmatprep.subr.bf16.mxu0 %v1929
  %2204 = vmatpush1.bf16.msra.mxu0 %v1928
  %2205 = vmatprep.subr.bf16.mxu0 0
  %2206 = vmatpush1.bf16.msra.mxu0 0
  %2207 = vmatprep.subr.bf16.mxu0 0
  %2208 = vmatpush1.bf16.msra.mxu0 0
  %2209 = vmatprep.subr.bf16.mxu0 0
  %2210 = vmatpush1.bf16.msra.mxu0 0
  %2211 = vmatprep.subr.bf16.mxu0 0
  %2212 = vmatpush1.bf16.msra.mxu0 0
  %2213 = vmatprep.subr.bf16.mxu0 0
  %2214 = vmatpush1.bf16.msra.mxu0 0
  %2215 = vmatprep.subr.bf16.mxu0 0
  %2216 = vmatpush1.bf16.msra.mxu0 0
  %2217 = vmatprep.subr.bf16.mxu0 0
  %2218 = vmatpush1.bf16.msra.mxu0 0
  %2219 = vmatprep.subr.bf16.mxu0 0
  %2220 = vmatpush1.bf16.msra.mxu0 0
  %2221 = vmatprep.mubr.bf16.mxu0 0
  %2222 = vmatmul.mubr.bf16.gmra.mrb[0].mxu0 %v1213
  %v2223 = vpop.f32.mrb[0].mxu0
  %v2224 = vadd.f32 %v1373, %v2223
  %v2225 = vpop.f32.mrb[0].mxu0
  %v2226 = vadd.f32 %v1377, %v2225
  %v2227 = vpop.f32.mrb[0].mxu0
  %v2228 = vpop.f32.mrb[0].mxu0
  %2229 = vdwg.mxu0
  %2230 = vmatprep.subr.bf16.mxu0 %v1819
  %2231 = vmatpush1.bf16.msra.mxu0 %v1818
  %2232 = vmatprep.subr.bf16.mxu0 %v1835
  %2233 = vmatpush1.bf16.msra.mxu0 %v1834
  %2234 = vmatprep.subr.bf16.mxu0 %v1851
  %2235 = vmatpush1.bf16.msra.mxu0 %v1850
  %2236 = vmatprep.subr.bf16.mxu0 %v1867
  %2237 = vmatpush1.bf16.msra.mxu0 %v1866
  %2238 = vmatprep.subr.bf16.mxu0 %v1883
  %2239 = vmatpush1.bf16.msra.mxu0 %v1882
  %2240 = vmatprep.subr.bf16.mxu0 %v1899
  %2241 = vmatpush1.bf16.msra.mxu0 %v1898
  %2242 = vmatprep.subr.bf16.mxu0 %v1915
  %2243 = vmatpush1.bf16.msra.mxu0 %v1914
  %2244 = vmatprep.subr.bf16.mxu0 %v1931
  %2245 = vmatpush1.bf16.msra.mxu0 %v1930
  %2246 = vmatprep.subr.bf16.mxu0 0
  %2247 = vmatpush1.bf16.msra.mxu0 0
  %2248 = vmatprep.subr.bf16.mxu0 0
  %2249 = vmatpush1.bf16.msra.mxu0 0
  %2250 = vmatprep.subr.bf16.mxu0 0
  %2251 = vmatpush1.bf16.msra.mxu0 0
  %2252 = vmatprep.subr.bf16.mxu0 0
  %2253 = vmatpush1.bf16.msra.mxu0 0
  %2254 = vmatprep.subr.bf16.mxu0 0
  %2255 = vmatpush1.bf16.msra.mxu0 0
  %2256 = vmatprep.subr.bf16.mxu0 0
  %2257 = vmatpush1.bf16.msra.mxu0 0
  %2258 = vmatprep.subr.bf16.mxu0 0
  %2259 = vmatpush1.bf16.msra.mxu0 0
  %2260 = vmatprep.subr.bf16.mxu0 0
  %2261 = vmatpush1.bf16.msra.mxu0 0
  %2262 = vmatprep.mubr.bf16.mxu0 0
  %2263 = vmatmul.mubr.bf16.gmra.mrb[0].mxu0 %v1213
  %v2264 = vpop.f32.mrb[0].mxu0
  %v2265 = vadd.f32 %v1381, %v2264
  %v2266 = vpop.f32.mrb[0].mxu0
  %v2267 = vadd.f32 %v1385, %v2266
  %v2268 = vpop.f32.mrb[0].mxu0
  %v2269 = vpop.f32.mrb[0].mxu0
  %2270 = vdwg.mxu0
  %2271 = vmatprep.subr.bf16.mxu0 %v1821
  %2272 = vmatpush1.bf16.msra.mxu0 %v1820
  %2273 = vmatprep.subr.bf16.mxu0 %v1837
  %2274 = vmatpush1.bf16.msra.mxu0 %v1836
  %2275 = vmatprep.subr.bf16.mxu0 %v1853
  %2276 = vmatpush1.bf16.msra.mxu0 %v1852
  %2277 = vmatprep.subr.bf16.mxu0 %v1869
  %2278 = vmatpush1.bf16.msra.mxu0 %v1868
  %2279 = vmatprep.subr.bf16.mxu0 %v1885
  %2280 = vmatpush1.bf16.msra.mxu0 %v1884
  %2281 = vmatprep.subr.bf16.mxu0 %v1901
  %2282 = vmatpush1.bf16.msra.mxu0 %v1900
  %2283 = vmatprep.subr.bf16.mxu0 %v1917
  %2284 = vmatpush1.bf16.msra.mxu0 %v1916
  %2285 = vmatprep.subr.bf16.mxu0 %v1933
  %2286 = vmatpush1.bf16.msra.mxu0 %v1932
  %2287 = vmatprep.subr.bf16.mxu0 0
  %2288 = vmatpush1.bf16.msra.mxu0 0
  %2289 = vmatprep.subr.bf16.mxu0 0
  %2290 = vmatpush1.bf16.msra.mxu0 0
  %2291 = vmatprep.subr.bf16.mxu0 0
  %2292 = vmatpush1.bf16.msra.mxu0 0
  %2293 = vmatprep.subr.bf16.mxu0 0
  %2294 = vmatpush1.bf16.msra.mxu0 0
  %2295 = vmatprep.subr.bf16.mxu0 0
  %2296 = vmatpush1.bf16.msra.mxu0 0
  %2297 = vmatprep.subr.bf16.mxu0 0
  %2298 = vmatpush1.bf16.msra.mxu0 0
  %2299 = vmatprep.subr.bf16.mxu0 0
  %2300 = vmatpush1.bf16.msra.mxu0 0
  %2301 = vmatprep.subr.bf16.mxu0 0
  %2302 = vmatpush1.bf16.msra.mxu0 0
  %2303 = vmatprep.mubr.bf16.mxu0 0
  %2304 = vmatmul.mubr.bf16.gmra.mrb[0].mxu0 %v1213
  %v2305 = vpop.f32.mrb[0].mxu0
  %v2306 = vadd.f32 %v1389, %v2305
  %v2307 = vpop.f32.mrb[0].mxu0
  %v2308 = vadd.f32 %v1393, %v2307
  %v2309 = vpop.f32.mrb[0].mxu0
  %v2310 = vpop.f32.mrb[0].mxu0
  %2311 = vdwg.mxu0
  %2312 = vmatprep.subr.bf16.mxu0 %v1823
  %2313 = vmatpush1.bf16.msra.mxu0 %v1822
  %2314 = vmatprep.subr.bf16.mxu0 %v1839
  %2315 = vmatpush1.bf16.msra.mxu0 %v1838
  %2316 = vmatprep.subr.bf16.mxu0 %v1855
  %2317 = vmatpush1.bf16.msra.mxu0 %v1854
  %2318 = vmatprep.subr.bf16.mxu0 %v1871
  %2319 = vmatpush1.bf16.msra.mxu0 %v1870
  %2320 = vmatprep.subr.bf16.mxu0 %v1887
  %2321 = vmatpush1.bf16.msra.mxu0 %v1886
  %2322 = vmatprep.subr.bf16.mxu0 %v1903
  %2323 = vmatpush1.bf16.msra.mxu0 %v1902
  %2324 = vmatprep.subr.bf16.mxu0 %v1919
  %2325 = vmatpush1.bf16.msra.mxu0 %v1918
  %2326 = vmatprep.subr.bf16.mxu0 %v1935
  %2327 = vmatpush1.bf16.msra.mxu0 %v1934
  %2328 = vmatprep.subr.bf16.mxu0 0
  %2329 = vmatpush1.bf16.msra.mxu0 0
  %2330 = vmatprep.subr.bf16.mxu0 0
  %2331 = vmatpush1.bf16.msra.mxu0 0
  %2332 = vmatprep.subr.bf16.mxu0 0
  %2333 = vmatpush1.bf16.msra.mxu0 0
  %2334 = vmatprep.subr.bf16.mxu0 0
  %2335 = vmatpush1.bf16.msra.mxu0 0
  %2336 = vmatprep.subr.bf16.mxu0 0
  %2337 = vmatpush1.bf16.msra.mxu0 0
  %2338 = vmatprep.subr.bf16.mxu0 0
  %2339 = vmatpush1.bf16.msra.mxu0 0
  %2340 = vmatprep.subr.bf16.mxu0 0
  %2341 = vmatpush1.bf16.msra.mxu0 0
  %2342 = vmatprep.subr.bf16.mxu0 0
  %2343 = vmatpush1.bf16.msra.mxu0 0
  %2344 = vmatprep.mubr.bf16.mxu0 0
  %2345 = vmatmul.mubr.bf16.gmra.mrb[0].mxu0 %v1213
  %v2346 = vpop.f32.mrb[0].mxu0
  %v2347 = vadd.f32 %v1397, %v2346
  %v2348 = vpop.f32.mrb[0].mxu0
  %v2349 = vadd.f32 %v1401, %v2348
  %v2350 = vpop.f32.mrb[0].mxu0
  %v2351 = vpop.f32.mrb[0].mxu0
  %2352 = vdwg.mxu0
  %2353 = vmatprep.subr.bf16.mxu0 %v1825
  %2354 = vmatpush1.bf16.msra.mxu0 %v1824
  %2355 = vmatprep.subr.bf16.mxu0 %v1841
  %2356 = vmatpush1.bf16.msra.mxu0 %v1840
  %2357 = vmatprep.subr.bf16.mxu0 %v1857
  %2358 = vmatpush1.bf16.msra.mxu0 %v1856
  %2359 = vmatprep.subr.bf16.mxu0 %v1873
  %2360 = vmatpush1.bf16.msra.mxu0 %v1872
  %2361 = vmatprep.subr.bf16.mxu0 %v1889
  %2362 = vmatpush1.bf16.msra.mxu0 %v1888
  %2363 = vmatprep.subr.bf16.mxu0 %v1905
  %2364 = vmatpush1.bf16.msra.mxu0 %v1904
  %2365 = vmatprep.subr.bf16.mxu0 %v1921
  %2366 = vmatpush1.bf16.msra.mxu0 %v1920
  %2367 = vmatprep.subr.bf16.mxu0 %v1937
  %2368 = vmatpush1.bf16.msra.mxu0 %v1936
  %2369 = vmatprep.subr.bf16.mxu0 0
  %2370 = vmatpush1.bf16.msra.mxu0 0
  %2371 = vmatprep.subr.bf16.mxu0 0
  %2372 = vmatpush1.bf16.msra.mxu0 0
  %2373 = vmatprep.subr.bf16.mxu0 0
  %2374 = vmatpush1.bf16.msra.mxu0 0
  %2375 = vmatprep.subr.bf16.mxu0 0
  %2376 = vmatpush1.bf16.msra.mxu0 0
  %2377 = vmatprep.subr.bf16.mxu0 0
  %2378 = vmatpush1.bf16.msra.mxu0 0
  %2379 = vmatprep.subr.bf16.mxu0 0
  %2380 = vmatpush1.bf16.msra.mxu0 0
  %2381 = vmatprep.subr.bf16.mxu0 0
  %2382 = vmatpush1.bf16.msra.mxu0 0
  %2383 = vmatprep.subr.bf16.mxu0 0
  %2384 = vmatpush1.bf16.msra.mxu0 0
  %2385 = vmatprep.mubr.bf16.mxu0 0
  %2386 = vmatmul.mubr.bf16.gmra.mrb[0].mxu0 %v1213
  %v2387 = vpop.f32.mrb[0].mxu0
  %v2388 = vadd.f32 %v1405, %v2387
  %v2389 = vpop.f32.mrb[0].mxu0
  %v2390 = vadd.f32 %v1409, %v2389
  %v2391 = vpop.f32.mrb[0].mxu0
  %v2392 = vpop.f32.mrb[0].mxu0
  %2393 = vdwg.mxu0
  %v2394 = vmax.f32 %v2101, 0.0
  %v2395 = vmax.f32 %v2103, 0.0
  %v2396 = vmax.f32 %v2142, 0.0
  %v2397 = vmax.f32 %v2144, 0.0
  %v2398 = vmax.f32 %v2183, 0.0
  %v2399 = vmax.f32 %v2185, 0.0
  %v2400 = vmax.f32 %v2224, 0.0
  %v2401 = vmax.f32 %v2226, 0.0
  %v2402 = vmax.f32 %v2265, 0.0
  %v2403 = vmax.f32 %v2267, 0.0
  %v2404 = vmax.f32 %v2306, 0.0
  %v2405 = vmax.f32 %v2308, 0.0
  %v2406 = vmax.f32 %v2347, 0.0
  %v2407 = vmax.f32 %v2349, 0.0
  %v2408 = vmax.f32 %v2388, 0.0
  %v2409 = vmax.f32 %v2390, 0.0
  %v2410 = vpack.c.bf16 %v2394, %v2394
  %v2411 = vpack.c.bf16 %v2395, %v2395
  %v2412 = vpack.c.bf16 %v2396, %v2396
  %v2413 = vpack.c.bf16 %v2397, %v2397
  %v2414 = vpack.c.bf16 %v2398, %v2398
  %v2415 = vpack.c.bf16 %v2399, %v2399
  %v2416 = vpack.c.bf16 %v2400, %v2400
  %v2417 = vpack.c.bf16 %v2401, %v2401
  %v2418 = vpack.c.bf16 %v2402, %v2402
  %v2419 = vpack.c.bf16 %v2403, %v2403
  %v2420 = vpack.c.bf16 %v2404, %v2404
  %v2421 = vpack.c.bf16 %v2405, %v2405
  %v2422 = vpack.c.bf16 %v2406, %v2406
  %v2423 = vpack.c.bf16 %v2407, %v2407
  %v2424 = vpack.c.bf16 %v2408, %v2408
  %v2425 = vpack.c.bf16 %v2409, %v2409
  %v2426 = vld [vmem:[%s8] sm:$0xf]
  %v2427 = vld [vmem:[%s8 + $0x4] sm:$0xf]
  %v2428 = vld [vmem:[%s8 + $0x8] sm:$0xf]
  %v2429 = vld [vmem:[%s8 + $0xc] sm:$0xf]
  %v2430 = vld [vmem:[%s8 + $0x10] sm:$0xf]
  %v2431 = vld [vmem:[%s8 + $0x14] sm:$0xf]
  %v2432 = vld [vmem:[%s8 + $0x18] sm:$0xf]
  %v2433 = vld [vmem:[%s8 + $0x1c] sm:$0xf]
  %v2434 = vld [vmem:[%s8 + $0x20] sm:$0xf]
  %v2435 = vld [vmem:[%s8 + $0x24] sm:$0xf]
  %v2436 = vld [vmem:[%s8 + $0x28] sm:$0xf]
  %v2437 = vld [vmem:[%s8 + $0x2c] sm:$0xf]
  %v2438 = vld [vmem:[%s8 + $0x30] sm:$0xf]
  %v2439 = vld [vmem:[%s8 + $0x34] sm:$0xf]
  %v2440 = vld [vmem:[%s8 + $0x38] sm:$0xf]
  %v2441 = vld [vmem:[%s8 + $0x3c] sm:$0xf]
  %v2442 = vld [vmem:[%s8 + $0x40] sm:$0xf]
  %v2443 = vld [vmem:[%s8 + $0x44] sm:$0xf]
  %v2444 = vld [vmem:[%s8 + $0x48] sm:$0xf]
  %v2445 = vld [vmem:[%s8 + $0x4c] sm:$0xf]
  %v2446 = vld [vmem:[%s8 + $0x50] sm:$0xf]
  %v2447 = vld [vmem:[%s8 + $0x54] sm:$0xf]
  %v2448 = vld [vmem:[%s8 + $0x58] sm:$0xf]
  %v2449 = vld [vmem:[%s8 + $0x5c] sm:$0xf]
  %v2450 = vld [vmem:[%s8 + $0x60] sm:$0xf]
  %v2451 = vld [vmem:[%s8 + $0x64] sm:$0xf]
  %v2452 = vld [vmem:[%s8 + $0x68] sm:$0xf]
  %v2453 = vld [vmem:[%s8 + $0x6c] sm:$0xf]
  %v2454 = vld [vmem:[%s8 + $0x70] sm:$0xf]
  %v2455 = vld [vmem:[%s8 + $0x74] sm:$0xf]
  %v2456 = vld [vmem:[%s8 + $0x78] sm:$0xf]
  %v2457 = vld [vmem:[%s8 + $0x7c] sm:$0xf]
  %v2458 = vld [vmem:[%s8 + $0x80] sm:$0xf]
  %v2459 = vld [vmem:[%s8 + $0x84] sm:$0xf]
  %v2460 = vld [vmem:[%s8 + $0x88] sm:$0xf]
  %v2461 = vld [vmem:[%s8 + $0x8c] sm:$0xf]
  %v2462 = vld [vmem:[%s8 + $0x90] sm:$0xf]
  %v2463 = vld [vmem:[%s8 + $0x94] sm:$0xf]
  %v2464 = vld [vmem:[%s8 + $0x98] sm:$0xf]
  %v2465 = vld [vmem:[%s8 + $0x9c] sm:$0xf]
  %v2466 = vld [vmem:[%s8 + $0xa0] sm:$0xf]
  %v2467 = vld [vmem:[%s8 + $0xa4] sm:$0xf]
  %v2468 = vld [vmem:[%s8 + $0xa8] sm:$0xf]
  %v2469 = vld [vmem:[%s8 + $0xac] sm:$0xf]
  %v2470 = vld [vmem:[%s8 + $0xb0] sm:$0xf]
  %v2471 = vld [vmem:[%s8 + $0xb4] sm:$0xf]
  %v2472 = vld [vmem:[%s8 + $0xb8] sm:$0xf]
  %v2473 = vld [vmem:[%s8 + $0xbc] sm:$0xf]
  %v2474 = vld [vmem:[%s8 + $0xc0] sm:$0xf]
  %v2475 = vld [vmem:[%s8 + $0xc4] sm:$0xf]
  %v2476 = vld [vmem:[%s8 + $0xc8] sm:$0xf]
  %v2477 = vld [vmem:[%s8 + $0xcc] sm:$0xf]
  %v2478 = vld [vmem:[%s8 + $0xd0] sm:$0xf]
  %v2479 = vld [vmem:[%s8 + $0xd4] sm:$0xf]
  %v2480 = vld [vmem:[%s8 + $0xd8] sm:$0xf]
  %v2481 = vld [vmem:[%s8 + $0xdc] sm:$0xf]
  %v2482 = vld [vmem:[%s8 + $0xe0] sm:$0xf]
  %v2483 = vld [vmem:[%s8 + $0xe4] sm:$0xf]
  %v2484 = vld [vmem:[%s8 + $0xe8] sm:$0xf]
  %v2485 = vld [vmem:[%s8 + $0xec] sm:$0xf]
  %v2486 = vld [vmem:[%s8 + $0xf0] sm:$0xf]
  %v2487 = vld [vmem:[%s8 + $0xf4] sm:$0xf]
  %v2488 = vld [vmem:[%s8 + $0xf8] sm:$0xf]
  %v2489 = vld [vmem:[%s8 + $0xfc] sm:$0xf]
  %v2490 = vld [vmem:[%s8 + $0x100] sm:$0xf]
  %v2491 = vld [vmem:[%s8 + $0x104] sm:$0xf]
  %v2492 = vld [vmem:[%s8 + $0x108] sm:$0xf]
  %v2493 = vld [vmem:[%s8 + $0x10c] sm:$0xf]
  %v2494 = vld [vmem:[%s8 + $0x110] sm:$0xf]
  %v2495 = vld [vmem:[%s8 + $0x114] sm:$0xf]
  %v2496 = vld [vmem:[%s8 + $0x118] sm:$0xf]
  %v2497 = vld [vmem:[%s8 + $0x11c] sm:$0xf]
  %v2498 = vld [vmem:[%s8 + $0x120] sm:$0xf]
  %v2499 = vld [vmem:[%s8 + $0x124] sm:$0xf]
  %v2500 = vld [vmem:[%s8 + $0x128] sm:$0xf]
  %v2501 = vld [vmem:[%s8 + $0x12c] sm:$0xf]
  %v2502 = vld [vmem:[%s8 + $0x130] sm:$0xf]
  %v2503 = vld [vmem:[%s8 + $0x134] sm:$0xf]
  %v2504 = vld [vmem:[%s8 + $0x138] sm:$0xf]
  %v2505 = vld [vmem:[%s8 + $0x13c] sm:$0xf]
  %v2506 = vld [vmem:[%s8 + $0x140] sm:$0xf]
  %v2507 = vld [vmem:[%s8 + $0x144] sm:$0xf]
  %v2508 = vld [vmem:[%s8 + $0x148] sm:$0xf]
  %v2509 = vld [vmem:[%s8 + $0x14c] sm:$0xf]
  %v2510 = vld [vmem:[%s8 + $0x150] sm:$0xf]
  %v2511 = vld [vmem:[%s8 + $0x154] sm:$0xf]
  %v2512 = vld [vmem:[%s8 + $0x158] sm:$0xf]
  %v2513 = vld [vmem:[%s8 + $0x15c] sm:$0xf]
  %v2514 = vld [vmem:[%s8 + $0x160] sm:$0xf]
  %v2515 = vld [vmem:[%s8 + $0x164] sm:$0xf]
  %v2516 = vld [vmem:[%s8 + $0x168] sm:$0xf]
  %v2517 = vld [vmem:[%s8 + $0x16c] sm:$0xf]
  %v2518 = vld [vmem:[%s8 + $0x170] sm:$0xf]
  %v2519 = vld [vmem:[%s8 + $0x174] sm:$0xf]
  %v2520 = vld [vmem:[%s8 + $0x178] sm:$0xf]
  %v2521 = vld [vmem:[%s8 + $0x17c] sm:$0xf]
  %v2522 = vld [vmem:[%s8 + $0x180] sm:$0xf]
  %v2523 = vld [vmem:[%s8 + $0x184] sm:$0xf]
  %v2524 = vld [vmem:[%s8 + $0x188] sm:$0xf]
  %v2525 = vld [vmem:[%s8 + $0x18c] sm:$0xf]
  %v2526 = vld [vmem:[%s8 + $0x190] sm:$0xf]
  %v2527 = vld [vmem:[%s8 + $0x194] sm:$0xf]
  %v2528 = vld [vmem:[%s8 + $0x198] sm:$0xf]
  %v2529 = vld [vmem:[%s8 + $0x19c] sm:$0xf]
  %v2530 = vld [vmem:[%s8 + $0x1a0] sm:$0xf]
  %v2531 = vld [vmem:[%s8 + $0x1a4] sm:$0xf]
  %v2532 = vld [vmem:[%s8 + $0x1a8] sm:$0xf]
  %v2533 = vld [vmem:[%s8 + $0x1ac] sm:$0xf]
  %v2534 = vld [vmem:[%s8 + $0x1b0] sm:$0xf]
  %v2535 = vld [vmem:[%s8 + $0x1b4] sm:$0xf]
  %v2536 = vld [vmem:[%s8 + $0x1b8] sm:$0xf]
  %v2537 = vld [vmem:[%s8 + $0x1bc] sm:$0xf]
  %v2538 = vld [vmem:[%s8 + $0x1c0] sm:$0xf]
  %v2539 = vld [vmem:[%s8 + $0x1c4] sm:$0xf]
  %v2540 = vld [vmem:[%s8 + $0x1c8] sm:$0xf]
  %v2541 = vld [vmem:[%s8 + $0x1cc] sm:$0xf]
  %v2542 = vld [vmem:[%s8 + $0x1d0] sm:$0xf]
  %v2543 = vld [vmem:[%s8 + $0x1d4] sm:$0xf]
  %v2544 = vld [vmem:[%s8 + $0x1d8] sm:$0xf]
  %v2545 = vld [vmem:[%s8 + $0x1dc] sm:$0xf]
  %v2546 = vld [vmem:[%s8 + $0x1e0] sm:$0xf]
  %v2547 = vld [vmem:[%s8 + $0x1e4] sm:$0xf]
  %v2548 = vld [vmem:[%s8 + $0x1e8] sm:$0xf]
  %v2549 = vld [vmem:[%s8 + $0x1ec] sm:$0xf]
  %v2550 = vld [vmem:[%s8 + $0x1f0] sm:$0xf]
  %v2551 = vld [vmem:[%s8 + $0x1f4] sm:$0xf]
  %v2552 = vld [vmem:[%s8 + $0x1f8] sm:$0xf]
  %v2553 = vld [vmem:[%s8 + $0x1fc] sm:$0xf]
  %v2554 = vld [vmem:[%s8 + $0x200] sm:$0xf]
  %v2555 = vld [vmem:[%s8 + $0x204] sm:$0xf]
  %v2556 = vld [vmem:[%s8 + $0x208] sm:$0xf]
  %v2557 = vld [vmem:[%s8 + $0x20c] sm:$0xf]
  %v2558 = vld [vmem:[%s8 + $0x210] sm:$0xf]
  %v2559 = vld [vmem:[%s8 + $0x214] sm:$0xf]
  %v2560 = vld [vmem:[%s8 + $0x218] sm:$0xf]
  %v2561 = vld [vmem:[%s8 + $0x21c] sm:$0xf]
  %v2562 = vld [vmem:[%s8 + $0x220] sm:$0xf]
  %v2563 = vld [vmem:[%s8 + $0x224] sm:$0xf]
  %v2564 = vld [vmem:[%s8 + $0x228] sm:$0xf]
  %v2565 = vld [vmem:[%s8 + $0x22c] sm:$0xf]
  %v2566 = vld [vmem:[%s8 + $0x230] sm:$0xf]
  %v2567 = vld [vmem:[%s8 + $0x234] sm:$0xf]
  %v2568 = vld [vmem:[%s8 + $0x238] sm:$0xf]
  %v2569 = vld [vmem:[%s8 + $0x23c] sm:$0xf]
  %v2570 = vld [vmem:[%s8 + $0x240] sm:$0xf]
  %v2571 = vld [vmem:[%s8 + $0x244] sm:$0xf]
  %v2572 = vld [vmem:[%s8 + $0x248] sm:$0xf]
  %v2573 = vld [vmem:[%s8 + $0x24c] sm:$0xf]
  %v2574 = vld [vmem:[%s8 + $0x250] sm:$0xf]
  %v2575 = vld [vmem:[%s8 + $0x254] sm:$0xf]
  %v2576 = vld [vmem:[%s8 + $0x258] sm:$0xf]
  %v2577 = vld [vmem:[%s8 + $0x25c] sm:$0xf]
  %v2578 = vld [vmem:[%s8 + $0x260] sm:$0xf]
  %v2579 = vld [vmem:[%s8 + $0x264] sm:$0xf]
  %v2580 = vld [vmem:[%s8 + $0x268] sm:$0xf]
  %v2581 = vld [vmem:[%s8 + $0x26c] sm:$0xf]
  %v2582 = vld [vmem:[%s8 + $0x270] sm:$0xf]
  %v2583 = vld [vmem:[%s8 + $0x274] sm:$0xf]
  %v2584 = vld [vmem:[%s8 + $0x278] sm:$0xf]
  %v2585 = vld [vmem:[%s8 + $0x27c] sm:$0xf]
  %v2586 = vld [vmem:[%s8 + $0x280] sm:$0xf]
  %v2587 = vld [vmem:[%s8 + $0x284] sm:$0xf]
  %v2588 = vld [vmem:[%s8 + $0x288] sm:$0xf]
  %v2589 = vld [vmem:[%s8 + $0x28c] sm:$0xf]
  %v2590 = vld [vmem:[%s8 + $0x290] sm:$0xf]
  %v2591 = vld [vmem:[%s8 + $0x294] sm:$0xf]
  %v2592 = vld [vmem:[%s8 + $0x298] sm:$0xf]
  %v2593 = vld [vmem:[%s8 + $0x29c] sm:$0xf]
  %v2594 = vld [vmem:[%s8 + $0x2a0] sm:$0xf]
  %v2595 = vld [vmem:[%s8 + $0x2a4] sm:$0xf]
  %v2596 = vld [vmem:[%s8 + $0x2a8] sm:$0xf]
  %v2597 = vld [vmem:[%s8 + $0x2ac] sm:$0xf]
  %v2598 = vld [vmem:[%s8 + $0x2b0] sm:$0xf]
  %v2599 = vld [vmem:[%s8 + $0x2b4] sm:$0xf]
  %v2600 = vld [vmem:[%s8 + $0x2b8] sm:$0xf]
  %v2601 = vld [vmem:[%s8 + $0x2bc] sm:$0xf]
  %v2602 = vld [vmem:[%s8 + $0x2c0] sm:$0xf]
  %v2603 = vld [vmem:[%s8 + $0x2c4] sm:$0xf]
  %v2604 = vld [vmem:[%s8 + $0x2c8] sm:$0xf]
  %v2605 = vld [vmem:[%s8 + $0x2cc] sm:$0xf]
  %v2606 = vld [vmem:[%s8 + $0x2d0] sm:$0xf]
  %v2607 = vld [vmem:[%s8 + $0x2d4] sm:$0xf]
  %v2608 = vld [vmem:[%s8 + $0x2d8] sm:$0xf]
  %v2609 = vld [vmem:[%s8 + $0x2dc] sm:$0xf]
  %v2610 = vld [vmem:[%s8 + $0x2e0] sm:$0xf]
  %v2611 = vld [vmem:[%s8 + $0x2e4] sm:$0xf]
  %v2612 = vld [vmem:[%s8 + $0x2e8] sm:$0xf]
  %v2613 = vld [vmem:[%s8 + $0x2ec] sm:$0xf]
  %v2614 = vld [vmem:[%s8 + $0x2f0] sm:$0xf]
  %v2615 = vld [vmem:[%s8 + $0x2f4] sm:$0xf]
  %v2616 = vld [vmem:[%s8 + $0x2f8] sm:$0xf]
  %v2617 = vld [vmem:[%s8 + $0x2fc] sm:$0xf]
  %v2618 = vld [vmem:[%s8 + $0x300] sm:$0xf]
  %v2619 = vld [vmem:[%s8 + $0x304] sm:$0xf]
  %v2620 = vld [vmem:[%s8 + $0x308] sm:$0xf]
  %v2621 = vld [vmem:[%s8 + $0x30c] sm:$0xf]
  %v2622 = vld [vmem:[%s8 + $0x310] sm:$0xf]
  %v2623 = vld [vmem:[%s8 + $0x314] sm:$0xf]
  %v2624 = vld [vmem:[%s8 + $0x318] sm:$0xf]
  %v2625 = vld [vmem:[%s8 + $0x31c] sm:$0xf]
  %v2626 = vld [vmem:[%s8 + $0x320] sm:$0xf]
  %v2627 = vld [vmem:[%s8 + $0x324] sm:$0xf]
  %v2628 = vld [vmem:[%s8 + $0x328] sm:$0xf]
  %v2629 = vld [vmem:[%s8 + $0x32c] sm:$0xf]
  %v2630 = vld [vmem:[%s8 + $0x330] sm:$0xf]
  %v2631 = vld [vmem:[%s8 + $0x334] sm:$0xf]
  %v2632 = vld [vmem:[%s8 + $0x338] sm:$0xf]
  %v2633 = vld [vmem:[%s8 + $0x33c] sm:$0xf]
  %v2634 = vld [vmem:[%s8 + $0x340] sm:$0xf]
  %v2635 = vld [vmem:[%s8 + $0x344] sm:$0xf]
  %v2636 = vld [vmem:[%s8 + $0x348] sm:$0xf]
  %v2637 = vld [vmem:[%s8 + $0x34c] sm:$0xf]
  %v2638 = vld [vmem:[%s8 + $0x350] sm:$0xf]
  %v2639 = vld [vmem:[%s8 + $0x354] sm:$0xf]
  %v2640 = vld [vmem:[%s8 + $0x358] sm:$0xf]
  %v2641 = vld [vmem:[%s8 + $0x35c] sm:$0xf]
  %v2642 = vld [vmem:[%s8 + $0x360] sm:$0xf]
  %v2643 = vld [vmem:[%s8 + $0x364] sm:$0xf]
  %v2644 = vld [vmem:[%s8 + $0x368] sm:$0xf]
  %v2645 = vld [vmem:[%s8 + $0x36c] sm:$0xf]
  %v2646 = vld [vmem:[%s8 + $0x370] sm:$0xf]
  %v2647 = vld [vmem:[%s8 + $0x374] sm:$0xf]
  %v2648 = vld [vmem:[%s8 + $0x378] sm:$0xf]
  %v2649 = vld [vmem:[%s8 + $0x37c] sm:$0xf]
  %v2650 = vld [vmem:[%s8 + $0x380] sm:$0xf]
  %v2651 = vld [vmem:[%s8 + $0x384] sm:$0xf]
  %v2652 = vld [vmem:[%s8 + $0x388] sm:$0xf]
  %v2653 = vld [vmem:[%s8 + $0x38c] sm:$0xf]
  %v2654 = vld [vmem:[%s8 + $0x390] sm:$0xf]
  %v2655 = vld [vmem:[%s8 + $0x394] sm:$0xf]
  %v2656 = vld [vmem:[%s8 + $0x398] sm:$0xf]
  %v2657 = vld [vmem:[%s8 + $0x39c] sm:$0xf]
  %v2658 = vld [vmem:[%s8 + $0x3a0] sm:$0xf]
  %v2659 = vld [vmem:[%s8 + $0x3a4] sm:$0xf]
  %v2660 = vld [vmem:[%s8 + $0x3a8] sm:$0xf]
  %v2661 = vld [vmem:[%s8 + $0x3ac] sm:$0xf]
  %v2662 = vld [vmem:[%s8 + $0x3b0] sm:$0xf]
  %v2663 = vld [vmem:[%s8 + $0x3b4] sm:$0xf]
  %v2664 = vld [vmem:[%s8 + $0x3b8] sm:$0xf]
  %v2665 = vld [vmem:[%s8 + $0x3bc] sm:$0xf]
  %v2666 = vld [vmem:[%s8 + $0x3c0] sm:$0xf]
  %v2667 = vld [vmem:[%s8 + $0x3c4] sm:$0xf]
  %v2668 = vld [vmem:[%s8 + $0x3c8] sm:$0xf]
  %v2669 = vld [vmem:[%s8 + $0x3cc] sm:$0xf]
  %v2670 = vld [vmem:[%s8 + $0x3d0] sm:$0xf]
  %v2671 = vld [vmem:[%s8 + $0x3d4] sm:$0xf]
  %v2672 = vld [vmem:[%s8 + $0x3d8] sm:$0xf]
  %v2673 = vld [vmem:[%s8 + $0x3dc] sm:$0xf]
  %v2674 = vld [vmem:[%s8 + $0x3e0] sm:$0xf]
  %v2675 = vld [vmem:[%s8 + $0x3e4] sm:$0xf]
  %v2676 = vld [vmem:[%s8 + $0x3e8] sm:$0xf]
  %v2677 = vld [vmem:[%s8 + $0x3ec] sm:$0xf]
  %v2678 = vld [vmem:[%s8 + $0x3f0] sm:$0xf]
  %v2679 = vld [vmem:[%s8 + $0x3f4] sm:$0xf]
  %v2680 = vld [vmem:[%s8 + $0x3f8] sm:$0xf]
  %v2681 = vld [vmem:[%s8 + $0x3fc] sm:$0xf]
  %v2682 = vld [vmem:[%s9] sm:$0x1]
  %v2684 = vlaneseq
  %v2685 = vshrl.u32 %v2684, 7
  %v2686 = vsub.s32 0, %v2685
  %v2687 = vrot.slane %v2682, %v2686
  %v2945 = vunpack.c.l.b16 %v2426
  %v2946 = vunpack.c.l.b16 %v2427
  %v2947 = vunpack.c.l.b16 %v2428
  %v2948 = vunpack.c.l.b16 %v2429
  %v2949 = vunpack.c.l.b16 %v2430
  %v2950 = vunpack.c.l.b16 %v2431
  %v2951 = vunpack.c.l.b16 %v2432
  %v2952 = vunpack.c.l.b16 %v2433
  %v2953 = vunpack.c.l.b16 %v2434
  %v2954 = vunpack.c.l.b16 %v2435
  %v2955 = vunpack.c.l.b16 %v2436
  %v2956 = vunpack.c.l.b16 %v2437
  %v2957 = vunpack.c.l.b16 %v2438
  %v2958 = vunpack.c.l.b16 %v2439
  %v2959 = vunpack.c.l.b16 %v2440
  %v2960 = vunpack.c.l.b16 %v2441
  %v2961 = vunpack.c.l.b16 %v2442
  %v2962 = vunpack.c.l.b16 %v2443
  %v2963 = vunpack.c.l.b16 %v2444
  %v2964 = vunpack.c.l.b16 %v2445
  %v2965 = vunpack.c.l.b16 %v2446
  %v2966 = vunpack.c.l.b16 %v2447
  %v2967 = vunpack.c.l.b16 %v2448
  %v2968 = vunpack.c.l.b16 %v2449
  %v2969 = vunpack.c.l.b16 %v2450
  %v2970 = vunpack.c.l.b16 %v2451
  %v2971 = vunpack.c.l.b16 %v2452
  %v2972 = vunpack.c.l.b16 %v2453
  %v2973 = vunpack.c.l.b16 %v2454
  %v2974 = vunpack.c.l.b16 %v2455
  %v2975 = vunpack.c.l.b16 %v2456
  %v2976 = vunpack.c.l.b16 %v2457
  %v2977 = vunpack.c.l.b16 %v2458
  %v2978 = vunpack.c.l.b16 %v2459
  %v2979 = vunpack.c.l.b16 %v2460
  %v2980 = vunpack.c.l.b16 %v2461
  %v2981 = vunpack.c.l.b16 %v2462
  %v2982 = vunpack.c.l.b16 %v2463
  %v2983 = vunpack.c.l.b16 %v2464
  %v2984 = vunpack.c.l.b16 %v2465
  %v2985 = vunpack.c.l.b16 %v2466
  %v2986 = vunpack.c.l.b16 %v2467
  %v2987 = vunpack.c.l.b16 %v2468
  %v2988 = vunpack.c.l.b16 %v2469
  %v2989 = vunpack.c.l.b16 %v2470
  %v2990 = vunpack.c.l.b16 %v2471
  %v2991 = vunpack.c.l.b16 %v2472
  %v2992 = vunpack.c.l.b16 %v2473
  %v2993 = vunpack.c.l.b16 %v2474
  %v2994 = vunpack.c.l.b16 %v2475
  %v2995 = vunpack.c.l.b16 %v2476
  %v2996 = vunpack.c.l.b16 %v2477
  %v2997 = vunpack.c.l.b16 %v2478
  %v2998 = vunpack.c.l.b16 %v2479
  %v2999 = vunpack.c.l.b16 %v2480
  %v3000 = vunpack.c.l.b16 %v2481
  %v3001 = vunpack.c.l.b16 %v2482
  %v3002 = vunpack.c.l.b16 %v2483
  %v3003 = vunpack.c.l.b16 %v2484
  %v3004 = vunpack.c.l.b16 %v2485
  %v3005 = vunpack.c.l.b16 %v2486
  %v3006 = vunpack.c.l.b16 %v2487
  %v3007 = vunpack.c.l.b16 %v2488
  %v3008 = vunpack.c.l.b16 %v2489
  %v3009 = vunpack.c.l.b16 %v2490
  %v3010 = vunpack.c.l.b16 %v2491
  %v3011 = vunpack.c.l.b16 %v2492
  %v3012 = vunpack.c.l.b16 %v2493
  %v3013 = vunpack.c.l.b16 %v2494
  %v3014 = vunpack.c.l.b16 %v2495
  %v3015 = vunpack.c.l.b16 %v2496
  %v3016 = vunpack.c.l.b16 %v2497
  %v3017 = vunpack.c.l.b16 %v2498
  %v3018 = vunpack.c.l.b16 %v2499
  %v3019 = vunpack.c.l.b16 %v2500
  %v3020 = vunpack.c.l.b16 %v2501
  %v3021 = vunpack.c.l.b16 %v2502
  %v3022 = vunpack.c.l.b16 %v2503
  %v3023 = vunpack.c.l.b16 %v2504
  %v3024 = vunpack.c.l.b16 %v2505
  %v3025 = vunpack.c.l.b16 %v2506
  %v3026 = vunpack.c.l.b16 %v2507
  %v3027 = vunpack.c.l.b16 %v2508
  %v3028 = vunpack.c.l.b16 %v2509
  %v3029 = vunpack.c.l.b16 %v2510
  %v3030 = vunpack.c.l.b16 %v2511
  %v3031 = vunpack.c.l.b16 %v2512
  %v3032 = vunpack.c.l.b16 %v2513
  %v3033 = vunpack.c.l.b16 %v2514
  %v3034 = vunpack.c.l.b16 %v2515
  %v3035 = vunpack.c.l.b16 %v2516
  %v3036 = vunpack.c.l.b16 %v2517
  %v3037 = vunpack.c.l.b16 %v2518
  %v3038 = vunpack.c.l.b16 %v2519
  %v3039 = vunpack.c.l.b16 %v2520
  %v3040 = vunpack.c.l.b16 %v2521
  %v3041 = vunpack.c.l.b16 %v2522
  %v3042 = vunpack.c.l.b16 %v2523
  %v3043 = vunpack.c.l.b16 %v2524
  %v3044 = vunpack.c.l.b16 %v2525
  %v3045 = vunpack.c.l.b16 %v2526
  %v3046 = vunpack.c.l.b16 %v2527
  %v3047 = vunpack.c.l.b16 %v2528
  %v3048 = vunpack.c.l.b16 %v2529
  %v3049 = vunpack.c.l.b16 %v2530
  %v3050 = vunpack.c.l.b16 %v2531
  %v3051 = vunpack.c.l.b16 %v2532
  %v3052 = vunpack.c.l.b16 %v2533
  %v3053 = vunpack.c.l.b16 %v2534
  %v3054 = vunpack.c.l.b16 %v2535
  %v3055 = vunpack.c.l.b16 %v2536
  %v3056 = vunpack.c.l.b16 %v2537
  %v3057 = vunpack.c.l.b16 %v2538
  %v3058 = vunpack.c.l.b16 %v2539
  %v3059 = vunpack.c.l.b16 %v2540
  %v3060 = vunpack.c.l.b16 %v2541
  %v3061 = vunpack.c.l.b16 %v2542
  %v3062 = vunpack.c.l.b16 %v2543
  %v3063 = vunpack.c.l.b16 %v2544
  %v3064 = vunpack.c.l.b16 %v2545
  %v3065 = vunpack.c.l.b16 %v2546
  %v3066 = vunpack.c.l.b16 %v2547
  %v3067 = vunpack.c.l.b16 %v2548
  %v3068 = vunpack.c.l.b16 %v2549
  %v3069 = vunpack.c.l.b16 %v2550
  %v3070 = vunpack.c.l.b16 %v2551
  %v3071 = vunpack.c.l.b16 %v2552
  %v3072 = vunpack.c.l.b16 %v2553
  %v3073 = vunpack.c.l.b16 %v2554
  %v3074 = vunpack.c.l.b16 %v2555
  %v3075 = vunpack.c.l.b16 %v2556
  %v3076 = vunpack.c.l.b16 %v2557
  %v3077 = vunpack.c.l.b16 %v2558
  %v3078 = vunpack.c.l.b16 %v2559
  %v3079 = vunpack.c.l.b16 %v2560
  %v3080 = vunpack.c.l.b16 %v2561
  %v3081 = vunpack.c.l.b16 %v2562
  %v3082 = vunpack.c.l.b16 %v2563
  %v3083 = vunpack.c.l.b16 %v2564
  %v3084 = vunpack.c.l.b16 %v2565
  %v3085 = vunpack.c.l.b16 %v2566
  %v3086 = vunpack.c.l.b16 %v2567
  %v3087 = vunpack.c.l.b16 %v2568
  %v3088 = vunpack.c.l.b16 %v2569
  %v3089 = vunpack.c.l.b16 %v2570
  %v3090 = vunpack.c.l.b16 %v2571
  %v3091 = vunpack.c.l.b16 %v2572
  %v3092 = vunpack.c.l.b16 %v2573
  %v3093 = vunpack.c.l.b16 %v2574
  %v3094 = vunpack.c.l.b16 %v2575
  %v3095 = vunpack.c.l.b16 %v2576
  %v3096 = vunpack.c.l.b16 %v2577
  %v3097 = vunpack.c.l.b16 %v2578
  %v3098 = vunpack.c.l.b16 %v2579
  %v3099 = vunpack.c.l.b16 %v2580
  %v3100 = vunpack.c.l.b16 %v2581
  %v3101 = vunpack.c.l.b16 %v2582
  %v3102 = vunpack.c.l.b16 %v2583
  %v3103 = vunpack.c.l.b16 %v2584
  %v3104 = vunpack.c.l.b16 %v2585
  %v3105 = vunpack.c.l.b16 %v2586
  %v3106 = vunpack.c.l.b16 %v2587
  %v3107 = vunpack.c.l.b16 %v2588
  %v3108 = vunpack.c.l.b16 %v2589
  %v3109 = vunpack.c.l.b16 %v2590
  %v3110 = vunpack.c.l.b16 %v2591
  %v3111 = vunpack.c.l.b16 %v2592
  %v3112 = vunpack.c.l.b16 %v2593
  %v3113 = vunpack.c.l.b16 %v2594
  %v3114 = vunpack.c.l.b16 %v2595
  %v3115 = vunpack.c.l.b16 %v2596
  %v3116 = vunpack.c.l.b16 %v2597
  %v3117 = vunpack.c.l.b16 %v2598
  %v3118 = vunpack.c.l.b16 %v2599
  %v3119 = vunpack.c.l.b16 %v2600
  %v3120 = vunpack.c.l.b16 %v2601
  %v3121 = vunpack.c.l.b16 %v2602
  %v3122 = vunpack.c.l.b16 %v2603
  %v3123 = vunpack.c.l.b16 %v2604
  %v3124 = vunpack.c.l.b16 %v2605
  %v3125 = vunpack.c.l.b16 %v2606
  %v3126 = vunpack.c.l.b16 %v2607
  %v3127 = vunpack.c.l.b16 %v2608
  %v3128 = vunpack.c.l.b16 %v2609
  %v3129 = vunpack.c.l.b16 %v2610
  %v3130 = vunpack.c.l.b16 %v2611
  %v3131 = vunpack.c.l.b16 %v2612
  %v3132 = vunpack.c.l.b16 %v2613
  %v3133 = vunpack.c.l.b16 %v2614
  %v3134 = vunpack.c.l.b16 %v2615
  %v3135 = vunpack.c.l.b16 %v2616
  %v3136 = vunpack.c.l.b16 %v2617
  %v3137 = vunpack.c.l.b16 %v2618
  %v3138 = vunpack.c.l.b16 %v2619
  %v3139 = vunpack.c.l.b16 %v2620
  %v3140 = vunpack.c.l.b16 %v2621
  %v3141 = vunpack.c.l.b16 %v2622
  %v3142 = vunpack.c.l.b16 %v2623
  %v3143 = vunpack.c.l.b16 %v2624
  %v3144 = vunpack.c.l.b16 %v2625
  %v3145 = vunpack.c.l.b16 %v2626
  %v3146 = vunpack.c.l.b16 %v2627
  %v3147 = vunpack.c.l.b16 %v2628
  %v3148 = vunpack.c.l.b16 %v2629
  %v3149 = vunpack.c.l.b16 %v2630
  %v3150 = vunpack.c.l.b16 %v2631
  %v3151 = vunpack.c.l.b16 %v2632
  %v3152 = vunpack.c.l.b16 %v2633
  %v3153 = vunpack.c.l.b16 %v2634
  %v3154 = vunpack.c.l.b16 %v2635
  %v3155 = vunpack.c.l.b16 %v2636
  %v3156 = vunpack.c.l.b16 %v2637
  %v3157 = vunpack.c.l.b16 %v2638
  %v3158 = vunpack.c.l.b16 %v2639
  %v3159 = vunpack.c.l.b16 %v2640
  %v3160 = vunpack.c.l.b16 %v2641
  %v3161 = vunpack.c.l.b16 %v2642
  %v3162 = vunpack.c.l.b16 %v2643
  %v3163 = vunpack.c.l.b16 %v2644
  %v3164 = vunpack.c.l.b16 %v2645
  %v3165 = vunpack.c.l.b16 %v2646
  %v3166 = vunpack.c.l.b16 %v2647
  %v3167 = vunpack.c.l.b16 %v2648
  %v3168 = vunpack.c.l.b16 %v2649
  %v3169 = vunpack.c.l.b16 %v2650
  %v3170 = vunpack.c.l.b16 %v2651
  %v3171 = vunpack.c.l.b16 %v2652
  %v3172 = vunpack.c.l.b16 %v2653
  %v3173 = vunpack.c.l.b16 %v2654
  %v3174 = vunpack.c.l.b16 %v2655
  %v3175 = vunpack.c.l.b16 %v2656
  %v3176 = vunpack.c.l.b16 %v2657
  %v3177 = vunpack.c.l.b16 %v2658
  %v3178 = vunpack.c.l.b16 %v2659
  %v3179 = vunpack.c.l.b16 %v2660
  %v3180 = vunpack.c.l.b16 %v2661
  %v3181 = vunpack.c.l.b16 %v2662
  %v3182 = vunpack.c.l.b16 %v2663
  %v3183 = vunpack.c.l.b16 %v2664
  %v3184 = vunpack.c.l.b16 %v2665
  %v3185 = vunpack.c.l.b16 %v2666
  %v3186 = vunpack.c.l.b16 %v2667
  %v3187 = vunpack.c.l.b16 %v2668
  %v3188 = vunpack.c.l.b16 %v2669
  %v3189 = vunpack.c.l.b16 %v2670
  %v3190 = vunpack.c.l.b16 %v2671
  %v3191 = vunpack.c.l.b16 %v2672
  %v3192 = vunpack.c.l.b16 %v2673
  %v3193 = vunpack.c.l.b16 %v2674
  %v3194 = vunpack.c.l.b16 %v2675
  %v3195 = vunpack.c.l.b16 %v2676
  %v3196 = vunpack.c.l.b16 %v2677
  %v3197 = vunpack.c.l.b16 %v2678
  %v3198 = vunpack.c.l.b16 %v2679
  %v3199 = vunpack.c.l.b16 %v2680
  %v3200 = vunpack.c.l.b16 %v2681
  %v3201 = vpack.c.b16 %v2946, %v2945
  %v3202 = vpack.c.b16 %v2948, %v2947
  %v3203 = vpack.c.b16 %v2950, %v2949
  %v3204 = vpack.c.b16 %v2952, %v2951
  %v3205 = vpack.c.b16 %v2954, %v2953
  %v3206 = vpack.c.b16 %v2956, %v2955
  %v3207 = vpack.c.b16 %v2958, %v2957
  %v3208 = vpack.c.b16 %v2960, %v2959
  %v3209 = vpack.c.b16 %v2962, %v2961
  %v3210 = vpack.c.b16 %v2964, %v2963
  %v3211 = vpack.c.b16 %v2966, %v2965
  %v3212 = vpack.c.b16 %v2968, %v2967
  %v3213 = vpack.c.b16 %v2970, %v2969
  %v3214 = vpack.c.b16 %v2972, %v2971
  %v3215 = vpack.c.b16 %v2974, %v2973
  %v3216 = vpack.c.b16 %v2976, %v2975
  %v3217 = vpack.c.b16 %v2978, %v2977
  %v3218 = vpack.c.b16 %v2980, %v2979
  %v3219 = vpack.c.b16 %v2982, %v2981
  %v3220 = vpack.c.b16 %v2984, %v2983
  %v3221 = vpack.c.b16 %v2986, %v2985
  %v3222 = vpack.c.b16 %v2988, %v2987
  %v3223 = vpack.c.b16 %v2990, %v2989
  %v3224 = vpack.c.b16 %v2992, %v2991
  %v3225 = vpack.c.b16 %v2994, %v2993
  %v3226 = vpack.c.b16 %v2996, %v2995
  %v3227 = vpack.c.b16 %v2998, %v2997
  %v3228 = vpack.c.b16 %v3000, %v2999
  %v3229 = vpack.c.b16 %v3002, %v3001
  %v3230 = vpack.c.b16 %v3004, %v3003
  %v3231 = vpack.c.b16 %v3006, %v3005
  %v3232 = vpack.c.b16 %v3008, %v3007
  %v3233 = vpack.c.b16 %v3010, %v3009
  %v3234 = vpack.c.b16 %v3012, %v3011
  %v3235 = vpack.c.b16 %v3014, %v3013
  %v3236 = vpack.c.b16 %v3016, %v3015
  %v3237 = vpack.c.b16 %v3018, %v3017
  %v3238 = vpack.c.b16 %v3020, %v3019
  %v3239 = vpack.c.b16 %v3022, %v3021
  %v3240 = vpack.c.b16 %v3024, %v3023
  %v3241 = vpack.c.b16 %v3026, %v3025
  %v3242 = vpack.c.b16 %v3028, %v3027
  %v3243 = vpack.c.b16 %v3030, %v3029
  %v3244 = vpack.c.b16 %v3032, %v3031
  %v3245 = vpack.c.b16 %v3034, %v3033
  %v3246 = vpack.c.b16 %v3036, %v3035
  %v3247 = vpack.c.b16 %v3038, %v3037
  %v3248 = vpack.c.b16 %v3040, %v3039
  %v3249 = vpack.c.b16 %v3042, %v3041
  %v3250 = vpack.c.b16 %v3044, %v3043
  %v3251 = vpack.c.b16 %v3046, %v3045
  %v3252 = vpack.c.b16 %v3048, %v3047
  %v3253 = vpack.c.b16 %v3050, %v3049
  %v3254 = vpack.c.b16 %v3052, %v3051
  %v3255 = vpack.c.b16 %v3054, %v3053
  %v3256 = vpack.c.b16 %v3056, %v3055
  %v3257 = vpack.c.b16 %v3058, %v3057
  %v3258 = vpack.c.b16 %v3060, %v3059
  %v3259 = vpack.c.b16 %v3062, %v3061
  %v3260 = vpack.c.b16 %v3064, %v3063
  %v3261 = vpack.c.b16 %v3066, %v3065
  %v3262 = vpack.c.b16 %v3068, %v3067
  %v3263 = vpack.c.b16 %v3070, %v3069
  %v3264 = vpack.c.b16 %v3072, %v3071
  %v3265 = vpack.c.b16 %v3074, %v3073
  %v3266 = vpack.c.b16 %v3076, %v3075
  %v3267 = vpack.c.b16 %v3078, %v3077
  %v3268 = vpack.c.b16 %v3080, %v3079
  %v3269 = vpack.c.b16 %v3082, %v3081
  %v3270 = vpack.c.b16 %v3084, %v3083
  %v3271 = vpack.c.b16 %v3086, %v3085
  %v3272 = vpack.c.b16 %v3088, %v3087
  %v3273 = vpack.c.b16 %v3090, %v3089
  %v3274 = vpack.c.b16 %v3092, %v3091
  %v3275 = vpack.c.b16 %v3094, %v3093
  %v3276 = vpack.c.b16 %v3096, %v3095
  %v3277 = vpack.c.b16 %v3098, %v3097
  %v3278 = vpack.c.b16 %v3100, %v3099
  %v3279 = vpack.c.b16 %v3102, %v3101
  %v3280 = vpack.c.b16 %v3104, %v3103
  %v3281 = vpack.c.b16 %v3106, %v3105
  %v3282 = vpack.c.b16 %v3108, %v3107
  %v3283 = vpack.c.b16 %v3110, %v3109
  %v3284 = vpack.c.b16 %v3112, %v3111
  %v3285 = vpack.c.b16 %v3114, %v3113
  %v3286 = vpack.c.b16 %v3116, %v3115
  %v3287 = vpack.c.b16 %v3118, %v3117
  %v3288 = vpack.c.b16 %v3120, %v3119
  %v3289 = vpack.c.b16 %v3122, %v3121
  %v3290 = vpack.c.b16 %v3124, %v3123
  %v3291 = vpack.c.b16 %v3126, %v3125
  %v3292 = vpack.c.b16 %v3128, %v3127
  %v3293 = vpack.c.b16 %v3130, %v3129
  %v3294 = vpack.c.b16 %v3132, %v3131
  %v3295 = vpack.c.b16 %v3134, %v3133
  %v3296 = vpack.c.b16 %v3136, %v3135
  %v3297 = vpack.c.b16 %v3138, %v3137
  %v3298 = vpack.c.b16 %v3140, %v3139
  %v3299 = vpack.c.b16 %v3142, %v3141
  %v3300 = vpack.c.b16 %v3144, %v3143
  %v3301 = vpack.c.b16 %v3146, %v3145
  %v3302 = vpack.c.b16 %v3148, %v3147
  %v3303 = vpack.c.b16 %v3150, %v3149
  %v3304 = vpack.c.b16 %v3152, %v3151
  %v3305 = vpack.c.b16 %v3154, %v3153
  %v3306 = vpack.c.b16 %v3156, %v3155
  %v3307 = vpack.c.b16 %v3158, %v3157
  %v3308 = vpack.c.b16 %v3160, %v3159
  %v3309 = vpack.c.b16 %v3162, %v3161
  %v3310 = vpack.c.b16 %v3164, %v3163
  %v3311 = vpack.c.b16 %v3166, %v3165
  %v3312 = vpack.c.b16 %v3168, %v3167
  %v3313 = vpack.c.b16 %v3170, %v3169
  %v3314 = vpack.c.b16 %v3172, %v3171
  %v3315 = vpack.c.b16 %v3174, %v3173
  %v3316 = vpack.c.b16 %v3176, %v3175
  %v3317 = vpack.c.b16 %v3178, %v3177
  %v3318 = vpack.c.b16 %v3180, %v3179
  %v3319 = vpack.c.b16 %v3182, %v3181
  %v3320 = vpack.c.b16 %v3184, %v3183
  %v3321 = vpack.c.b16 %v3186, %v3185
  %v3322 = vpack.c.b16 %v3188, %v3187
  %v3323 = vpack.c.b16 %v3190, %v3189
  %v3324 = vpack.c.b16 %v3192, %v3191
  %v3325 = vpack.c.b16 %v3194, %v3193
  %v3326 = vpack.c.b16 %v3196, %v3195
  %v3327 = vpack.c.b16 %v3198, %v3197
  %v3328 = vpack.c.b16 %v3200, %v3199
  %3457 = vmatprep.subr.bf16.mxu0 0
  %3458 = vmatpush1.bf16.msra.mxu0 %v3201
  %3459 = vmatprep.subr.bf16.mxu0 0
  %3460 = vmatpush1.bf16.msra.mxu0 %v3202
  %3461 = vmatprep.subr.bf16.mxu0 0
  %3462 = vmatpush1.bf16.msra.mxu0 %v3203
  %3463 = vmatprep.subr.bf16.mxu0 0
  %3464 = vmatpush1.bf16.msra.mxu0 %v3204
  %3465 = vmatprep.subr.bf16.mxu0 0
  %3466 = vmatpush1.bf16.msra.mxu0 %v3205
  %3467 = vmatprep.subr.bf16.mxu0 0
  %3468 = vmatpush1.bf16.msra.mxu0 %v3206
  %3469 = vmatprep.subr.bf16.mxu0 0
  %3470 = vmatpush1.bf16.msra.mxu0 %v3207
  %3471 = vmatprep.subr.bf16.mxu0 0
  %3472 = vmatpush1.bf16.msra.mxu0 %v3208
  %3473 = vmatprep.subr.bf16.mxu0 0
  %3474 = vmatpush1.bf16.msra.mxu0 %v3209
  %3475 = vmatprep.subr.bf16.mxu0 0
  %3476 = vmatpush1.bf16.msra.mxu0 %v3210
  %3477 = vmatprep.subr.bf16.mxu0 0
  %3478 = vmatpush1.bf16.msra.mxu0 %v3211
  %3479 = vmatprep.subr.bf16.mxu0 0
  %3480 = vmatpush1.bf16.msra.mxu0 %v3212
  %3481 = vmatprep.subr.bf16.mxu0 0
  %3482 = vmatpush1.bf16.msra.mxu0 %v3213
  %3483 = vmatprep.subr.bf16.mxu0 0
  %3484 = vmatpush1.bf16.msra.mxu0 %v3214
  %3485 = vmatprep.subr.bf16.mxu0 0
  %3486 = vmatpush1.bf16.msra.mxu0 %v3215
  %3487 = vmatprep.subr.bf16.mxu0 0
  %3488 = vmatpush1.bf16.msra.mxu0 %v3216
  %3489 = vmatprep.mubr.bf16.mxu0 %v2411
  %3490 = vmatmul.mubr.bf16.gmra.mrb[0].mxu0 %v2410
  %v3491 = vpop.f32.mrb[0].mxu0
  %v3492 = vadd.f32 %v2687, %v3491
  %v3493 = vpop.f32.mrb[0].mxu0
  %v3494 = vpop.f32.mrb[0].mxu0
  %v3495 = vpop.f32.mrb[0].mxu0
  %3496 = vdwg.mxu0
  %3497 = vmatprep.subr.bf16.mxu0 0
  %3498 = vmatpush1.bf16.msra.mxu0 %v3217
  %3499 = vmatprep.subr.bf16.mxu0 0
  %3500 = vmatpush1.bf16.msra.mxu0 %v3218
  %3501 = vmatprep.subr.bf16.mxu0 0
  %3502 = vmatpush1.bf16.msra.mxu0 %v3219
  %3503 = vmatprep.subr.bf16.mxu0 0
  %3504 = vmatpush1.bf16.msra.mxu0 %v3220
  %3505 = vmatprep.subr.bf16.mxu0 0
  %3506 = vmatpush1.bf16.msra.mxu0 %v3221
  %3507 = vmatprep.subr.bf16.mxu0 0
  %3508 = vmatpush1.bf16.msra.mxu0 %v3222
  %3509 = vmatprep.subr.bf16.mxu0 0
  %3510 = vmatpush1.bf16.msra.mxu0 %v3223
  %3511 = vmatprep.subr.bf16.mxu0 0
  %3512 = vmatpush1.bf16.msra.mxu0 %v3224
  %3513 = vmatprep.subr.bf16.mxu0 0
  %3514 = vmatpush1.bf16.msra.mxu0 %v3225
  %3515 = vmatprep.subr.bf16.mxu0 0
  %3516 = vmatpush1.bf16.msra.mxu0 %v3226
  %3517 = vmatprep.subr.bf16.mxu0 0
  %3518 = vmatpush1.bf16.msra.mxu0 %v3227
  %3519 = vmatprep.subr.bf16.mxu0 0
  %3520 = vmatpush1.bf16.msra.mxu0 %v3228
  %3521 = vmatprep.subr.bf16.mxu0 0
  %3522 = vmatpush1.bf16.msra.mxu0 %v3229
  %3523 = vmatprep.subr.bf16.mxu0 0
  %3524 = vmatpush1.bf16.msra.mxu0 %v3230
  %3525 = vmatprep.subr.bf16.mxu0 0
  %3526 = vmatpush1.bf16.msra.mxu0 %v3231
  %3527 = vmatprep.subr.bf16.mxu0 0
  %3528 = vmatpush1.bf16.msra.mxu0 %v3232
  %3529 = vmatprep.mubr.bf16.mxu0 %v2413
  %3530 = vmatmul.mubr.bf16.gmra.mrb[0].mxu0 %v2412
  %v3531 = vpop.f32.mrb[0].mxu0
  %v3532 = vadd.f32 %v3492, %v3531
  %v3533 = vpop.f32.mrb[0].mxu0
  %v3534 = vpop.f32.mrb[0].mxu0
  %v3535 = vpop.f32.mrb[0].mxu0
  %3536 = vdwg.mxu0
  %3537 = vmatprep.subr.bf16.mxu0 0
  %3538 = vmatpush1.bf16.msra.mxu0 %v3233
  %3539 = vmatprep.subr.bf16.mxu0 0
  %3540 = vmatpush1.bf16.msra.mxu0 %v3234
  %3541 = vmatprep.subr.bf16.mxu0 0
  %3542 = vmatpush1.bf16.msra.mxu0 %v3235
  %3543 = vmatprep.subr.bf16.mxu0 0
  %3544 = vmatpush1.bf16.msra.mxu0 %v3236
  %3545 = vmatprep.subr.bf16.mxu0 0
  %3546 = vmatpush1.bf16.msra.mxu0 %v3237
  %3547 = vmatprep.subr.bf16.mxu0 0
  %3548 = vmatpush1.bf16.msra.mxu0 %v3238
  %3549 = vmatprep.subr.bf16.mxu0 0
  %3550 = vmatpush1.bf16.msra.mxu0 %v3239
  %3551 = vmatprep.subr.bf16.mxu0 0
  %3552 = vmatpush1.bf16.msra.mxu0 %v3240
  %3553 = vmatprep.subr.bf16.mxu0 0
  %3554 = vmatpush1.bf16.msra.mxu0 %v3241
  %3555 = vmatprep.subr.bf16.mxu0 0
  %3556 = vmatpush1.bf16.msra.mxu0 %v3242
  %3557 = vmatprep.subr.bf16.mxu0 0
  %3558 = vmatpush1.bf16.msra.mxu0 %v3243
  %3559 = vmatprep.subr.bf16.mxu0 0
  %3560 = vmatpush1.bf16.msra.mxu0 %v3244
  %3561 = vmatprep.subr.bf16.mxu0 0
  %3562 = vmatpush1.bf16.msra.mxu0 %v3245
  %3563 = vmatprep.subr.bf16.mxu0 0
  %3564 = vmatpush1.bf16.msra.mxu0 %v3246
  %3565 = vmatprep.subr.bf16.mxu0 0
  %3566 = vmatpush1.bf16.msra.mxu0 %v3247
  %3567 = vmatprep.subr.bf16.mxu0 0
  %3568 = vmatpush1.bf16.msra.mxu0 %v3248
  %3569 = vmatprep.mubr.bf16.mxu0 %v2415
  %3570 = vmatmul.mubr.bf16.gmra.mrb[0].mxu0 %v2414
  %v3571 = vpop.f32.mrb[0].mxu0
  %v3572 = vadd.f32 %v3532, %v3571
  %v3573 = vpop.f32.mrb[0].mxu0
  %v3574 = vpop.f32.mrb[0].mxu0
  %v3575 = vpop.f32.mrb[0].mxu0
  %3576 = vdwg.mxu0
  %3577 = vmatprep.subr.bf16.mxu0 0
  %3578 = vmatpush1.bf16.msra.mxu0 %v3249
  %3579 = vmatprep.subr.bf16.mxu0 0
  %3580 = vmatpush1.bf16.msra.mxu0 %v3250
  %3581 = vmatprep.subr.bf16.mxu0 0
  %3582 = vmatpush1.bf16.msra.mxu0 %v3251
  %3583 = vmatprep.subr.bf16.mxu0 0
  %3584 = vmatpush1.bf16.msra.mxu0 %v3252
  %3585 = vmatprep.subr.bf16.mxu0 0
  %3586 = vmatpush1.bf16.msra.mxu0 %v3253
  %3587 = vmatprep.subr.bf16.mxu0 0
  %3588 = vmatpush1.bf16.msra.mxu0 %v3254
  %3589 = vmatprep.subr.bf16.mxu0 0
  %3590 = vmatpush1.bf16.msra.mxu0 %v3255
  %3591 = vmatprep.subr.bf16.mxu0 0
  %3592 = vmatpush1.bf16.msra.mxu0 %v3256
  %3593 = vmatprep.subr.bf16.mxu0 0
  %3594 = vmatpush1.bf16.msra.mxu0 %v3257
  %3595 = vmatprep.subr.bf16.mxu0 0
  %3596 = vmatpush1.bf16.msra.mxu0 %v3258
  %3597 = vmatprep.subr.bf16.mxu0 0
  %3598 = vmatpush1.bf16.msra.mxu0 %v3259
  %3599 = vmatprep.subr.bf16.mxu0 0
  %3600 = vmatpush1.bf16.msra.mxu0 %v3260
  %3601 = vmatprep.subr.bf16.mxu0 0
  %3602 = vmatpush1.bf16.msra.mxu0 %v3261
  %3603 = vmatprep.subr.bf16.mxu0 0
  %3604 = vmatpush1.bf16.msra.mxu0 %v3262
  %3605 = vmatprep.subr.bf16.mxu0 0
  %3606 = vmatpush1.bf16.msra.mxu0 %v3263
  %3607 = vmatprep.subr.bf16.mxu0 0
  %3608 = vmatpush1.bf16.msra.mxu0 %v3264
  %3609 = vmatprep.mubr.bf16.mxu0 %v2417
  %3610 = vmatmul.mubr.bf16.gmra.mrb[0].mxu0 %v2416
  %v3611 = vpop.f32.mrb[0].mxu0
  %v3612 = vadd.f32 %v3572, %v3611
  %v3613 = vpop.f32.mrb[0].mxu0
  %v3614 = vpop.f32.mrb[0].mxu0
  %v3615 = vpop.f32.mrb[0].mxu0
  %3616 = vdwg.mxu0
  %3617 = vmatprep.subr.bf16.mxu0 0
  %3618 = vmatpush1.bf16.msra.mxu0 %v3265
  %3619 = vmatprep.subr.bf16.mxu0 0
  %3620 = vmatpush1.bf16.msra.mxu0 %v3266
  %3621 = vmatprep.subr.bf16.mxu0 0
  %3622 = vmatpush1.bf16.msra.mxu0 %v3267
  %3623 = vmatprep.subr.bf16.mxu0 0
  %3624 = vmatpush1.bf16.msra.mxu0 %v3268
  %3625 = vmatprep.subr.bf16.mxu0 0
  %3626 = vmatpush1.bf16.msra.mxu0 %v3269
  %3627 = vmatprep.subr.bf16.mxu0 0
  %3628 = vmatpush1.bf16.msra.mxu0 %v3270
  %3629 = vmatprep.subr.bf16.mxu0 0
  %3630 = vmatpush1.bf16.msra.mxu0 %v3271
  %3631 = vmatprep.subr.bf16.mxu0 0
  %3632 = vmatpush1.bf16.msra.mxu0 %v3272
  %3633 = vmatprep.subr.bf16.mxu0 0
  %3634 = vmatpush1.bf16.msra.mxu0 %v3273
  %3635 = vmatprep.subr.bf16.mxu0 0
  %3636 = vmatpush1.bf16.msra.mxu0 %v3274
  %3637 = vmatprep.subr.bf16.mxu0 0
  %3638 = vmatpush1.bf16.msra.mxu0 %v3275
  %3639 = vmatprep.subr.bf16.mxu0 0
  %3640 = vmatpush1.bf16.msra.mxu0 %v3276
  %3641 = vmatprep.subr.bf16.mxu0 0
  %3642 = vmatpush1.bf16.msra.mxu0 %v3277
  %3643 = vmatprep.subr.bf16.mxu0 0
  %3644 = vmatpush1.bf16.msra.mxu0 %v3278
  %3645 = vmatprep.subr.bf16.mxu0 0
  %3646 = vmatpush1.bf16.msra.mxu0 %v3279
  %3647 = vmatprep.subr.bf16.mxu0 0
  %3648 = vmatpush1.bf16.msra.mxu0 %v3280
  %3649 = vmatprep.mubr.bf16.mxu0 %v2419
  %3650 = vmatmul.mubr.bf16.gmra.mrb[0].mxu0 %v2418
  %v3651 = vpop.f32.mrb[0].mxu0
  %v3652 = vadd.f32 %v3612, %v3651
  %v3653 = vpop.f32.mrb[0].mxu0
  %v3654 = vpop.f32.mrb[0].mxu0
  %v3655 = vpop.f32.mrb[0].mxu0
  %3656 = vdwg.mxu0
  %3657 = vmatprep.subr.bf16.mxu0 0
  %3658 = vmatpush1.bf16.msra.mxu0 %v3281
  %3659 = vmatprep.subr.bf16.mxu0 0
  %3660 = vmatpush1.bf16.msra.mxu0 %v3282
  %3661 = vmatprep.subr.bf16.mxu0 0
  %3662 = vmatpush1.bf16.msra.mxu0 %v3283
  %3663 = vmatprep.subr.bf16.mxu0 0
  %3664 = vmatpush1.bf16.msra.mxu0 %v3284
  %3665 = vmatprep.subr.bf16.mxu0 0
  %3666 = vmatpush1.bf16.msra.mxu0 %v3285
  %3667 = vmatprep.subr.bf16.mxu0 0
  %3668 = vmatpush1.bf16.msra.mxu0 %v3286
  %3669 = vmatprep.subr.bf16.mxu0 0
  %3670 = vmatpush1.bf16.msra.mxu0 %v3287
  %3671 = vmatprep.subr.bf16.mxu0 0
  %3672 = vmatpush1.bf16.msra.mxu0 %v3288
  %3673 = vmatprep.subr.bf16.mxu0 0
  %3674 = vmatpush1.bf16.msra.mxu0 %v3289
  %3675 = vmatprep.subr.bf16.mxu0 0
  %3676 = vmatpush1.bf16.msra.mxu0 %v3290
  %3677 = vmatprep.subr.bf16.mxu0 0
  %3678 = vmatpush1.bf16.msra.mxu0 %v3291
  %3679 = vmatprep.subr.bf16.mxu0 0
  %3680 = vmatpush1.bf16.msra.mxu0 %v3292
  %3681 = vmatprep.subr.bf16.mxu0 0
  %3682 = vmatpush1.bf16.msra.mxu0 %v3293
  %3683 = vmatprep.subr.bf16.mxu0 0
  %3684 = vmatpush1.bf16.msra.mxu0 %v3294
  %3685 = vmatprep.subr.bf16.mxu0 0
  %3686 = vmatpush1.bf16.msra.mxu0 %v3295
  %3687 = vmatprep.subr.bf16.mxu0 0
  %3688 = vmatpush1.bf16.msra.mxu0 %v3296
  %3689 = vmatprep.mubr.bf16.mxu0 %v2421
  %3690 = vmatmul.mubr.bf16.gmra.mrb[0].mxu0 %v2420
  %v3691 = vpop.f32.mrb[0].mxu0
  %v3692 = vadd.f32 %v3652, %v3691
  %v3693 = vpop.f32.mrb[0].mxu0
  %v3694 = vpop.f32.mrb[0].mxu0
  %v3695 = vpop.f32.mrb[0].mxu0
  %3696 = vdwg.mxu0
  %3697 = vmatprep.subr.bf16.mxu0 0
  %3698 = vmatpush1.bf16.msra.mxu0 %v3297
  %3699 = vmatprep.subr.bf16.mxu0 0
  %3700 = vmatpush1.bf16.msra.mxu0 %v3298
  %3701 = vmatprep.subr.bf16.mxu0 0
  %3702 = vmatpush1.bf16.msra.mxu0 %v3299
  %3703 = vmatprep.subr.bf16.mxu0 0
  %3704 = vmatpush1.bf16.msra.mxu0 %v3300
  %3705 = vmatprep.subr.bf16.mxu0 0
  %3706 = vmatpush1.bf16.msra.mxu0 %v3301
  %3707 = vmatprep.subr.bf16.mxu0 0
  %3708 = vmatpush1.bf16.msra.mxu0 %v3302
  %3709 = vmatprep.subr.bf16.mxu0 0
  %3710 = vmatpush1.bf16.msra.mxu0 %v3303
  %3711 = vmatprep.subr.bf16.mxu0 0
  %3712 = vmatpush1.bf16.msra.mxu0 %v3304
  %3713 = vmatprep.subr.bf16.mxu0 0
  %3714 = vmatpush1.bf16.msra.mxu0 %v3305
  %3715 = vmatprep.subr.bf16.mxu0 0
  %3716 = vmatpush1.bf16.msra.mxu0 %v3306
  %3717 = vmatprep.subr.bf16.mxu0 0
  %3718 = vmatpush1.bf16.msra.mxu0 %v3307
  %3719 = vmatprep.subr.bf16.mxu0 0
  %3720 = vmatpush1.bf16.msra.mxu0 %v3308
  %3721 = vmatprep.subr.bf16.mxu0 0
  %3722 = vmatpush1.bf16.msra.mxu0 %v3309
  %3723 = vmatprep.subr.bf16.mxu0 0
  %3724 = vmatpush1.bf16.msra.mxu0 %v3310
  %3725 = vmatprep.subr.bf16.mxu0 0
  %3726 = vmatpush1.bf16.msra.mxu0 %v3311
  %3727 = vmatprep.subr.bf16.mxu0 0
  %3728 = vmatpush1.bf16.msra.mxu0 %v3312
  %3729 = vmatprep.mubr.bf16.mxu0 %v2423
  %3730 = vmatmul.mubr.bf16.gmra.mrb[0].mxu0 %v2422
  %v3731 = vpop.f32.mrb[0].mxu0
  %v3732 = vadd.f32 %v3692, %v3731
  %v3733 = vpop.f32.mrb[0].mxu0
  %v3734 = vpop.f32.mrb[0].mxu0
  %v3735 = vpop.f32.mrb[0].mxu0
  %3736 = vdwg.mxu0
  %3737 = vmatprep.subr.bf16.mxu0 0
  %3738 = vmatpush1.bf16.msra.mxu0 %v3313
  %3739 = vmatprep.subr.bf16.mxu0 0
  %3740 = vmatpush1.bf16.msra.mxu0 %v3314
  %3741 = vmatprep.subr.bf16.mxu0 0
  %3742 = vmatpush1.bf16.msra.mxu0 %v3315
  %3743 = vmatprep.subr.bf16.mxu0 0
  %3744 = vmatpush1.bf16.msra.mxu0 %v3316
  %3745 = vmatprep.subr.bf16.mxu0 0
  %3746 = vmatpush1.bf16.msra.mxu0 %v3317
  %3747 = vmatprep.subr.bf16.mxu0 0
  %3748 = vmatpush1.bf16.msra.mxu0 %v3318
  %3749 = vmatprep.subr.bf16.mxu0 0
  %3750 = vmatpush1.bf16.msra.mxu0 %v3319
  %3751 = vmatprep.subr.bf16.mxu0 0
  %3752 = vmatpush1.bf16.msra.mxu0 %v3320
  %3753 = vmatprep.subr.bf16.mxu0 0
  %3754 = vmatpush1.bf16.msra.mxu0 %v3321
  %3755 = vmatprep.subr.bf16.mxu0 0
  %3756 = vmatpush1.bf16.msra.mxu0 %v3322
  %3757 = vmatprep.subr.bf16.mxu0 0
  %3758 = vmatpush1.bf16.msra.mxu0 %v3323
  %3759 = vmatprep.subr.bf16.mxu0 0
  %3760 = vmatpush1.bf16.msra.mxu0 %v3324
  %3761 = vmatprep.subr.bf16.mxu0 0
  %3762 = vmatpush1.bf16.msra.mxu0 %v3325
  %3763 = vmatprep.subr.bf16.mxu0 0
  %3764 = vmatpush1.bf16.msra.mxu0 %v3326
  %3765 = vmatprep.subr.bf16.mxu0 0
  %3766 = vmatpush1.bf16.msra.mxu0 %v3327
  %3767 = vmatprep.subr.bf16.mxu0 0
  %3768 = vmatpush1.bf16.msra.mxu0 %v3328
  %3769 = vmatprep.mubr.bf16.mxu0 %v2425
  %3770 = vmatmul.mubr.bf16.gmra.mrb[0].mxu0 %v2424
  %v3771 = vpop.f32.mrb[0].mxu0
  %v3772 = vadd.f32 %v3732, %v3771
  %v3773 = vpop.f32.mrb[0].mxu0
  %v3774 = vpop.f32.mrb[0].mxu0
  %v3775 = vpop.f32.mrb[0].mxu0
  %3776 = vdwg.mxu0
  %3777 = vst [vmem:[%s10] sm:$0xff] %v3772
  // Predicated region
  $region42: #{cnn_forward.3} parent=0 // pred_check
    _
  $region43: #{cnn_forward.3} parent=0 // pred_check_branch
    %3779 = sbr.rel (0) target = $region45
  $region44: #{cnn_forward.3} parent=0 // pred_region
    _
  $region45: #{cnn_forward.3} parent=0 // pred_fallthru
    _
  // Predicated region
  $region46: #{cnn_forward.3} parent=0 // pred_check
    _
  $region47: #{cnn_forward.3} parent=0 // pred_check_branch
    %3781 = sbr.rel (0) target = $region49
  $region48: #{cnn_forward.3} parent=0 // pred_region
    _
  $region49: #{cnn_forward.3} parent=0 // pred_fallthru
    _

</llo_original>
